<compile_context>
chip_gen: v5e
topology: v5e:2x2
jax: 0.10.0
libtpu: 0.0.40
codegen_flags: <defaults>
</compile_context>

<pallas_src>
import jax
import jax.numpy as jnp
from jax.experimental import pallas as pl
from jax.experimental.pallas import tpu as pltpu

D = 512
STYLE = 18
NEG_SLOPE = 0.2
TM_MAX = 512            # larger tiles give ~no additional roofline benefit
SINGLE_BLOCK_ROWS = 128  # above this, force >= 2 grid blocks (v7x megacore)


def _leaky_relu_f32(x):
    return jnp.where(x > 0, x, NEG_SLOPE * x)


def _c2s_kernel(x_ref, w1_ref, b1_ref, w2_ref, b2_ref, w3_ref, b3_ref, o_ref):
    # x_ref: (TM, 512) f32 row tile.
    # w*_ref: (512, 512) bf16 in (in, out) layout -> plain jnp.dot, no transpose.
    # b*_ref: (1, 512) f32, broadcast add (cheap VPU filler under MXU slack).
    x = x_ref[...]

    h = jnp.dot(x.astype(jnp.bfloat16), w1_ref[...],
                preferred_element_type=jnp.float32) + b1_ref[...]
    h = _leaky_relu_f32(h)

    h = jnp.dot(h.astype(jnp.bfloat16), w2_ref[...],
                preferred_element_type=jnp.float32) + b2_ref[...]
    h = _leaky_relu_f32(h)

    h = jnp.dot(h.astype(jnp.bfloat16), w3_ref[...],
                preferred_element_type=jnp.float32) + b3_ref[...]

    o_ref[...] = h.astype(o_ref.dtype)


def prepare_params(params):
    """One-time transform of PyTorch-convention params for the kernel:
    W (out,in) f32 -> (in,out) bf16; b (out,) -> (1,out) f32.
    Do this once and cache the result (do NOT redo it per forward call)."""
    return {
        "W1": params["W1"].T.astype(jnp.bfloat16),
        "W2": params["W2"].T.astype(jnp.bfloat16),
        "W3": params["W3"].T.astype(jnp.bfloat16),
        "b1": params["b1"].reshape(1, D).astype(jnp.float32),
        "b2": params["b2"].reshape(1, D).astype(jnp.float32),
        "b3": params["b3"].reshape(1, D).astype(jnp.float32),
    }


def _round_up(x, m):
    return ((x + m - 1) // m) * m


def _choose_tile(rows):
    """Return (tm, rows_pad).

    Goals (in priority order):
      1. zero (or minimal) row padding -> no wasted MXU work, no extra
         pad/slice HBM passes,
      2. largest tile up to TM_MAX -> amortize per-grid-step overhead,
      3. >= 2 grid blocks whenever rows > SINGLE_BLOCK_ROWS so v7x can shard
         the parallel axis across both TensorCores,
      4. small-batch fallback rounded to a multiple of 16 (bf16 sublane pack).
    """
    if rows <= SINGLE_BLOCK_ROWS:
        tm = max(16, _round_up(rows, 16))
        return tm, tm

    # Cap guarantees at least 2 blocks; candidates are sublane multiples.
    cap = max(8, min(TM_MAX, _round_up(pl.cdiv(rows, 2), 8)))
    best_key, best_tm = None, 8
    for tm in range(8, cap + 1, 8):
        pad = _round_up(rows, tm) - rows
        key = (pad, -tm)                 # minimal padding, then largest tile
        if best_key is None or key < best_key:
            best_key, best_tm = key, tm
    tm = best_tm
    return tm, _round_up(rows, tm)


def deep_c2s_forward(c, prepared):
    """c: (batch, 18, 512) float32. prepared: output of prepare_params()."""
    batch, style, d = c.shape
    assert style == STYLE and d == D
    rows = batch * STYLE
    x = c.reshape(rows, D)

    tm, rows_pad = _choose_tile(rows)
    if rows_pad != rows:
        x = jnp.pad(x, ((0, rows_pad - rows), (0, 0)))

    row_spec = pl.BlockSpec((tm, D), lambda i: (i, 0))
    # Constant index_map -> loaded once, VMEM-resident across all grid steps.
    w_spec = pl.BlockSpec((D, D), lambda i: (0, 0))
    b_spec = pl.BlockSpec((1, D), lambda i: (0, 0))

    cost = pl.CostEstimate(
        flops=6 * rows_pad * D * D,                              # 3 matmuls
        transcendentals=0,
        bytes_accessed=rows_pad * D * 4 * 2                      # f32 in + out
        + 3 * D * D * 2                                          # bf16 weights
        + 3 * D * 4,                                             # f32 biases
    )

    out = pl.pallas_call(
        _c2s_kernel,
        out_shape=jax.ShapeDtypeStruct((rows_pad, D), c.dtype),
        grid=(rows_pad // tm,),
        in_specs=[row_spec, w_spec, b_spec, w_spec, b_spec, w_spec, b_spec],
        out_specs=row_spec,
        compiler_params=pltpu.CompilerParams(
            dimension_semantics=("parallel",),
            vmem_limit_bytes=16 << 20,
        ),
        cost_estimate=cost,
    )(x, prepared["W1"], prepared["b1"],
      prepared["W2"], prepared["b2"],
      prepared["W3"], prepared["b3"])

    if rows_pad != rows:
        out = out[:rows]
    return out.reshape(batch, STYLE, D)


def init_params(key):
    """Deterministic init matching nn.Linear shapes: W (out,in)=(512,512), b (512,)."""
    ks = jax.random.split(key, 6)
    bound = 1.0 / jnp.sqrt(D)  # PyTorch default uniform bound
    return {
        "W1": jax.random.uniform(ks[0], (D, D), jnp.float32, -bound, bound),
        "b1": jax.random.uniform(ks[1], (D,), jnp.float32, -bound, bound),
        "W2": jax.random.uniform(ks[2], (D, D), jnp.float32, -bound, bound),
        "b2": jax.random.uniform(ks[3], (D,), jnp.float32, -bound, bound),
        "W3": jax.random.uniform(ks[4], (D, D), jnp.float32, -bound, bound),
        "b3": jax.random.uniform(ks[5], (D,), jnp.float32, -bound, bound),
    }


def _reference_f32(c, p):
    """Pure-JAX f32 reference (exact PyTorch math)."""
    lrelu = lambda x: jnp.where(x > 0, x, NEG_SLOPE * x)
    h = lrelu(c @ p["W1"].T + p["b1"])
    h = lrelu(h @ p["W2"].T + p["b2"])
    return h @ p["W3"].T + p["b3"]


def _reference_bf16(c, p):
    """Pure-JAX reference with the same bf16-operand / f32-accum matmuls."""
    lrelu = lambda x: jnp.where(x > 0, x, NEG_SLOPE * x)

    def lin(x, w, b):
        y = jnp.dot(x.astype(jnp.bfloat16), w.T.astype(jnp.bfloat16),
                    preferred_element_type=jnp.float32)
        return y + b.astype(jnp.float32)

    h = lrelu(lin(c, p["W1"], p["b1"]))
    h = lrelu(lin(h, p["W2"], p["b2"]))
    return lin(h, p["W3"], p["b3"])


if __name__ == "__main__":
    key = jax.random.PRNGKey(0)
    k_in, k_in2, k_par = jax.random.split(key, 3)

    params = init_params(k_par)
    prepared = prepare_params(params)  # cached (in,out) bf16 weights, f32 biases

    # Small case: batch=2 -> rows=36 -> single 48-row block (16-aligned).
    batch = 2
    c = jax.random.normal(k_in, (batch, STYLE, D), dtype=jnp.float32)
    out = jax.block_until_ready(deep_c2s_forward(c, prepared))
    assert out.shape == (batch, STYLE, D)
    assert jnp.allclose(out, _reference_bf16(c, params), atol=1e-2, rtol=1e-2)
    assert jnp.allclose(out, _reference_f32(c, params), atol=8e-2, rtol=8e-2)

    # Multi-block case: batch=8 -> rows=144 -> TM=72, 2 exact blocks, zero pad.
    batch2 = 8
    c2 = jax.random.normal(k_in2, (batch2, STYLE, D), dtype=jnp.float32)
    out2 = jax.block_until_ready(deep_c2s_forward(c2, prepared))
    assert out2.shape == (batch2, STYLE, D)
    assert jnp.allclose(out2, _reference_bf16(c2, params), atol=1e-2, rtol=1e-2)
    assert jnp.allclose(out2, _reference_f32(c2, params), atol=8e-2, rtol=8e-2)

    print("KERNEL_OK")
</pallas_src>

<mosaic_0001>
module attributes {stable_mosaic.version = 11 : i64} {
  func.func @_c2s_kernel(%arg0: i32, %arg1: memref<48x512xf32, #tpu.memory_space<vmem>>, %arg2: memref<512x512xbf16, #tpu.memory_space<vmem>>, %arg3: memref<1x512xf32, #tpu.memory_space<vmem>>, %arg4: memref<512x512xbf16, #tpu.memory_space<vmem>>, %arg5: memref<1x512xf32, #tpu.memory_space<vmem>>, %arg6: memref<512x512xbf16, #tpu.memory_space<vmem>>, %arg7: memref<1x512xf32, #tpu.memory_space<vmem>>, %arg8: memref<48x512xf32, #tpu.memory_space<vmem>>) attributes {dimension_semantics = [#tpu.dimension_semantics<parallel>], iteration_bounds = array<i64: 1>, scalar_prefetch = 0 : i64, scratch_operands = 0 : i64, tpu.core_type = #tpu.core_type<tc>, window_params = [{transform_indices = @transform_0, window_bounds = array<i64: 48, 512>}, {pipeline_mode = #tpu.pipeline_mode<synchronous>, transform_indices = @transform_1, window_bounds = array<i64: 512, 512>}, {pipeline_mode = #tpu.pipeline_mode<synchronous>, transform_indices = @transform_2, window_bounds = array<i64: 1, 512>}, {pipeline_mode = #tpu.pipeline_mode<synchronous>, transform_indices = @transform_3, window_bounds = array<i64: 512, 512>}, {pipeline_mode = #tpu.pipeline_mode<synchronous>, transform_indices = @transform_4, window_bounds = array<i64: 1, 512>}, {pipeline_mode = #tpu.pipeline_mode<synchronous>, transform_indices = @transform_5, window_bounds = array<i64: 512, 512>}, {pipeline_mode = #tpu.pipeline_mode<synchronous>, transform_indices = @transform_6, window_bounds = array<i64: 1, 512>}, {transform_indices = @transform_7, window_bounds = array<i64: 48, 512>}]} {
    %c0 = arith.constant 0 : index
    %c0_0 = arith.constant 0 : index
    %0 = vector.load %arg1[%c0, %c0_0] : memref<48x512xf32, #tpu.memory_space<vmem>>, vector<48x512xf32>
    %1 = arith.truncf %0 : vector<48x512xf32> to vector<48x512xbf16>
    %c0_1 = arith.constant 0 : index
    %c0_2 = arith.constant 0 : index
    %2 = vector.load %arg2[%c0_1, %c0_2] : memref<512x512xbf16, #tpu.memory_space<vmem>>, vector<512x512xbf16>
    %cst = arith.constant dense<0.000000e+00> : vector<48x512xf32>
    %3 = tpu.matmul %1, %2, %cst {dimension_numbers = #tpu.dot_dimension_numbers<[1], [0], [0], [1], [0, 0, 1, 1], [], []>} : vector<48x512xbf16>, vector<512x512xbf16>, vector<48x512xf32> -> vector<48x512xf32>
    %c0_3 = arith.constant 0 : index
    %c0_4 = arith.constant 0 : index
    %4 = vector.load %arg3[%c0_3, %c0_4] : memref<1x512xf32, #tpu.memory_space<vmem>>, vector<1x512xf32>
    %5 = vector.broadcast %4 : vector<1x512xf32> to vector<48x512xf32>
    %6 = arith.addf %3, %5 : vector<48x512xf32>
    %cst_5 = arith.constant 0.000000e+00 : f32
    %7 = vector.broadcast %cst_5 : f32 to vector<48x512xf32>
    %8 = arith.cmpf ogt, %6, %7 : vector<48x512xf32>
    %cst_6 = arith.constant 2.000000e-01 : f32
    %9 = vector.broadcast %cst_6 : f32 to vector<48x512xf32>
    %10 = arith.mulf %9, %6 : vector<48x512xf32>
    %11 = arith.select %8, %6, %10 : vector<48x512xi1>, vector<48x512xf32>
    %12 = arith.truncf %11 : vector<48x512xf32> to vector<48x512xbf16>
    %c0_7 = arith.constant 0 : index
    %c0_8 = arith.constant 0 : index
    %13 = vector.load %arg4[%c0_7, %c0_8] : memref<512x512xbf16, #tpu.memory_space<vmem>>, vector<512x512xbf16>
    %cst_9 = arith.constant dense<0.000000e+00> : vector<48x512xf32>
    %14 = tpu.matmul %12, %13, %cst_9 {dimension_numbers = #tpu.dot_dimension_numbers<[1], [0], [0], [1], [0, 0, 1, 1], [], []>} : vector<48x512xbf16>, vector<512x512xbf16>, vector<48x512xf32> -> vector<48x512xf32>
    %c0_10 = arith.constant 0 : index
    %c0_11 = arith.constant 0 : index
    %15 = vector.load %arg5[%c0_10, %c0_11] : memref<1x512xf32, #tpu.memory_space<vmem>>, vector<1x512xf32>
    %16 = vector.broadcast %15 : vector<1x512xf32> to vector<48x512xf32>
    %17 = arith.addf %14, %16 : vector<48x512xf32>
    %cst_12 = arith.constant 0.000000e+00 : f32
    %18 = vector.broadcast %cst_12 : f32 to vector<48x512xf32>
    %19 = arith.cmpf ogt, %17, %18 : vector<48x512xf32>
    %cst_13 = arith.constant 2.000000e-01 : f32
    %20 = vector.broadcast %cst_13 : f32 to vector<48x512xf32>
    %21 = arith.mulf %20, %17 : vector<48x512xf32>
    %22 = arith.select %19, %17, %21 : vector<48x512xi1>, vector<48x512xf32>
    %23 = arith.truncf %22 : vector<48x512xf32> to vector<48x512xbf16>
    %c0_14 = arith.constant 0 : index
    %c0_15 = arith.constant 0 : index
    %24 = vector.load %arg6[%c0_14, %c0_15] : memref<512x512xbf16, #tpu.memory_space<vmem>>, vector<512x512xbf16>
    %cst_16 = arith.constant dense<0.000000e+00> : vector<48x512xf32>
    %25 = tpu.matmul %23, %24, %cst_16 {dimension_numbers = #tpu.dot_dimension_numbers<[1], [0], [0], [1], [0, 0, 1, 1], [], []>} : vector<48x512xbf16>, vector<512x512xbf16>, vector<48x512xf32> -> vector<48x512xf32>
    %c0_17 = arith.constant 0 : index
    %c0_18 = arith.constant 0 : index
    %26 = vector.load %arg7[%c0_17, %c0_18] : memref<1x512xf32, #tpu.memory_space<vmem>>, vector<1x512xf32>
    %27 = vector.broadcast %26 : vector<1x512xf32> to vector<48x512xf32>
    %28 = arith.addf %25, %27 : vector<48x512xf32>
    %c0_19 = arith.constant 0 : index
    %c0_20 = arith.constant 0 : index
    %29 = vector.load %arg8[%c0_19, %c0_20] : memref<48x512xf32, #tpu.memory_space<vmem>>, vector<48x512xf32>
    tpu.vector_store %arg8[%c0_19, %c0_20], %28 {strides = array<i32>} : memref<48x512xf32, #tpu.memory_space<vmem>>, vector<48x512xf32>,
    return
  }
  func.func @transform_0(%arg0: i32) -> (i32, i32) {
    %c0_i32 = arith.constant 0 : i32
    %c0_i32_0 = arith.constant 0 : i32
    return %arg0, %c0_i32 : i32, i32
  }
  func.func @transform_1(%arg0: i32) -> (i32, i32) {
    %c0_i32 = arith.constant 0 : i32
    %c0_i32_0 = arith.constant 0 : i32
    %c0_i32_1 = arith.constant 0 : i32
    return %c0_i32, %c0_i32_0 : i32, i32
  }
  func.func @transform_2(%arg0: i32) -> (i32, i32) {
    %c0_i32 = arith.constant 0 : i32
    %c0_i32_0 = arith.constant 0 : i32
    %c0_i32_1 = arith.constant 0 : i32
    return %c0_i32, %c0_i32_0 : i32, i32
  }
  func.func @transform_3(%arg0: i32) -> (i32, i32) {
    %c0_i32 = arith.constant 0 : i32
    %c0_i32_0 = arith.constant 0 : i32
    %c0_i32_1 = arith.constant 0 : i32
    return %c0_i32, %c0_i32_0 : i32, i32
  }
  func.func @transform_4(%arg0: i32) -> (i32, i32) {
    %c0_i32 = arith.constant 0 : i32
    %c0_i32_0 = arith.constant 0 : i32
    %c0_i32_1 = arith.constant 0 : i32
    return %c0_i32, %c0_i32_0 : i32, i32
  }
  func.func @transform_5(%arg0: i32) -> (i32, i32) {
    %c0_i32 = arith.constant 0 : i32
    %c0_i32_0 = arith.constant 0 : i32
    %c0_i32_1 = arith.constant 0 : i32
    return %c0_i32, %c0_i32_0 : i32, i32
  }
  func.func @transform_6(%arg0: i32) -> (i32, i32) {
    %c0_i32 = arith.constant 0 : i32
    %c0_i32_0 = arith.constant 0 : i32
    %c0_i32_1 = arith.constant 0 : i32
    return %c0_i32, %c0_i32_0 : i32, i32
  }
  func.func @transform_7(%arg0: i32) -> (i32, i32) {
    %c0_i32 = arith.constant 0 : i32
    %c0_i32_0 = arith.constant 0 : i32
    return %arg0, %c0_i32 : i32, i32
  }
}

</mosaic_0001>

<llo_original>
// kernel: tpu_custom_call.1
$region0: #{tpu_custom_call.1}
  #allocation0 [shape = 'u32[]', space=smem, size = 0x4, offset = 0x4, fixed_abs, tag = 'smem constant byte address 0x4 - core index']
  #allocation1 [shape = 'u32[72,128]{1,0:T(1,128)}', space=vmem, size = 0x9000, scoped, tag = 'internal scratch']
  %s0 = inlined_call_operand.hbm [shape: f32[48,512], index: 0, kind: input, shape index: {}]
  %s1 = inlined_call_operand.hbm [shape: bf16[512,512], index: 1, kind: input, shape index: {}]
  %s2 = inlined_call_operand.hbm [shape: f32[1,512], index: 2, kind: input, shape index: {}]
  %s3 = inlined_call_operand.hbm [shape: bf16[512,512], index: 3, kind: input, shape index: {}]
  %s4 = inlined_call_operand.hbm [shape: f32[1,512], index: 4, kind: input, shape index: {}]
  %s5 = inlined_call_operand.hbm [shape: bf16[512,512], index: 5, kind: input, shape index: {}]
  %s6 = inlined_call_operand.vmem [shape: f32[1,512], index: 6, kind: input, shape index: {}]
  %s7 = inlined_call_operand.hbm [shape: f32[48,512], index: 7, kind: output, shape index: {}]
  %s8 = sld [smem:[#allocation0]]
  $region62: #{tpu_custom_call.1} parent=0
    _
  %s10 = ssub.s32 1, %s8
  %s11 = scalar_select 0, %s10, %s8
  $region1: #{tpu_custom_call.1} parent=0
    #allocation2 [shape = 'u8[98304]{0}', space=vmem, size = 0x18000, scoped, tag = 'input window, operand 0, single buffered']
    #allocation3 [shape = 's32[1]{0}', space=sflag, size = 0x4, scoped, tag = 'scoped memory for tpu_custom_call.1']
    #allocation4 [shape = 's32[1]{0}', space=sflag, size = 0x4, scoped, tag = 'scoped memory for tpu_custom_call.1']
    #allocation5 [shape = 'u8[524288]{0}', space=vmem, size = 0x80000, scoped, tag = 'input window, operand 1, single buffered']
    #allocation6 [shape = 's32[1]{0}', space=sflag, size = 0x4, scoped, tag = 'scoped memory for tpu_custom_call.1']
    #allocation7 [shape = 'u8[2048]{0}', space=vmem, size = 0x800, scoped, tag = 'input window, operand 2, single buffered']
    #allocation8 [shape = 'u8[524288]{0}', space=vmem, size = 0x80000, scoped, tag = 'input window, operand 3, single buffered']
    #allocation9 [shape = 's32[1]{0}', space=sflag, size = 0x4, scoped, tag = 'scoped memory for tpu_custom_call.1']
    #allocation10 [shape = 'u8[2048]{0}', space=vmem, size = 0x800, scoped, tag = 'input window, operand 4, single buffered']
    #allocation11 [shape = 'u8[524288]{0}', space=vmem, size = 0x80000, scoped, tag = 'input window, operand 5, single buffered']
    #allocation12 [shape = 's32[1]{0}', space=sflag, size = 0x4, scoped, tag = 'scoped memory for tpu_custom_call.1']
    #allocation13 [shape = 'u8[98304]{0}', space=vmem, size = 0x18000, scoped, tag = 'output window, operand 0, single buffered']
    %12 = vsyncpa [#allocation3], 0
    %13 = vsyncpa [#allocation6], 0
    %14 = vsyncpa [#allocation9], 0
    %15 = vsyncpa [#allocation12], 0
    %16 = vsyncpa [#allocation4], 0
    // Predicated region
    $region2: #{tpu_custom_call.1} parent=1 // pred_check
      _
    $region3: #{tpu_custom_call.1} parent=1 // pred_check_branch
      %18 = sbr.rel (0) target = $region5
    $region4: #{tpu_custom_call.1} parent=1 // pred_region
      %20 = vsyncadd [#allocation3], 0
      %s21 = sshll.u32 %s0, 4
      %s22 = int_to_ptr.hbm [resolvable:$true] %s21
      %s23 = sshll.u32 [#allocation2], 4
      %s24 = int_to_ptr.vmem [resolvable:$true] %s23
      %29 = dma.hbm_to_vmem [thread:$0]  %s22, 3072, %s24, [#allocation3], 512, 512, 32
    $region5: #{tpu_custom_call.1} parent=1 // pred_fallthru
      _
    // Predicated region
    $region6: #{tpu_custom_call.1} parent=1 // pred_check
      _
    $region7: #{tpu_custom_call.1} parent=1 // pred_check_branch
      %31 = sbr.rel (0) target = $region9
    $region8: #{tpu_custom_call.1} parent=1 // pred_region
      %33 = vsyncadd [#allocation6], 0
      %s34 = sshll.u32 %s1, 4
      %s35 = int_to_ptr.hbm [resolvable:$true] %s34
      %s36 = sshll.u32 [#allocation5], 4
      %s37 = int_to_ptr.vmem [resolvable:$true] %s36
      %42 = dma.hbm_to_vmem [thread:$0]  %s35, 16384, %s37, [#allocation6], 256, 256, 16
    $region9: #{tpu_custom_call.1} parent=1 // pred_fallthru
      _
    // Predicated region
    $region10: #{tpu_custom_call.1} parent=1 // pred_check
      _
    $region11: #{tpu_custom_call.1} parent=1 // pred_check_branch
      %44 = sbr.rel (0) target = $region13
    $region12: #{tpu_custom_call.1} parent=1 // pred_region
      %46 = vsyncadd [#allocation6], 0
      %s48 = sshll.u32 %s2, 4
      %s49 = int_to_ptr.hbm [resolvable:$true] %s48
      %s50 = sshll.u32 [#allocation7], 4
      %s51 = int_to_ptr.vmem [resolvable:$true] %s50
      %53 = dma.hbm_to_vmem [thread:$0]  %s49, 64, %s51, [#allocation6]
    $region13: #{tpu_custom_call.1} parent=1 // pred_fallthru
      _
    // Predicated region
    $region14: #{tpu_custom_call.1} parent=1 // pred_check
      _
    $region15: #{tpu_custom_call.1} parent=1 // pred_check_branch
      %55 = sbr.rel (0) target = $region17
    $region16: #{tpu_custom_call.1} parent=1 // pred_region
      %57 = vsyncadd [#allocation9], 0
      %s58 = sshll.u32 %s3, 4
      %s59 = int_to_ptr.hbm [resolvable:$true] %s58
      %s60 = sshll.u32 [#allocation8], 4
      %s61 = int_to_ptr.vmem [resolvable:$true] %s60
      %66 = dma.hbm_to_vmem [thread:$0]  %s59, 16384, %s61, [#allocation9], 256, 256, 16
    $region17: #{tpu_custom_call.1} parent=1 // pred_fallthru
      _
    // Predicated region
    $region18: #{tpu_custom_call.1} parent=1 // pred_check
      _
    $region19: #{tpu_custom_call.1} parent=1 // pred_check_branch
      %68 = sbr.rel (0) target = $region21
    $region20: #{tpu_custom_call.1} parent=1 // pred_region
      %70 = vsyncadd [#allocation9], 0
      %s72 = sshll.u32 %s4, 4
      %s73 = int_to_ptr.hbm [resolvable:$true] %s72
      %s74 = sshll.u32 [#allocation10], 4
      %s75 = int_to_ptr.vmem [resolvable:$true] %s74
      %77 = dma.hbm_to_vmem [thread:$0]  %s73, 64, %s75, [#allocation9]
    $region21: #{tpu_custom_call.1} parent=1 // pred_fallthru
      _
    // Predicated region
    $region22: #{tpu_custom_call.1} parent=1 // pred_check
      _
    $region23: #{tpu_custom_call.1} parent=1 // pred_check_branch
      %79 = sbr.rel (0) target = $region25
    $region24: #{tpu_custom_call.1} parent=1 // pred_region
      %81 = vsyncadd [#allocation12], 0
      %s82 = sshll.u32 %s5, 4
      %s83 = int_to_ptr.hbm [resolvable:$true] %s82
      %s84 = sshll.u32 [#allocation11], 4
      %s85 = int_to_ptr.vmem [resolvable:$true] %s84
      %90 = dma.hbm_to_vmem [thread:$0]  %s83, 16384, %s85, [#allocation12], 256, 256, 16
    $region25: #{tpu_custom_call.1} parent=1 // pred_fallthru
      _
    // Predicated region
    $region26: #{tpu_custom_call.1} parent=1 // pred_check
      _
    $region27: #{tpu_custom_call.1} parent=1 // pred_check_branch
      %92 = sbr.rel (0) target = $region29
    $region28: #{tpu_custom_call.1} parent=1 // pred_region
      _
    $region29: #{tpu_custom_call.1} parent=1 // pred_fallthru
      _
    // Predicated region
    $region30: #{tpu_custom_call.1} parent=1 // pred_check
      _
    $region31: #{tpu_custom_call.1} parent=1 // pred_check_branch
      %94 = sbr.rel (0) target = $region33
    $region32: #{tpu_custom_call.1} parent=1 // pred_region
      %96 = dma.done [#allocation3], 3072
    $region33: #{tpu_custom_call.1} parent=1 // pred_fallthru
      _
    // Predicated region
    $region34: #{tpu_custom_call.1} parent=1 // pred_check
      _
    $region35: #{tpu_custom_call.1} parent=1 // pred_check_branch
      %98 = sbr.rel (0) target = $region37
    $region36: #{tpu_custom_call.1} parent=1 // pred_region
      %100 = dma.done [#allocation6], 16384
    $region37: #{tpu_custom_call.1} parent=1 // pred_fallthru
      _
    // Predicated region
    $region38: #{tpu_custom_call.1} parent=1 // pred_check
      _
    $region39: #{tpu_custom_call.1} parent=1 // pred_check_branch
      %102 = sbr.rel (0) target = $region41
    $region40: #{tpu_custom_call.1} parent=1 // pred_region
      %104 = dma.done [#allocation6], 64
    $region41: #{tpu_custom_call.1} parent=1 // pred_fallthru
      _
    // Predicated region
    $region42: #{tpu_custom_call.1} parent=1 // pred_check
      _
    $region43: #{tpu_custom_call.1} parent=1 // pred_check_branch
      %106 = sbr.rel (0) target = $region45
    $region44: #{tpu_custom_call.1} parent=1 // pred_region
      %108 = dma.done [#allocation9], 16384
    $region45: #{tpu_custom_call.1} parent=1 // pred_fallthru
      _
    // Predicated region
    $region46: #{tpu_custom_call.1} parent=1 // pred_check
      _
    $region47: #{tpu_custom_call.1} parent=1 // pred_check_branch
      %110 = sbr.rel (0) target = $region49
    $region48: #{tpu_custom_call.1} parent=1 // pred_region
      %112 = dma.done [#allocation9], 64
    $region49: #{tpu_custom_call.1} parent=1 // pred_fallthru
      _
    // Predicated region
    $region50: #{tpu_custom_call.1} parent=1 // pred_check
      _
    $region51: #{tpu_custom_call.1} parent=1 // pred_check_branch
      %114 = sbr.rel (0) target = $region53
    $region52: #{tpu_custom_call.1} parent=1 // pred_region
      %116 = dma.done [#allocation12], 16384
    $region53: #{tpu_custom_call.1} parent=1 // pred_fallthru
      _
    %v117 = vld [vmem:[#allocation2] sm:$0xff]
    %v118 = vld [vmem:[#allocation2 + $0x8] sm:$0xff]
    %v119 = vld [vmem:[#allocation2 + $0x10] sm:$0xff]
    %v120 = vld [vmem:[#allocation2 + $0x18] sm:$0xff]
    %v121 = vld [vmem:[#allocation2 + $0x20] sm:$0xff]
    %v122 = vld [vmem:[#allocation2 + $0x28] sm:$0xff]
    %v123 = vld [vmem:[#allocation2 + $0x30] sm:$0xff]
    %v124 = vld [vmem:[#allocation2 + $0x38] sm:$0xff]
    %v125 = vld [vmem:[#allocation2 + $0x40] sm:$0xff]
    %v126 = vld [vmem:[#allocation2 + $0x48] sm:$0xff]
    %v127 = vld [vmem:[#allocation2 + $0x50] sm:$0xff]
    %v128 = vld [vmem:[#allocation2 + $0x58] sm:$0xff]
    %v129 = vld [vmem:[#allocation2 + $0x60] sm:$0xff]
    %v130 = vld [vmem:[#allocation2 + $0x68] sm:$0xff]
    %v131 = vld [vmem:[#allocation2 + $0x70] sm:$0xff]
    %v132 = vld [vmem:[#allocation2 + $0x78] sm:$0xff]
    %v133 = vld [vmem:[#allocation2 + $0x80] sm:$0xff]
    %v134 = vld [vmem:[#allocation2 + $0x88] sm:$0xff]
    %v135 = vld [vmem:[#allocation2 + $0x90] sm:$0xff]
    %v136 = vld [vmem:[#allocation2 + $0x98] sm:$0xff]
    %v137 = vld [vmem:[#allocation2 + $0xa0] sm:$0xff]
    %v138 = vld [vmem:[#allocation2 + $0xa8] sm:$0xff]
    %v139 = vld [vmem:[#allocation2 + $0xb0] sm:$0xff]
    %v140 = vld [vmem:[#allocation2 + $0xb8] sm:$0xff]
    %v141 = vpack.c.bf16 %v121, %v117
    %v142 = vpack.c.bf16 %v122, %v118
    %v143 = vpack.c.bf16 %v123, %v119
    %v144 = vpack.c.bf16 %v124, %v120
    %v145 = vpack.c.bf16 %v129, %v125
    %v146 = vpack.c.bf16 %v130, %v126
    %v147 = vpack.c.bf16 %v131, %v127
    %v148 = vpack.c.bf16 %v132, %v128
    %v149 = vpack.c.bf16 %v137, %v133
    %v150 = vpack.c.bf16 %v138, %v134
    %v151 = vpack.c.bf16 %v139, %v135
    %v152 = vpack.c.bf16 %v140, %v136
    %v153 = vld [vmem:[#allocation5] sm:$0xff]
    %v154 = vld [vmem:[#allocation5 + $0x8] sm:$0xff]
    %v155 = vld [vmem:[#allocation5 + $0x10] sm:$0xff]
    %v156 = vld [vmem:[#allocation5 + $0x18] sm:$0xff]
    %v157 = vld [vmem:[#allocation5 + $0x20] sm:$0xff]
    %v158 = vld [vmem:[#allocation5 + $0x28] sm:$0xff]
    %v159 = vld [vmem:[#allocation5 + $0x30] sm:$0xff]
    %v160 = vld [vmem:[#allocation5 + $0x38] sm:$0xff]
    %v161 = vld [vmem:[#allocation5 + $0x40] sm:$0xff]
    %v162 = vld [vmem:[#allocation5 + $0x48] sm:$0xff]
    %v163 = vld [vmem:[#allocation5 + $0x50] sm:$0xff]
    %v164 = vld [vmem:[#allocation5 + $0x58] sm:$0xff]
    %v165 = vld [vmem:[#allocation5 + $0x60] sm:$0xff]
    %v166 = vld [vmem:[#allocation5 + $0x68] sm:$0xff]
    %v167 = vld [vmem:[#allocation5 + $0x70] sm:$0xff]
    %v168 = vld [vmem:[#allocation5 + $0x78] sm:$0xff]
    %v169 = vld [vmem:[#allocation5 + $0x80] sm:$0xff]
    %v170 = vld [vmem:[#allocation5 + $0x88] sm:$0xff]
    %v171 = vld [vmem:[#allocation5 + $0x90] sm:$0xff]
    %v172 = vld [vmem:[#allocation5 + $0x98] sm:$0xff]
    %v173 = vld [vmem:[#allocation5 + $0xa0] sm:$0xff]
    %v174 = vld [vmem:[#allocation5 + $0xa8] sm:$0xff]
    %v175 = vld [vmem:[#allocation5 + $0xb0] sm:$0xff]
    %v176 = vld [vmem:[#allocation5 + $0xb8] sm:$0xff]
    %v177 = vld [vmem:[#allocation5 + $0xc0] sm:$0xff]
    %v178 = vld [vmem:[#allocation5 + $0xc8] sm:$0xff]
    %v179 = vld [vmem:[#allocation5 + $0xd0] sm:$0xff]
    %v180 = vld [vmem:[#allocation5 + $0xd8] sm:$0xff]
    %v181 = vld [vmem:[#allocation5 + $0xe0] sm:$0xff]
    %v182 = vld [vmem:[#allocation5 + $0xe8] sm:$0xff]
    %v183 = vld [vmem:[#allocation5 + $0xf0] sm:$0xff]
    %v184 = vld [vmem:[#allocation5 + $0xf8] sm:$0xff]
    %v185 = vld [vmem:[#allocation5 + $0x100] sm:$0xff]
    %v186 = vld [vmem:[#allocation5 + $0x108] sm:$0xff]
    %v187 = vld [vmem:[#allocation5 + $0x110] sm:$0xff]
    %v188 = vld [vmem:[#allocation5 + $0x118] sm:$0xff]
    %v189 = vld [vmem:[#allocation5 + $0x120] sm:$0xff]
    %v190 = vld [vmem:[#allocation5 + $0x128] sm:$0xff]
    %v191 = vld [vmem:[#allocation5 + $0x130] sm:$0xff]
    %v192 = vld [vmem:[#allocation5 + $0x138] sm:$0xff]
    %v193 = vld [vmem:[#allocation5 + $0x140] sm:$0xff]
    %v194 = vld [vmem:[#allocation5 + $0x148] sm:$0xff]
    %v195 = vld [vmem:[#allocation5 + $0x150] sm:$0xff]
    %v196 = vld [vmem:[#allocation5 + $0x158] sm:$0xff]
    %v197 = vld [vmem:[#allocation5 + $0x160] sm:$0xff]
    %v198 = vld [vmem:[#allocation5 + $0x168] sm:$0xff]
    %v199 = vld [vmem:[#allocation5 + $0x170] sm:$0xff]
    %v200 = vld [vmem:[#allocation5 + $0x178] sm:$0xff]
    %v201 = vld [vmem:[#allocation5 + $0x180] sm:$0xff]
    %v202 = vld [vmem:[#allocation5 + $0x188] sm:$0xff]
    %v203 = vld [vmem:[#allocation5 + $0x190] sm:$0xff]
    %v204 = vld [vmem:[#allocation5 + $0x198] sm:$0xff]
    %v205 = vld [vmem:[#allocation5 + $0x1a0] sm:$0xff]
    %v206 = vld [vmem:[#allocation5 + $0x1a8] sm:$0xff]
    %v207 = vld [vmem:[#allocation5 + $0x1b0] sm:$0xff]
    %v208 = vld [vmem:[#allocation5 + $0x1b8] sm:$0xff]
    %v209 = vld [vmem:[#allocation5 + $0x1c0] sm:$0xff]
    %v210 = vld [vmem:[#allocation5 + $0x1c8] sm:$0xff]
    %v211 = vld [vmem:[#allocation5 + $0x1d0] sm:$0xff]
    %v212 = vld [vmem:[#allocation5 + $0x1d8] sm:$0xff]
    %v213 = vld [vmem:[#allocation5 + $0x1e0] sm:$0xff]
    %v214 = vld [vmem:[#allocation5 + $0x1e8] sm:$0xff]
    %v215 = vld [vmem:[#allocation5 + $0x1f0] sm:$0xff]
    %v216 = vld [vmem:[#allocation5 + $0x1f8] sm:$0xff]
    %v217 = vld [vmem:[#allocation5 + $0x200] sm:$0xff]
    %v218 = vld [vmem:[#allocation5 + $0x208] sm:$0xff]
    %v219 = vld [vmem:[#allocation5 + $0x210] sm:$0xff]
    %v220 = vld [vmem:[#allocation5 + $0x218] sm:$0xff]
    %v221 = vld [vmem:[#allocation5 + $0x220] sm:$0xff]
    %v222 = vld [vmem:[#allocation5 + $0x228] sm:$0xff]
    %v223 = vld [vmem:[#allocation5 + $0x230] sm:$0xff]
    %v224 = vld [vmem:[#allocation5 + $0x238] sm:$0xff]
    %v225 = vld [vmem:[#allocation5 + $0x240] sm:$0xff]
    %v226 = vld [vmem:[#allocation5 + $0x248] sm:$0xff]
    %v227 = vld [vmem:[#allocation5 + $0x250] sm:$0xff]
    %v228 = vld [vmem:[#allocation5 + $0x258] sm:$0xff]
    %v229 = vld [vmem:[#allocation5 + $0x260] sm:$0xff]
    %v230 = vld [vmem:[#allocation5 + $0x268] sm:$0xff]
    %v231 = vld [vmem:[#allocation5 + $0x270] sm:$0xff]
    %v232 = vld [vmem:[#allocation5 + $0x278] sm:$0xff]
    %v233 = vld [vmem:[#allocation5 + $0x280] sm:$0xff]
    %v234 = vld [vmem:[#allocation5 + $0x288] sm:$0xff]
    %v235 = vld [vmem:[#allocation5 + $0x290] sm:$0xff]
    %v236 = vld [vmem:[#allocation5 + $0x298] sm:$0xff]
    %v237 = vld [vmem:[#allocation5 + $0x2a0] sm:$0xff]
    %v238 = vld [vmem:[#allocation5 + $0x2a8] sm:$0xff]
    %v239 = vld [vmem:[#allocation5 + $0x2b0] sm:$0xff]
    %v240 = vld [vmem:[#allocation5 + $0x2b8] sm:$0xff]
    %v241 = vld [vmem:[#allocation5 + $0x2c0] sm:$0xff]
    %v242 = vld [vmem:[#allocation5 + $0x2c8] sm:$0xff]
    %v243 = vld [vmem:[#allocation5 + $0x2d0] sm:$0xff]
    %v244 = vld [vmem:[#allocation5 + $0x2d8] sm:$0xff]
    %v245 = vld [vmem:[#allocation5 + $0x2e0] sm:$0xff]
    %v246 = vld [vmem:[#allocation5 + $0x2e8] sm:$0xff]
    %v247 = vld [vmem:[#allocation5 + $0x2f0] sm:$0xff]
    %v248 = vld [vmem:[#allocation5 + $0x2f8] sm:$0xff]
    %v249 = vld [vmem:[#allocation5 + $0x300] sm:$0xff]
    %v250 = vld [vmem:[#allocation5 + $0x308] sm:$0xff]
    %v251 = vld [vmem:[#allocation5 + $0x310] sm:$0xff]
    %v252 = vld [vmem:[#allocation5 + $0x318] sm:$0xff]
    %v253 = vld [vmem:[#allocation5 + $0x320] sm:$0xff]
    %v254 = vld [vmem:[#allocation5 + $0x328] sm:$0xff]
    %v255 = vld [vmem:[#allocation5 + $0x330] sm:$0xff]
    %v256 = vld [vmem:[#allocation5 + $0x338] sm:$0xff]
    %v257 = vld [vmem:[#allocation5 + $0x340] sm:$0xff]
    %v258 = vld [vmem:[#allocation5 + $0x348] sm:$0xff]
    %v259 = vld [vmem:[#allocation5 + $0x350] sm:$0xff]
    %v260 = vld [vmem:[#allocation5 + $0x358] sm:$0xff]
    %v261 = vld [vmem:[#allocation5 + $0x360] sm:$0xff]
    %v262 = vld [vmem:[#allocation5 + $0x368] sm:$0xff]
    %v263 = vld [vmem:[#allocation5 + $0x370] sm:$0xff]
    %v264 = vld [vmem:[#allocation5 + $0x378] sm:$0xff]
    %v265 = vld [vmem:[#allocation5 + $0x380] sm:$0xff]
    %v266 = vld [vmem:[#allocation5 + $0x388] sm:$0xff]
    %v267 = vld [vmem:[#allocation5 + $0x390] sm:$0xff]
    %v268 = vld [vmem:[#allocation5 + $0x398] sm:$0xff]
    %v269 = vld [vmem:[#allocation5 + $0x3a0] sm:$0xff]
    %v270 = vld [vmem:[#allocation5 + $0x3a8] sm:$0xff]
    %v271 = vld [vmem:[#allocation5 + $0x3b0] sm:$0xff]
    %v272 = vld [vmem:[#allocation5 + $0x3b8] sm:$0xff]
    %v273 = vld [vmem:[#allocation5 + $0x3c0] sm:$0xff]
    %v274 = vld [vmem:[#allocation5 + $0x3c8] sm:$0xff]
    %v275 = vld [vmem:[#allocation5 + $0x3d0] sm:$0xff]
    %v276 = vld [vmem:[#allocation5 + $0x3d8] sm:$0xff]
    %v277 = vld [vmem:[#allocation5 + $0x3e0] sm:$0xff]
    %v278 = vld [vmem:[#allocation5 + $0x3e8] sm:$0xff]
    %v279 = vld [vmem:[#allocation5 + $0x3f0] sm:$0xff]
    %v280 = vld [vmem:[#allocation5 + $0x3f8] sm:$0xff]
    %v281 = vld [vmem:[#allocation7] sm:$0xf]
    %v283 = vperm.slane %v281, 0
    %v284 = vperm.slane %v281, 1
    %v285 = vperm.slane %v281, 2
    %v286 = vperm.slane %v281, 3
    %v419 = vunpack.c.l.b16 %v153
    %v420 = vunpack.c.h.b16 %v153
    %v421 = vunpack.c.l.b16 %v154
    %v422 = vunpack.c.h.b16 %v154
    %v423 = vunpack.c.l.b16 %v155
    %v424 = vunpack.c.h.b16 %v155
    %v425 = vunpack.c.l.b16 %v156
    %v426 = vunpack.c.h.b16 %v156
    %v427 = vunpack.c.l.b16 %v157
    %v428 = vunpack.c.h.b16 %v157
    %v429 = vunpack.c.l.b16 %v158
    %v430 = vunpack.c.h.b16 %v158
    %v431 = vunpack.c.l.b16 %v159
    %v432 = vunpack.c.h.b16 %v159
    %v433 = vunpack.c.l.b16 %v160
    %v434 = vunpack.c.h.b16 %v160
    %v435 = vunpack.c.l.b16 %v161
    %v436 = vunpack.c.h.b16 %v161
    %v437 = vunpack.c.l.b16 %v162
    %v438 = vunpack.c.h.b16 %v162
    %v439 = vunpack.c.l.b16 %v163
    %v440 = vunpack.c.h.b16 %v163
    %v441 = vunpack.c.l.b16 %v164
    %v442 = vunpack.c.h.b16 %v164
    %v443 = vunpack.c.l.b16 %v165
    %v444 = vunpack.c.h.b16 %v165
    %v445 = vunpack.c.l.b16 %v166
    %v446 = vunpack.c.h.b16 %v166
    %v447 = vunpack.c.l.b16 %v167
    %v448 = vunpack.c.h.b16 %v167
    %v449 = vunpack.c.l.b16 %v168
    %v450 = vunpack.c.h.b16 %v168
    %v451 = vunpack.c.l.b16 %v169
    %v452 = vunpack.c.h.b16 %v169
    %v453 = vunpack.c.l.b16 %v170
    %v454 = vunpack.c.h.b16 %v170
    %v455 = vunpack.c.l.b16 %v171
    %v456 = vunpack.c.h.b16 %v171
    %v457 = vunpack.c.l.b16 %v172
    %v458 = vunpack.c.h.b16 %v172
    %v459 = vunpack.c.l.b16 %v173
    %v460 = vunpack.c.h.b16 %v173
    %v461 = vunpack.c.l.b16 %v174
    %v462 = vunpack.c.h.b16 %v174
    %v463 = vunpack.c.l.b16 %v175
    %v464 = vunpack.c.h.b16 %v175
    %v465 = vunpack.c.l.b16 %v176
    %v466 = vunpack.c.h.b16 %v176
    %v467 = vunpack.c.l.b16 %v177
    %v468 = vunpack.c.h.b16 %v177
    %v469 = vunpack.c.l.b16 %v178
    %v470 = vunpack.c.h.b16 %v178
    %v471 = vunpack.c.l.b16 %v179
    %v472 = vunpack.c.h.b16 %v179
    %v473 = vunpack.c.l.b16 %v180
    %v474 = vunpack.c.h.b16 %v180
    %v475 = vunpack.c.l.b16 %v181
    %v476 = vunpack.c.h.b16 %v181
    %v477 = vunpack.c.l.b16 %v182
    %v478 = vunpack.c.h.b16 %v182
    %v479 = vunpack.c.l.b16 %v183
    %v480 = vunpack.c.h.b16 %v183
    %v481 = vunpack.c.l.b16 %v184
    %v482 = vunpack.c.h.b16 %v184
    %v483 = vunpack.c.l.b16 %v185
    %v484 = vunpack.c.h.b16 %v185
    %v485 = vunpack.c.l.b16 %v186
    %v486 = vunpack.c.h.b16 %v186
    %v487 = vunpack.c.l.b16 %v187
    %v488 = vunpack.c.h.b16 %v187
    %v489 = vunpack.c.l.b16 %v188
    %v490 = vunpack.c.h.b16 %v188
    %v491 = vunpack.c.l.b16 %v189
    %v492 = vunpack.c.h.b16 %v189
    %v493 = vunpack.c.l.b16 %v190
    %v494 = vunpack.c.h.b16 %v190
    %v495 = vunpack.c.l.b16 %v191
    %v496 = vunpack.c.h.b16 %v191
    %v497 = vunpack.c.l.b16 %v192
    %v498 = vunpack.c.h.b16 %v192
    %v499 = vunpack.c.l.b16 %v193
    %v500 = vunpack.c.h.b16 %v193
    %v501 = vunpack.c.l.b16 %v194
    %v502 = vunpack.c.h.b16 %v194
    %v503 = vunpack.c.l.b16 %v195
    %v504 = vunpack.c.h.b16 %v195
    %v505 = vunpack.c.l.b16 %v196
    %v506 = vunpack.c.h.b16 %v196
    %v507 = vunpack.c.l.b16 %v197
    %v508 = vunpack.c.h.b16 %v197
    %v509 = vunpack.c.l.b16 %v198
    %v510 = vunpack.c.h.b16 %v198
    %v511 = vunpack.c.l.b16 %v199
    %v512 = vunpack.c.h.b16 %v199
    %v513 = vunpack.c.l.b16 %v200
    %v514 = vunpack.c.h.b16 %v200
    %v515 = vunpack.c.l.b16 %v201
    %v516 = vunpack.c.h.b16 %v201
    %v517 = vunpack.c.l.b16 %v202
    %v518 = vunpack.c.h.b16 %v202
    %v519 = vunpack.c.l.b16 %v203
    %v520 = vunpack.c.h.b16 %v203
    %v521 = vunpack.c.l.b16 %v204
    %v522 = vunpack.c.h.b16 %v204
    %v523 = vunpack.c.l.b16 %v205
    %v524 = vunpack.c.h.b16 %v205
    %v525 = vunpack.c.l.b16 %v206
    %v526 = vunpack.c.h.b16 %v206
    %v527 = vunpack.c.l.b16 %v207
    %v528 = vunpack.c.h.b16 %v207
    %v529 = vunpack.c.l.b16 %v208
    %v530 = vunpack.c.h.b16 %v208
    %v531 = vunpack.c.l.b16 %v209
    %v532 = vunpack.c.h.b16 %v209
    %v533 = vunpack.c.l.b16 %v210
    %v534 = vunpack.c.h.b16 %v210
    %v535 = vunpack.c.l.b16 %v211
    %v536 = vunpack.c.h.b16 %v211
    %v537 = vunpack.c.l.b16 %v212
    %v538 = vunpack.c.h.b16 %v212
    %v539 = vunpack.c.l.b16 %v213
    %v540 = vunpack.c.h.b16 %v213
    %v541 = vunpack.c.l.b16 %v214
    %v542 = vunpack.c.h.b16 %v214
    %v543 = vunpack.c.l.b16 %v215
    %v544 = vunpack.c.h.b16 %v215
    %v545 = vunpack.c.l.b16 %v216
    %v546 = vunpack.c.h.b16 %v216
    %v547 = vunpack.c.l.b16 %v217
    %v548 = vunpack.c.h.b16 %v217
    %v549 = vunpack.c.l.b16 %v218
    %v550 = vunpack.c.h.b16 %v218
    %v551 = vunpack.c.l.b16 %v219
    %v552 = vunpack.c.h.b16 %v219
    %v553 = vunpack.c.l.b16 %v220
    %v554 = vunpack.c.h.b16 %v220
    %v555 = vunpack.c.l.b16 %v221
    %v556 = vunpack.c.h.b16 %v221
    %v557 = vunpack.c.l.b16 %v222
    %v558 = vunpack.c.h.b16 %v222
    %v559 = vunpack.c.l.b16 %v223
    %v560 = vunpack.c.h.b16 %v223
    %v561 = vunpack.c.l.b16 %v224
    %v562 = vunpack.c.h.b16 %v224
    %v563 = vunpack.c.l.b16 %v225
    %v564 = vunpack.c.h.b16 %v225
    %v565 = vunpack.c.l.b16 %v226
    %v566 = vunpack.c.h.b16 %v226
    %v567 = vunpack.c.l.b16 %v227
    %v568 = vunpack.c.h.b16 %v227
    %v569 = vunpack.c.l.b16 %v228
    %v570 = vunpack.c.h.b16 %v228
    %v571 = vunpack.c.l.b16 %v229
    %v572 = vunpack.c.h.b16 %v229
    %v573 = vunpack.c.l.b16 %v230
    %v574 = vunpack.c.h.b16 %v230
    %v575 = vunpack.c.l.b16 %v231
    %v576 = vunpack.c.h.b16 %v231
    %v577 = vunpack.c.l.b16 %v232
    %v578 = vunpack.c.h.b16 %v232
    %v579 = vunpack.c.l.b16 %v233
    %v580 = vunpack.c.h.b16 %v233
    %v581 = vunpack.c.l.b16 %v234
    %v582 = vunpack.c.h.b16 %v234
    %v583 = vunpack.c.l.b16 %v235
    %v584 = vunpack.c.h.b16 %v235
    %v585 = vunpack.c.l.b16 %v236
    %v586 = vunpack.c.h.b16 %v236
    %v587 = vunpack.c.l.b16 %v237
    %v588 = vunpack.c.h.b16 %v237
    %v589 = vunpack.c.l.b16 %v238
    %v590 = vunpack.c.h.b16 %v238
    %v591 = vunpack.c.l.b16 %v239
    %v592 = vunpack.c.h.b16 %v239
    %v593 = vunpack.c.l.b16 %v240
    %v594 = vunpack.c.h.b16 %v240
    %v595 = vunpack.c.l.b16 %v241
    %v596 = vunpack.c.h.b16 %v241
    %v597 = vunpack.c.l.b16 %v242
    %v598 = vunpack.c.h.b16 %v242
    %v599 = vunpack.c.l.b16 %v243
    %v600 = vunpack.c.h.b16 %v243
    %v601 = vunpack.c.l.b16 %v244
    %v602 = vunpack.c.h.b16 %v244
    %v603 = vunpack.c.l.b16 %v245
    %v604 = vunpack.c.h.b16 %v245
    %v605 = vunpack.c.l.b16 %v246
    %v606 = vunpack.c.h.b16 %v246
    %v607 = vunpack.c.l.b16 %v247
    %v608 = vunpack.c.h.b16 %v247
    %v609 = vunpack.c.l.b16 %v248
    %v610 = vunpack.c.h.b16 %v248
    %v611 = vunpack.c.l.b16 %v249
    %v612 = vunpack.c.h.b16 %v249
    %v613 = vunpack.c.l.b16 %v250
    %v614 = vunpack.c.h.b16 %v250
    %v615 = vunpack.c.l.b16 %v251
    %v616 = vunpack.c.h.b16 %v251
    %v617 = vunpack.c.l.b16 %v252
    %v618 = vunpack.c.h.b16 %v252
    %v619 = vunpack.c.l.b16 %v253
    %v620 = vunpack.c.h.b16 %v253
    %v621 = vunpack.c.l.b16 %v254
    %v622 = vunpack.c.h.b16 %v254
    %v623 = vunpack.c.l.b16 %v255
    %v624 = vunpack.c.h.b16 %v255
    %v625 = vunpack.c.l.b16 %v256
    %v626 = vunpack.c.h.b16 %v256
    %v627 = vunpack.c.l.b16 %v257
    %v628 = vunpack.c.h.b16 %v257
    %v629 = vunpack.c.l.b16 %v258
    %v630 = vunpack.c.h.b16 %v258
    %v631 = vunpack.c.l.b16 %v259
    %v632 = vunpack.c.h.b16 %v259
    %v633 = vunpack.c.l.b16 %v260
    %v634 = vunpack.c.h.b16 %v260
    %v635 = vunpack.c.l.b16 %v261
    %v636 = vunpack.c.h.b16 %v261
    %v637 = vunpack.c.l.b16 %v262
    %v638 = vunpack.c.h.b16 %v262
    %v639 = vunpack.c.l.b16 %v263
    %v640 = vunpack.c.h.b16 %v263
    %v641 = vunpack.c.l.b16 %v264
    %v642 = vunpack.c.h.b16 %v264
    %v643 = vunpack.c.l.b16 %v265
    %v644 = vunpack.c.h.b16 %v265
    %v645 = vunpack.c.l.b16 %v266
    %v646 = vunpack.c.h.b16 %v266
    %v647 = vunpack.c.l.b16 %v267
    %v648 = vunpack.c.h.b16 %v267
    %v649 = vunpack.c.l.b16 %v268
    %v650 = vunpack.c.h.b16 %v268
    %v651 = vunpack.c.l.b16 %v269
    %v652 = vunpack.c.h.b16 %v269
    %v653 = vunpack.c.l.b16 %v270
    %v654 = vunpack.c.h.b16 %v270
    %v655 = vunpack.c.l.b16 %v271
    %v656 = vunpack.c.h.b16 %v271
    %v657 = vunpack.c.l.b16 %v272
    %v658 = vunpack.c.h.b16 %v272
    %v659 = vunpack.c.l.b16 %v273
    %v660 = vunpack.c.h.b16 %v273
    %v661 = vunpack.c.l.b16 %v274
    %v662 = vunpack.c.h.b16 %v274
    %v663 = vunpack.c.l.b16 %v275
    %v664 = vunpack.c.h.b16 %v275
    %v665 = vunpack.c.l.b16 %v276
    %v666 = vunpack.c.h.b16 %v276
    %v667 = vunpack.c.l.b16 %v277
    %v668 = vunpack.c.h.b16 %v277
    %v669 = vunpack.c.l.b16 %v278
    %v670 = vunpack.c.h.b16 %v278
    %v671 = vunpack.c.l.b16 %v279
    %v672 = vunpack.c.h.b16 %v279
    %v673 = vunpack.c.l.b16 %v280
    %v674 = vunpack.c.h.b16 %v280
    %v675 = vpack.c.b16 %v423, %v419
    %v676 = vpack.c.b16 %v424, %v420
    %v677 = vpack.c.b16 %v425, %v421
    %v678 = vpack.c.b16 %v426, %v422
    %v679 = vpack.c.b16 %v431, %v427
    %v680 = vpack.c.b16 %v432, %v428
    %v681 = vpack.c.b16 %v433, %v429
    %v682 = vpack.c.b16 %v434, %v430
    %v683 = vpack.c.b16 %v439, %v435
    %v684 = vpack.c.b16 %v440, %v436
    %v685 = vpack.c.b16 %v441, %v437
    %v686 = vpack.c.b16 %v442, %v438
    %v687 = vpack.c.b16 %v447, %v443
    %v688 = vpack.c.b16 %v448, %v444
    %v689 = vpack.c.b16 %v449, %v445
    %v690 = vpack.c.b16 %v450, %v446
    %v691 = vpack.c.b16 %v455, %v451
    %v692 = vpack.c.b16 %v456, %v452
    %v693 = vpack.c.b16 %v457, %v453
    %v694 = vpack.c.b16 %v458, %v454
    %v695 = vpack.c.b16 %v463, %v459
    %v696 = vpack.c.b16 %v464, %v460
    %v697 = vpack.c.b16 %v465, %v461
    %v698 = vpack.c.b16 %v466, %v462
    %v699 = vpack.c.b16 %v471, %v467
    %v700 = vpack.c.b16 %v472, %v468
    %v701 = vpack.c.b16 %v473, %v469
    %v702 = vpack.c.b16 %v474, %v470
    %v703 = vpack.c.b16 %v479, %v475
    %v704 = vpack.c.b16 %v480, %v476
    %v705 = vpack.c.b16 %v481, %v477
    %v706 = vpack.c.b16 %v482, %v478
    %v707 = vpack.c.b16 %v487, %v483
    %v708 = vpack.c.b16 %v488, %v484
    %v709 = vpack.c.b16 %v489, %v485
    %v710 = vpack.c.b16 %v490, %v486
    %v711 = vpack.c.b16 %v495, %v491
    %v712 = vpack.c.b16 %v496, %v492
    %v713 = vpack.c.b16 %v497, %v493
    %v714 = vpack.c.b16 %v498, %v494
    %v715 = vpack.c.b16 %v503, %v499
    %v716 = vpack.c.b16 %v504, %v500
    %v717 = vpack.c.b16 %v505, %v501
    %v718 = vpack.c.b16 %v506, %v502
    %v719 = vpack.c.b16 %v511, %v507
    %v720 = vpack.c.b16 %v512, %v508
    %v721 = vpack.c.b16 %v513, %v509
    %v722 = vpack.c.b16 %v514, %v510
    %v723 = vpack.c.b16 %v519, %v515
    %v724 = vpack.c.b16 %v520, %v516
    %v725 = vpack.c.b16 %v521, %v517
    %v726 = vpack.c.b16 %v522, %v518
    %v727 = vpack.c.b16 %v527, %v523
    %v728 = vpack.c.b16 %v528, %v524
    %v729 = vpack.c.b16 %v529, %v525
    %v730 = vpack.c.b16 %v530, %v526
    %v731 = vpack.c.b16 %v535, %v531
    %v732 = vpack.c.b16 %v536, %v532
    %v733 = vpack.c.b16 %v537, %v533
    %v734 = vpack.c.b16 %v538, %v534
    %v735 = vpack.c.b16 %v543, %v539
    %v736 = vpack.c.b16 %v544, %v540
    %v737 = vpack.c.b16 %v545, %v541
    %v738 = vpack.c.b16 %v546, %v542
    %v739 = vpack.c.b16 %v551, %v547
    %v740 = vpack.c.b16 %v552, %v548
    %v741 = vpack.c.b16 %v553, %v549
    %v742 = vpack.c.b16 %v554, %v550
    %v743 = vpack.c.b16 %v559, %v555
    %v744 = vpack.c.b16 %v560, %v556
    %v745 = vpack.c.b16 %v561, %v557
    %v746 = vpack.c.b16 %v562, %v558
    %v747 = vpack.c.b16 %v567, %v563
    %v748 = vpack.c.b16 %v568, %v564
    %v749 = vpack.c.b16 %v569, %v565
    %v750 = vpack.c.b16 %v570, %v566
    %v751 = vpack.c.b16 %v575, %v571
    %v752 = vpack.c.b16 %v576, %v572
    %v753 = vpack.c.b16 %v577, %v573
    %v754 = vpack.c.b16 %v578, %v574
    %v755 = vpack.c.b16 %v583, %v579
    %v756 = vpack.c.b16 %v584, %v580
    %v757 = vpack.c.b16 %v585, %v581
    %v758 = vpack.c.b16 %v586, %v582
    %v759 = vpack.c.b16 %v591, %v587
    %v760 = vpack.c.b16 %v592, %v588
    %v761 = vpack.c.b16 %v593, %v589
    %v762 = vpack.c.b16 %v594, %v590
    %v763 = vpack.c.b16 %v599, %v595
    %v764 = vpack.c.b16 %v600, %v596
    %v765 = vpack.c.b16 %v601, %v597
    %v766 = vpack.c.b16 %v602, %v598
    %v767 = vpack.c.b16 %v607, %v603
    %v768 = vpack.c.b16 %v608, %v604
    %v769 = vpack.c.b16 %v609, %v605
    %v770 = vpack.c.b16 %v610, %v606
    %v771 = vpack.c.b16 %v615, %v611
    %v772 = vpack.c.b16 %v616, %v612
    %v773 = vpack.c.b16 %v617, %v613
    %v774 = vpack.c.b16 %v618, %v614
    %v775 = vpack.c.b16 %v623, %v619
    %v776 = vpack.c.b16 %v624, %v620
    %v777 = vpack.c.b16 %v625, %v621
    %v778 = vpack.c.b16 %v626, %v622
    %v779 = vpack.c.b16 %v631, %v627
    %v780 = vpack.c.b16 %v632, %v628
    %v781 = vpack.c.b16 %v633, %v629
    %v782 = vpack.c.b16 %v634, %v630
    %v783 = vpack.c.b16 %v639, %v635
    %v784 = vpack.c.b16 %v640, %v636
    %v785 = vpack.c.b16 %v641, %v637
    %v786 = vpack.c.b16 %v642, %v638
    %v787 = vpack.c.b16 %v647, %v643
    %v788 = vpack.c.b16 %v648, %v644
    %v789 = vpack.c.b16 %v649, %v645
    %v790 = vpack.c.b16 %v650, %v646
    %v791 = vpack.c.b16 %v655, %v651
    %v792 = vpack.c.b16 %v656, %v652
    %v793 = vpack.c.b16 %v657, %v653
    %v794 = vpack.c.b16 %v658, %v654
    %v795 = vpack.c.b16 %v663, %v659
    %v796 = vpack.c.b16 %v664, %v660
    %v797 = vpack.c.b16 %v665, %v661
    %v798 = vpack.c.b16 %v666, %v662
    %v799 = vpack.c.b16 %v671, %v667
    %v800 = vpack.c.b16 %v672, %v668
    %v801 = vpack.c.b16 %v673, %v669
    %v802 = vpack.c.b16 %v674, %v670
    %931 = vmatpush.bf16.msra.mxu0 %v703
    %932 = vmatpush.bf16.msra.mxu0 %v699
    %933 = vmatpush.bf16.msra.mxu0 %v695
    %934 = vmatpush.bf16.msra.mxu0 %v691
    %935 = vmatpush.bf16.msra.mxu0 %v687
    %936 = vmatpush.bf16.msra.mxu0 %v683
    %937 = vmatpush.bf16.msra.mxu0 %v679
    %938 = vmatpush.bf16.msra.mxu0 %v675
    %939 = vmatmul.bf16.gmra.mxu0 %v141
    %v940 = vpop.f32.mrf.mxu0
    %v941 = vadd.f32 %v283, %v940
    %v942 = vpop.f32.mrf.mxu0
    %v943 = vadd.f32 %v283, %v942
    %944 = vmatmul.bf16.gmra.mxu0 %v145
    %v945 = vpop.f32.mrf.mxu0
    %v946 = vadd.f32 %v283, %v945
    %v947 = vpop.f32.mrf.mxu0
    %v948 = vadd.f32 %v283, %v947
    %949 = vmatmul.bf16.gmra.mxu0 %v149
    %v950 = vpop.f32.mrf.mxu0
    %v951 = vadd.f32 %v283, %v950
    %v952 = vpop.f32.mrf.mxu0
    %v953 = vadd.f32 %v283, %v952
    %954 = vdwg.mxu0
    %955 = vmatpush.bf16.msra.mxu0 %v735
    %956 = vmatpush.bf16.msra.mxu0 %v731
    %957 = vmatpush.bf16.msra.mxu0 %v727
    %958 = vmatpush.bf16.msra.mxu0 %v723
    %959 = vmatpush.bf16.msra.mxu0 %v719
    %960 = vmatpush.bf16.msra.mxu0 %v715
    %961 = vmatpush.bf16.msra.mxu0 %v711
    %962 = vmatpush.bf16.msra.mxu0 %v707
    %963 = vmatmul.bf16.gmra.mxu0 %v142
    %v964 = vpop.f32.mrf.mxu0
    %v965 = vadd.f32 %v941, %v964
    %v966 = vpop.f32.mrf.mxu0
    %v967 = vadd.f32 %v943, %v966
    %968 = vmatmul.bf16.gmra.mxu0 %v146
    %v969 = vpop.f32.mrf.mxu0
    %v970 = vadd.f32 %v946, %v969
    %v971 = vpop.f32.mrf.mxu0
    %v972 = vadd.f32 %v948, %v971
    %973 = vmatmul.bf16.gmra.mxu0 %v150
    %v974 = vpop.f32.mrf.mxu0
    %v975 = vadd.f32 %v951, %v974
    %v976 = vpop.f32.mrf.mxu0
    %v977 = vadd.f32 %v953, %v976
    %978 = vdwg.mxu0
    %979 = vmatpush.bf16.msra.mxu0 %v767
    %980 = vmatpush.bf16.msra.mxu0 %v763
    %981 = vmatpush.bf16.msra.mxu0 %v759
    %982 = vmatpush.bf16.msra.mxu0 %v755
    %983 = vmatpush.bf16.msra.mxu0 %v751
    %984 = vmatpush.bf16.msra.mxu0 %v747
    %985 = vmatpush.bf16.msra.mxu0 %v743
    %986 = vmatpush.bf16.msra.mxu0 %v739
    %987 = vmatmul.bf16.gmra.mxu0 %v143
    %v988 = vpop.f32.mrf.mxu0
    %v989 = vadd.f32 %v965, %v988
    %v990 = vpop.f32.mrf.mxu0
    %v991 = vadd.f32 %v967, %v990
    %992 = vmatmul.bf16.gmra.mxu0 %v147
    %v993 = vpop.f32.mrf.mxu0
    %v994 = vadd.f32 %v970, %v993
    %v995 = vpop.f32.mrf.mxu0
    %v996 = vadd.f32 %v972, %v995
    %997 = vmatmul.bf16.gmra.mxu0 %v151
    %v998 = vpop.f32.mrf.mxu0
    %v999 = vadd.f32 %v975, %v998
    %v1000 = vpop.f32.mrf.mxu0
    %v1001 = vadd.f32 %v977, %v1000
    %1002 = vdwg.mxu0
    %1003 = vmatpush.bf16.msra.mxu0 %v799
    %1004 = vmatpush.bf16.msra.mxu0 %v795
    %1005 = vmatpush.bf16.msra.mxu0 %v791
    %1006 = vmatpush.bf16.msra.mxu0 %v787
    %1007 = vmatpush.bf16.msra.mxu0 %v783
    %1008 = vmatpush.bf16.msra.mxu0 %v779
    %1009 = vmatpush.bf16.msra.mxu0 %v775
    %1010 = vmatpush.bf16.msra.mxu0 %v771
    %1011 = vmatmul.bf16.gmra.mxu0 %v144
    %v1012 = vpop.f32.mrf.mxu0
    %v1013 = vadd.f32 %v989, %v1012
    %v1014 = vpop.f32.mrf.mxu0
    %v1015 = vadd.f32 %v991, %v1014
    %1016 = vmatmul.bf16.gmra.mxu0 %v148
    %v1017 = vpop.f32.mrf.mxu0
    %v1018 = vadd.f32 %v994, %v1017
    %v1019 = vpop.f32.mrf.mxu0
    %v1020 = vadd.f32 %v996, %v1019
    %1021 = vmatmul.bf16.gmra.mxu0 %v152
    %v1022 = vpop.f32.mrf.mxu0
    %v1023 = vadd.f32 %v999, %v1022
    %v1024 = vpop.f32.mrf.mxu0
    %v1025 = vadd.f32 %v1001, %v1024
    %1026 = vdwg.mxu0
    %1027 = vmatpush.bf16.msra.mxu0 %v704
    %1028 = vmatpush.bf16.msra.mxu0 %v700
    %1029 = vmatpush.bf16.msra.mxu0 %v696
    %1030 = vmatpush.bf16.msra.mxu0 %v692
    %1031 = vmatpush.bf16.msra.mxu0 %v688
    %1032 = vmatpush.bf16.msra.mxu0 %v684
    %1033 = vmatpush.bf16.msra.mxu0 %v680
    %1034 = vmatpush.bf16.msra.mxu0 %v676
    %1035 = vmatmul.bf16.gmra.mxu0 %v141
    %v1036 = vpop.f32.mrf.mxu0
    %v1037 = vadd.f32 %v284, %v1036
    %v1038 = vpop.f32.mrf.mxu0
    %v1039 = vadd.f32 %v284, %v1038
    %1040 = vmatmul.bf16.gmra.mxu0 %v145
    %v1041 = vpop.f32.mrf.mxu0
    %v1042 = vadd.f32 %v284, %v1041
    %v1043 = vpop.f32.mrf.mxu0
    %v1044 = vadd.f32 %v284, %v1043
    %1045 = vmatmul.bf16.gmra.mxu0 %v149
    %v1046 = vpop.f32.mrf.mxu0
    %v1047 = vadd.f32 %v284, %v1046
    %v1048 = vpop.f32.mrf.mxu0
    %v1049 = vadd.f32 %v284, %v1048
    %1050 = vdwg.mxu0
    %1051 = vmatpush.bf16.msra.mxu0 %v736
    %1052 = vmatpush.bf16.msra.mxu0 %v732
    %1053 = vmatpush.bf16.msra.mxu0 %v728
    %1054 = vmatpush.bf16.msra.mxu0 %v724
    %1055 = vmatpush.bf16.msra.mxu0 %v720
    %1056 = vmatpush.bf16.msra.mxu0 %v716
    %1057 = vmatpush.bf16.msra.mxu0 %v712
    %1058 = vmatpush.bf16.msra.mxu0 %v708
    %1059 = vmatmul.bf16.gmra.mxu0 %v142
    %v1060 = vpop.f32.mrf.mxu0
    %v1061 = vadd.f32 %v1037, %v1060
    %v1062 = vpop.f32.mrf.mxu0
    %v1063 = vadd.f32 %v1039, %v1062
    %1064 = vmatmul.bf16.gmra.mxu0 %v146
    %v1065 = vpop.f32.mrf.mxu0
    %v1066 = vadd.f32 %v1042, %v1065
    %v1067 = vpop.f32.mrf.mxu0
    %v1068 = vadd.f32 %v1044, %v1067
    %1069 = vmatmul.bf16.gmra.mxu0 %v150
    %v1070 = vpop.f32.mrf.mxu0
    %v1071 = vadd.f32 %v1047, %v1070
    %v1072 = vpop.f32.mrf.mxu0
    %v1073 = vadd.f32 %v1049, %v1072
    %1074 = vdwg.mxu0
    %1075 = vmatpush.bf16.msra.mxu0 %v768
    %1076 = vmatpush.bf16.msra.mxu0 %v764
    %1077 = vmatpush.bf16.msra.mxu0 %v760
    %1078 = vmatpush.bf16.msra.mxu0 %v756
    %1079 = vmatpush.bf16.msra.mxu0 %v752
    %1080 = vmatpush.bf16.msra.mxu0 %v748
    %1081 = vmatpush.bf16.msra.mxu0 %v744
    %1082 = vmatpush.bf16.msra.mxu0 %v740
    %1083 = vmatmul.bf16.gmra.mxu0 %v143
    %v1084 = vpop.f32.mrf.mxu0
    %v1085 = vadd.f32 %v1061, %v1084
    %v1086 = vpop.f32.mrf.mxu0
    %v1087 = vadd.f32 %v1063, %v1086
    %1088 = vmatmul.bf16.gmra.mxu0 %v147
    %v1089 = vpop.f32.mrf.mxu0
    %v1090 = vadd.f32 %v1066, %v1089
    %v1091 = vpop.f32.mrf.mxu0
    %v1092 = vadd.f32 %v1068, %v1091
    %1093 = vmatmul.bf16.gmra.mxu0 %v151
    %v1094 = vpop.f32.mrf.mxu0
    %v1095 = vadd.f32 %v1071, %v1094
    %v1096 = vpop.f32.mrf.mxu0
    %v1097 = vadd.f32 %v1073, %v1096
    %1098 = vdwg.mxu0
    %1099 = vmatpush.bf16.msra.mxu0 %v800
    %1100 = vmatpush.bf16.msra.mxu0 %v796
    %1101 = vmatpush.bf16.msra.mxu0 %v792
    %1102 = vmatpush.bf16.msra.mxu0 %v788
    %1103 = vmatpush.bf16.msra.mxu0 %v784
    %1104 = vmatpush.bf16.msra.mxu0 %v780
    %1105 = vmatpush.bf16.msra.mxu0 %v776
    %1106 = vmatpush.bf16.msra.mxu0 %v772
    %1107 = vmatmul.bf16.gmra.mxu0 %v144
    %v1108 = vpop.f32.mrf.mxu0
    %v1109 = vadd.f32 %v1085, %v1108
    %v1110 = vpop.f32.mrf.mxu0
    %v1111 = vadd.f32 %v1087, %v1110
    %1112 = vmatmul.bf16.gmra.mxu0 %v148
    %v1113 = vpop.f32.mrf.mxu0
    %v1114 = vadd.f32 %v1090, %v1113
    %v1115 = vpop.f32.mrf.mxu0
    %v1116 = vadd.f32 %v1092, %v1115
    %1117 = vmatmul.bf16.gmra.mxu0 %v152
    %v1118 = vpop.f32.mrf.mxu0
    %v1119 = vadd.f32 %v1095, %v1118
    %v1120 = vpop.f32.mrf.mxu0
    %v1121 = vadd.f32 %v1097, %v1120
    %1122 = vdwg.mxu0
    %1123 = vmatpush.bf16.msra.mxu0 %v705
    %1124 = vmatpush.bf16.msra.mxu0 %v701
    %1125 = vmatpush.bf16.msra.mxu0 %v697
    %1126 = vmatpush.bf16.msra.mxu0 %v693
    %1127 = vmatpush.bf16.msra.mxu0 %v689
    %1128 = vmatpush.bf16.msra.mxu0 %v685
    %1129 = vmatpush.bf16.msra.mxu0 %v681
    %1130 = vmatpush.bf16.msra.mxu0 %v677
    %1131 = vmatmul.bf16.gmra.mxu0 %v141
    %v1132 = vpop.f32.mrf.mxu0
    %v1133 = vadd.f32 %v285, %v1132
    %v1134 = vpop.f32.mrf.mxu0
    %v1135 = vadd.f32 %v285, %v1134
    %1136 = vmatmul.bf16.gmra.mxu0 %v145
    %v1137 = vpop.f32.mrf.mxu0
    %v1138 = vadd.f32 %v285, %v1137
    %v1139 = vpop.f32.mrf.mxu0
    %v1140 = vadd.f32 %v285, %v1139
    %1141 = vmatmul.bf16.gmra.mxu0 %v149
    %v1142 = vpop.f32.mrf.mxu0
    %v1143 = vadd.f32 %v285, %v1142
    %v1144 = vpop.f32.mrf.mxu0
    %v1145 = vadd.f32 %v285, %v1144
    %1146 = vdwg.mxu0
    %1147 = vmatpush.bf16.msra.mxu0 %v737
    %1148 = vmatpush.bf16.msra.mxu0 %v733
    %1149 = vmatpush.bf16.msra.mxu0 %v729
    %1150 = vmatpush.bf16.msra.mxu0 %v725
    %1151 = vmatpush.bf16.msra.mxu0 %v721
    %1152 = vmatpush.bf16.msra.mxu0 %v717
    %1153 = vmatpush.bf16.msra.mxu0 %v713
    %1154 = vmatpush.bf16.msra.mxu0 %v709
    %1155 = vmatmul.bf16.gmra.mxu0 %v142
    %v1156 = vpop.f32.mrf.mxu0
    %v1157 = vadd.f32 %v1133, %v1156
    %v1158 = vpop.f32.mrf.mxu0
    %v1159 = vadd.f32 %v1135, %v1158
    %1160 = vmatmul.bf16.gmra.mxu0 %v146
    %v1161 = vpop.f32.mrf.mxu0
    %v1162 = vadd.f32 %v1138, %v1161
    %v1163 = vpop.f32.mrf.mxu0
    %v1164 = vadd.f32 %v1140, %v1163
    %1165 = vmatmul.bf16.gmra.mxu0 %v150
    %v1166 = vpop.f32.mrf.mxu0
    %v1167 = vadd.f32 %v1143, %v1166
    %v1168 = vpop.f32.mrf.mxu0
    %v1169 = vadd.f32 %v1145, %v1168
    %1170 = vdwg.mxu0
    %1171 = vmatpush.bf16.msra.mxu0 %v769
    %1172 = vmatpush.bf16.msra.mxu0 %v765
    %1173 = vmatpush.bf16.msra.mxu0 %v761
    %1174 = vmatpush.bf16.msra.mxu0 %v757
    %1175 = vmatpush.bf16.msra.mxu0 %v753
    %1176 = vmatpush.bf16.msra.mxu0 %v749
    %1177 = vmatpush.bf16.msra.mxu0 %v745
    %1178 = vmatpush.bf16.msra.mxu0 %v741
    %1179 = vmatmul.bf16.gmra.mxu0 %v143
    %v1180 = vpop.f32.mrf.mxu0
    %v1181 = vadd.f32 %v1157, %v1180
    %v1182 = vpop.f32.mrf.mxu0
    %v1183 = vadd.f32 %v1159, %v1182
    %1184 = vmatmul.bf16.gmra.mxu0 %v147
    %v1185 = vpop.f32.mrf.mxu0
    %v1186 = vadd.f32 %v1162, %v1185
    %v1187 = vpop.f32.mrf.mxu0
    %v1188 = vadd.f32 %v1164, %v1187
    %1189 = vmatmul.bf16.gmra.mxu0 %v151
    %v1190 = vpop.f32.mrf.mxu0
    %v1191 = vadd.f32 %v1167, %v1190
    %v1192 = vpop.f32.mrf.mxu0
    %v1193 = vadd.f32 %v1169, %v1192
    %1194 = vdwg.mxu0
    %1195 = vmatpush.bf16.msra.mxu0 %v801
    %1196 = vmatpush.bf16.msra.mxu0 %v797
    %1197 = vmatpush.bf16.msra.mxu0 %v793
    %1198 = vmatpush.bf16.msra.mxu0 %v789
    %1199 = vmatpush.bf16.msra.mxu0 %v785
    %1200 = vmatpush.bf16.msra.mxu0 %v781
    %1201 = vmatpush.bf16.msra.mxu0 %v777
    %1202 = vmatpush.bf16.msra.mxu0 %v773
    %1203 = vmatmul.bf16.gmra.mxu0 %v144
    %v1204 = vpop.f32.mrf.mxu0
    %v1205 = vadd.f32 %v1181, %v1204
    %v1206 = vpop.f32.mrf.mxu0
    %v1207 = vadd.f32 %v1183, %v1206
    %1208 = vmatmul.bf16.gmra.mxu0 %v148
    %v1209 = vpop.f32.mrf.mxu0
    %v1210 = vadd.f32 %v1186, %v1209
    %v1211 = vpop.f32.mrf.mxu0
    %v1212 = vadd.f32 %v1188, %v1211
    %1213 = vmatmul.bf16.gmra.mxu0 %v152
    %v1214 = vpop.f32.mrf.mxu0
    %v1215 = vadd.f32 %v1191, %v1214
    %v1216 = vpop.f32.mrf.mxu0
    %v1217 = vadd.f32 %v1193, %v1216
    %1218 = vdwg.mxu0
    %1219 = vmatpush.bf16.msra.mxu0 %v706
    %1220 = vmatpush.bf16.msra.mxu0 %v702
    %1221 = vmatpush.bf16.msra.mxu0 %v698
    %1222 = vmatpush.bf16.msra.mxu0 %v694
    %1223 = vmatpush.bf16.msra.mxu0 %v690
    %1224 = vmatpush.bf16.msra.mxu0 %v686
    %1225 = vmatpush.bf16.msra.mxu0 %v682
    %1226 = vmatpush.bf16.msra.mxu0 %v678
    %1227 = vmatmul.bf16.gmra.mxu0 %v141
    %v1228 = vpop.f32.mrf.mxu0
    %v1229 = vadd.f32 %v286, %v1228
    %v1230 = vpop.f32.mrf.mxu0
    %v1231 = vadd.f32 %v286, %v1230
    %1232 = vmatmul.bf16.gmra.mxu0 %v145
    %v1233 = vpop.f32.mrf.mxu0
    %v1234 = vadd.f32 %v286, %v1233
    %v1235 = vpop.f32.mrf.mxu0
    %v1236 = vadd.f32 %v286, %v1235
    %1237 = vmatmul.bf16.gmra.mxu0 %v149
    %v1238 = vpop.f32.mrf.mxu0
    %v1239 = vadd.f32 %v286, %v1238
    %v1240 = vpop.f32.mrf.mxu0
    %v1241 = vadd.f32 %v286, %v1240
    %1242 = vdwg.mxu0
    %1243 = vmatpush.bf16.msra.mxu0 %v738
    %1244 = vmatpush.bf16.msra.mxu0 %v734
    %1245 = vmatpush.bf16.msra.mxu0 %v730
    %1246 = vmatpush.bf16.msra.mxu0 %v726
    %1247 = vmatpush.bf16.msra.mxu0 %v722
    %1248 = vmatpush.bf16.msra.mxu0 %v718
    %1249 = vmatpush.bf16.msra.mxu0 %v714
    %1250 = vmatpush.bf16.msra.mxu0 %v710
    %1251 = vmatmul.bf16.gmra.mxu0 %v142
    %v1252 = vpop.f32.mrf.mxu0
    %v1253 = vadd.f32 %v1229, %v1252
    %v1254 = vpop.f32.mrf.mxu0
    %v1255 = vadd.f32 %v1231, %v1254
    %1256 = vmatmul.bf16.gmra.mxu0 %v146
    %v1257 = vpop.f32.mrf.mxu0
    %v1258 = vadd.f32 %v1234, %v1257
    %v1259 = vpop.f32.mrf.mxu0
    %v1260 = vadd.f32 %v1236, %v1259
    %1261 = vmatmul.bf16.gmra.mxu0 %v150
    %v1262 = vpop.f32.mrf.mxu0
    %v1263 = vadd.f32 %v1239, %v1262
    %v1264 = vpop.f32.mrf.mxu0
    %v1265 = vadd.f32 %v1241, %v1264
    %1266 = vdwg.mxu0
    %1267 = vmatpush.bf16.msra.mxu0 %v770
    %1268 = vmatpush.bf16.msra.mxu0 %v766
    %1269 = vmatpush.bf16.msra.mxu0 %v762
    %1270 = vmatpush.bf16.msra.mxu0 %v758
    %1271 = vmatpush.bf16.msra.mxu0 %v754
    %1272 = vmatpush.bf16.msra.mxu0 %v750
    %1273 = vmatpush.bf16.msra.mxu0 %v746
    %1274 = vmatpush.bf16.msra.mxu0 %v742
    %1275 = vmatmul.bf16.gmra.mxu0 %v143
    %v1276 = vpop.f32.mrf.mxu0
    %v1277 = vadd.f32 %v1253, %v1276
    %v1278 = vpop.f32.mrf.mxu0
    %v1279 = vadd.f32 %v1255, %v1278
    %1280 = vmatmul.bf16.gmra.mxu0 %v147
    %v1281 = vpop.f32.mrf.mxu0
    %v1282 = vadd.f32 %v1258, %v1281
    %v1283 = vpop.f32.mrf.mxu0
    %v1284 = vadd.f32 %v1260, %v1283
    %1285 = vmatmul.bf16.gmra.mxu0 %v151
    %v1286 = vpop.f32.mrf.mxu0
    %v1287 = vadd.f32 %v1263, %v1286
    %v1288 = vpop.f32.mrf.mxu0
    %v1289 = vadd.f32 %v1265, %v1288
    %1290 = vdwg.mxu0
    %1291 = vmatpush.bf16.msra.mxu0 %v802
    %1292 = vmatpush.bf16.msra.mxu0 %v798
    %1293 = vmatpush.bf16.msra.mxu0 %v794
    %1294 = vmatpush.bf16.msra.mxu0 %v790
    %1295 = vmatpush.bf16.msra.mxu0 %v786
    %1296 = vmatpush.bf16.msra.mxu0 %v782
    %1297 = vmatpush.bf16.msra.mxu0 %v778
    %1298 = vmatpush.bf16.msra.mxu0 %v774
    %1299 = vmatmul.bf16.gmra.mxu0 %v144
    %v1300 = vpop.f32.mrf.mxu0
    %v1301 = vadd.f32 %v1277, %v1300
    %v1302 = vpop.f32.mrf.mxu0
    %v1303 = vadd.f32 %v1279, %v1302
    %1304 = vmatmul.bf16.gmra.mxu0 %v148
    %v1305 = vpop.f32.mrf.mxu0
    %v1306 = vadd.f32 %v1282, %v1305
    %v1307 = vpop.f32.mrf.mxu0
    %v1308 = vadd.f32 %v1284, %v1307
    %1309 = vmatmul.bf16.gmra.mxu0 %v152
    %v1310 = vpop.f32.mrf.mxu0
    %v1311 = vadd.f32 %v1287, %v1310
    %v1312 = vpop.f32.mrf.mxu0
    %v1313 = vadd.f32 %v1289, %v1312
    %1314 = vdwg.mxu0
    %vm1315 = vcmp.gt.f32.partialorder %v1013, 0.0
    %vm1316 = vcmp.gt.f32.partialorder %v1109, 0.0
    %vm1317 = vcmp.gt.f32.partialorder %v1205, 0.0
    %vm1318 = vcmp.gt.f32.partialorder %v1301, 0.0
    %vm1319 = vcmp.gt.f32.partialorder %v1015, 0.0
    %vm1320 = vcmp.gt.f32.partialorder %v1111, 0.0
    %vm1321 = vcmp.gt.f32.partialorder %v1207, 0.0
    %vm1322 = vcmp.gt.f32.partialorder %v1303, 0.0
    %vm1323 = vcmp.gt.f32.partialorder %v1018, 0.0
    %vm1324 = vcmp.gt.f32.partialorder %v1114, 0.0
    %vm1325 = vcmp.gt.f32.partialorder %v1210, 0.0
    %vm1326 = vcmp.gt.f32.partialorder %v1306, 0.0
    %vm1327 = vcmp.gt.f32.partialorder %v1020, 0.0
    %vm1328 = vcmp.gt.f32.partialorder %v1116, 0.0
    %vm1329 = vcmp.gt.f32.partialorder %v1212, 0.0
    %vm1330 = vcmp.gt.f32.partialorder %v1308, 0.0
    %vm1331 = vcmp.gt.f32.partialorder %v1023, 0.0
    %vm1332 = vcmp.gt.f32.partialorder %v1119, 0.0
    %vm1333 = vcmp.gt.f32.partialorder %v1215, 0.0
    %vm1334 = vcmp.gt.f32.partialorder %v1311, 0.0
    %vm1335 = vcmp.gt.f32.partialorder %v1025, 0.0
    %vm1336 = vcmp.gt.f32.partialorder %v1121, 0.0
    %vm1337 = vcmp.gt.f32.partialorder %v1217, 0.0
    %vm1338 = vcmp.gt.f32.partialorder %v1313, 0.0
    %v1339 = vmul.f32 %v1013, 0.2
    %v1340 = vmul.f32 %v1109, 0.2
    %v1341 = vmul.f32 %v1205, 0.2
    %v1342 = vmul.f32 %v1301, 0.2
    %v1343 = vmul.f32 %v1015, 0.2
    %v1344 = vmul.f32 %v1111, 0.2
    %v1345 = vmul.f32 %v1207, 0.2
    %v1346 = vmul.f32 %v1303, 0.2
    %v1347 = vmul.f32 %v1018, 0.2
    %v1348 = vmul.f32 %v1114, 0.2
    %v1349 = vmul.f32 %v1210, 0.2
    %v1350 = vmul.f32 %v1306, 0.2
    %v1351 = vmul.f32 %v1020, 0.2
    %v1352 = vmul.f32 %v1116, 0.2
    %v1353 = vmul.f32 %v1212, 0.2
    %v1354 = vmul.f32 %v1308, 0.2
    %v1355 = vmul.f32 %v1023, 0.2
    %v1356 = vmul.f32 %v1119, 0.2
    %v1357 = vmul.f32 %v1215, 0.2
    %v1358 = vmul.f32 %v1311, 0.2
    %v1359 = vmul.f32 %v1025, 0.2
    %v1360 = vmul.f32 %v1121, 0.2
    %v1361 = vmul.f32 %v1217, 0.2
    %v1362 = vmul.f32 %v1313, 0.2
    %v1363 = vsel %vm1315, %v1013, %v1339
    %v1364 = vsel %vm1316, %v1109, %v1340
    %v1365 = vsel %vm1317, %v1205, %v1341
    %v1366 = vsel %vm1318, %v1301, %v1342
    %v1367 = vsel %vm1319, %v1015, %v1343
    %v1368 = vsel %vm1320, %v1111, %v1344
    %v1369 = vsel %vm1321, %v1207, %v1345
    %v1370 = vsel %vm1322, %v1303, %v1346
    %v1371 = vsel %vm1323, %v1018, %v1347
    %v1372 = vsel %vm1324, %v1114, %v1348
    %v1373 = vsel %vm1325, %v1210, %v1349
    %v1374 = vsel %vm1326, %v1306, %v1350
    %v1375 = vsel %vm1327, %v1020, %v1351
    %v1376 = vsel %vm1328, %v1116, %v1352
    %v1377 = vsel %vm1329, %v1212, %v1353
    %v1378 = vsel %vm1330, %v1308, %v1354
    %v1379 = vsel %vm1331, %v1023, %v1355
    %v1380 = vsel %vm1332, %v1119, %v1356
    %v1381 = vsel %vm1333, %v1215, %v1357
    %v1382 = vsel %vm1334, %v1311, %v1358
    %v1383 = vsel %vm1335, %v1025, %v1359
    %v1384 = vsel %vm1336, %v1121, %v1360
    %v1385 = vsel %vm1337, %v1217, %v1361
    %v1386 = vsel %vm1338, %v1313, %v1362
    %v1387 = vpack.c.bf16 %v1367, %v1363
    %v1388 = vpack.c.bf16 %v1368, %v1364
    %v1389 = vpack.c.bf16 %v1369, %v1365
    %v1390 = vpack.c.bf16 %v1370, %v1366
    %v1391 = vpack.c.bf16 %v1375, %v1371
    %v1392 = vpack.c.bf16 %v1376, %v1372
    %v1393 = vpack.c.bf16 %v1377, %v1373
    %v1394 = vpack.c.bf16 %v1378, %v1374
    %v1395 = vpack.c.bf16 %v1383, %v1379
    %v1396 = vpack.c.bf16 %v1384, %v1380
    %v1397 = vpack.c.bf16 %v1385, %v1381
    %v1398 = vpack.c.bf16 %v1386, %v1382
    %v1399 = vld [vmem:[#allocation8] sm:$0xff]
    %v1400 = vld [vmem:[#allocation8 + $0x8] sm:$0xff]
    %v1401 = vld [vmem:[#allocation8 + $0x10] sm:$0xff]
    %v1402 = vld [vmem:[#allocation8 + $0x18] sm:$0xff]
    %v1403 = vld [vmem:[#allocation8 + $0x20] sm:$0xff]
    %v1404 = vld [vmem:[#allocation8 + $0x28] sm:$0xff]
    %v1405 = vld [vmem:[#allocation8 + $0x30] sm:$0xff]
    %v1406 = vld [vmem:[#allocation8 + $0x38] sm:$0xff]
    %v1407 = vld [vmem:[#allocation8 + $0x40] sm:$0xff]
    %v1408 = vld [vmem:[#allocation8 + $0x48] sm:$0xff]
    %v1409 = vld [vmem:[#allocation8 + $0x50] sm:$0xff]
    %v1410 = vld [vmem:[#allocation8 + $0x58] sm:$0xff]
    %v1411 = vld [vmem:[#allocation8 + $0x60] sm:$0xff]
    %v1412 = vld [vmem:[#allocation8 + $0x68] sm:$0xff]
    %v1413 = vld [vmem:[#allocation8 + $0x70] sm:$0xff]
    %v1414 = vld [vmem:[#allocation8 + $0x78] sm:$0xff]
    %v1415 = vld [vmem:[#allocation8 + $0x80] sm:$0xff]
    %v1416 = vld [vmem:[#allocation8 + $0x88] sm:$0xff]
    %v1417 = vld [vmem:[#allocation8 + $0x90] sm:$0xff]
    %v1418 = vld [vmem:[#allocation8 + $0x98] sm:$0xff]
    %v1419 = vld [vmem:[#allocation8 + $0xa0] sm:$0xff]
    %v1420 = vld [vmem:[#allocation8 + $0xa8] sm:$0xff]
    %v1421 = vld [vmem:[#allocation8 + $0xb0] sm:$0xff]
    %v1422 = vld [vmem:[#allocation8 + $0xb8] sm:$0xff]
    %v1423 = vld [vmem:[#allocation8 + $0xc0] sm:$0xff]
    %v1424 = vld [vmem:[#allocation8 + $0xc8] sm:$0xff]
    %v1425 = vld [vmem:[#allocation8 + $0xd0] sm:$0xff]
    %v1426 = vld [vmem:[#allocation8 + $0xd8] sm:$0xff]
    %v1427 = vld [vmem:[#allocation8 + $0xe0] sm:$0xff]
    %v1428 = vld [vmem:[#allocation8 + $0xe8] sm:$0xff]
    %v1429 = vld [vmem:[#allocation8 + $0xf0] sm:$0xff]
    %v1430 = vld [vmem:[#allocation8 + $0xf8] sm:$0xff]
    %v1431 = vld [vmem:[#allocation8 + $0x100] sm:$0xff]
    %v1432 = vld [vmem:[#allocation8 + $0x108] sm:$0xff]
    %v1433 = vld [vmem:[#allocation8 + $0x110] sm:$0xff]
    %v1434 = vld [vmem:[#allocation8 + $0x118] sm:$0xff]
    %v1435 = vld [vmem:[#allocation8 + $0x120] sm:$0xff]
    %v1436 = vld [vmem:[#allocation8 + $0x128] sm:$0xff]
    %v1437 = vld [vmem:[#allocation8 + $0x130] sm:$0xff]
    %v1438 = vld [vmem:[#allocation8 + $0x138] sm:$0xff]
    %v1439 = vld [vmem:[#allocation8 + $0x140] sm:$0xff]
    %v1440 = vld [vmem:[#allocation8 + $0x148] sm:$0xff]
    %v1441 = vld [vmem:[#allocation8 + $0x150] sm:$0xff]
    %v1442 = vld [vmem:[#allocation8 + $0x158] sm:$0xff]
    %v1443 = vld [vmem:[#allocation8 + $0x160] sm:$0xff]
    %v1444 = vld [vmem:[#allocation8 + $0x168] sm:$0xff]
    %v1445 = vld [vmem:[#allocation8 + $0x170] sm:$0xff]
    %v1446 = vld [vmem:[#allocation8 + $0x178] sm:$0xff]
    %v1447 = vld [vmem:[#allocation8 + $0x180] sm:$0xff]
    %v1448 = vld [vmem:[#allocation8 + $0x188] sm:$0xff]
    %v1449 = vld [vmem:[#allocation8 + $0x190] sm:$0xff]
    %v1450 = vld [vmem:[#allocation8 + $0x198] sm:$0xff]
    %v1451 = vld [vmem:[#allocation8 + $0x1a0] sm:$0xff]
    %v1452 = vld [vmem:[#allocation8 + $0x1a8] sm:$0xff]
    %v1453 = vld [vmem:[#allocation8 + $0x1b0] sm:$0xff]
    %v1454 = vld [vmem:[#allocation8 + $0x1b8] sm:$0xff]
    %v1455 = vld [vmem:[#allocation8 + $0x1c0] sm:$0xff]
    %v1456 = vld [vmem:[#allocation8 + $0x1c8] sm:$0xff]
    %v1457 = vld [vmem:[#allocation8 + $0x1d0] sm:$0xff]
    %v1458 = vld [vmem:[#allocation8 + $0x1d8] sm:$0xff]
    %v1459 = vld [vmem:[#allocation8 + $0x1e0] sm:$0xff]
    %v1460 = vld [vmem:[#allocation8 + $0x1e8] sm:$0xff]
    %v1461 = vld [vmem:[#allocation8 + $0x1f0] sm:$0xff]
    %v1462 = vld [vmem:[#allocation8 + $0x1f8] sm:$0xff]
    %v1463 = vld [vmem:[#allocation8 + $0x200] sm:$0xff]
    %v1464 = vld [vmem:[#allocation8 + $0x208] sm:$0xff]
    %v1465 = vld [vmem:[#allocation8 + $0x210] sm:$0xff]
    %v1466 = vld [vmem:[#allocation8 + $0x218] sm:$0xff]
    %v1467 = vld [vmem:[#allocation8 + $0x220] sm:$0xff]
    %v1468 = vld [vmem:[#allocation8 + $0x228] sm:$0xff]
    %v1469 = vld [vmem:[#allocation8 + $0x230] sm:$0xff]
    %v1470 = vld [vmem:[#allocation8 + $0x238] sm:$0xff]
    %v1471 = vld [vmem:[#allocation8 + $0x240] sm:$0xff]
    %v1472 = vld [vmem:[#allocation8 + $0x248] sm:$0xff]
    %v1473 = vld [vmem:[#allocation8 + $0x250] sm:$0xff]
    %v1474 = vld [vmem:[#allocation8 + $0x258] sm:$0xff]
    %v1475 = vld [vmem:[#allocation8 + $0x260] sm:$0xff]
    %v1476 = vld [vmem:[#allocation8 + $0x268] sm:$0xff]
    %v1477 = vld [vmem:[#allocation8 + $0x270] sm:$0xff]
    %v1478 = vld [vmem:[#allocation8 + $0x278] sm:$0xff]
    %v1479 = vld [vmem:[#allocation8 + $0x280] sm:$0xff]
    %v1480 = vld [vmem:[#allocation8 + $0x288] sm:$0xff]
    %v1481 = vld [vmem:[#allocation8 + $0x290] sm:$0xff]
    %v1482 = vld [vmem:[#allocation8 + $0x298] sm:$0xff]
    %v1483 = vld [vmem:[#allocation8 + $0x2a0] sm:$0xff]
    %v1484 = vld [vmem:[#allocation8 + $0x2a8] sm:$0xff]
    %v1485 = vld [vmem:[#allocation8 + $0x2b0] sm:$0xff]
    %v1486 = vld [vmem:[#allocation8 + $0x2b8] sm:$0xff]
    %v1487 = vld [vmem:[#allocation8 + $0x2c0] sm:$0xff]
    %v1488 = vld [vmem:[#allocation8 + $0x2c8] sm:$0xff]
    %v1489 = vld [vmem:[#allocation8 + $0x2d0] sm:$0xff]
    %v1490 = vld [vmem:[#allocation8 + $0x2d8] sm:$0xff]
    %v1491 = vld [vmem:[#allocation8 + $0x2e0] sm:$0xff]
    %v1492 = vld [vmem:[#allocation8 + $0x2e8] sm:$0xff]
    %v1493 = vld [vmem:[#allocation8 + $0x2f0] sm:$0xff]
    %v1494 = vld [vmem:[#allocation8 + $0x2f8] sm:$0xff]
    %v1495 = vld [vmem:[#allocation8 + $0x300] sm:$0xff]
    %v1496 = vld [vmem:[#allocation8 + $0x308] sm:$0xff]
    %v1497 = vld [vmem:[#allocation8 + $0x310] sm:$0xff]
    %v1498 = vld [vmem:[#allocation8 + $0x318] sm:$0xff]
    %v1499 = vld [vmem:[#allocation8 + $0x320] sm:$0xff]
    %v1500 = vld [vmem:[#allocation8 + $0x328] sm:$0xff]
    %v1501 = vld [vmem:[#allocation8 + $0x330] sm:$0xff]
    %v1502 = vld [vmem:[#allocation8 + $0x338] sm:$0xff]
    %v1503 = vld [vmem:[#allocation8 + $0x340] sm:$0xff]
    %v1504 = vld [vmem:[#allocation8 + $0x348] sm:$0xff]
    %v1505 = vld [vmem:[#allocation8 + $0x350] sm:$0xff]
    %v1506 = vld [vmem:[#allocation8 + $0x358] sm:$0xff]
    %v1507 = vld [vmem:[#allocation8 + $0x360] sm:$0xff]
    %v1508 = vld [vmem:[#allocation8 + $0x368] sm:$0xff]
    %v1509 = vld [vmem:[#allocation8 + $0x370] sm:$0xff]
    %v1510 = vld [vmem:[#allocation8 + $0x378] sm:$0xff]
    %v1511 = vld [vmem:[#allocation8 + $0x380] sm:$0xff]
    %v1512 = vld [vmem:[#allocation8 + $0x388] sm:$0xff]
    %v1513 = vld [vmem:[#allocation8 + $0x390] sm:$0xff]
    %v1514 = vld [vmem:[#allocation8 + $0x398] sm:$0xff]
    %v1515 = vld [vmem:[#allocation8 + $0x3a0] sm:$0xff]
    %v1516 = vld [vmem:[#allocation8 + $0x3a8] sm:$0xff]
    %v1517 = vld [vmem:[#allocation8 + $0x3b0] sm:$0xff]
    %v1518 = vld [vmem:[#allocation8 + $0x3b8] sm:$0xff]
    %v1519 = vld [vmem:[#allocation8 + $0x3c0] sm:$0xff]
    %v1520 = vld [vmem:[#allocation8 + $0x3c8] sm:$0xff]
    %v1521 = vld [vmem:[#allocation8 + $0x3d0] sm:$0xff]
    %v1522 = vld [vmem:[#allocation8 + $0x3d8] sm:$0xff]
    %v1523 = vld [vmem:[#allocation8 + $0x3e0] sm:$0xff]
    %v1524 = vld [vmem:[#allocation8 + $0x3e8] sm:$0xff]
    %v1525 = vld [vmem:[#allocation8 + $0x3f0] sm:$0xff]
    %v1526 = vld [vmem:[#allocation8 + $0x3f8] sm:$0xff]
    %v1527 = vld [vmem:[#allocation10] sm:$0xf]
    %v1529 = vperm.slane %v1527, 0
    %v1530 = vperm.slane %v1527, 1
    %v1531 = vperm.slane %v1527, 2
    %v1532 = vperm.slane %v1527, 3
    %v1665 = vunpack.c.l.b16 %v1399
    %v1666 = vunpack.c.h.b16 %v1399
    %v1667 = vunpack.c.l.b16 %v1400
    %v1668 = vunpack.c.h.b16 %v1400
    %v1669 = vunpack.c.l.b16 %v1401
    %v1670 = vunpack.c.h.b16 %v1401
    %v1671 = vunpack.c.l.b16 %v1402
    %v1672 = vunpack.c.h.b16 %v1402
    %v1673 = vunpack.c.l.b16 %v1403
    %v1674 = vunpack.c.h.b16 %v1403
    %v1675 = vunpack.c.l.b16 %v1404
    %v1676 = vunpack.c.h.b16 %v1404
    %v1677 = vunpack.c.l.b16 %v1405
    %v1678 = vunpack.c.h.b16 %v1405
    %v1679 = vunpack.c.l.b16 %v1406
    %v1680 = vunpack.c.h.b16 %v1406
    %v1681 = vunpack.c.l.b16 %v1407
    %v1682 = vunpack.c.h.b16 %v1407
    %v1683 = vunpack.c.l.b16 %v1408
    %v1684 = vunpack.c.h.b16 %v1408
    %v1685 = vunpack.c.l.b16 %v1409
    %v1686 = vunpack.c.h.b16 %v1409
    %v1687 = vunpack.c.l.b16 %v1410
    %v1688 = vunpack.c.h.b16 %v1410
    %v1689 = vunpack.c.l.b16 %v1411
    %v1690 = vunpack.c.h.b16 %v1411
    %v1691 = vunpack.c.l.b16 %v1412
    %v1692 = vunpack.c.h.b16 %v1412
    %v1693 = vunpack.c.l.b16 %v1413
    %v1694 = vunpack.c.h.b16 %v1413
    %v1695 = vunpack.c.l.b16 %v1414
    %v1696 = vunpack.c.h.b16 %v1414
    %v1697 = vunpack.c.l.b16 %v1415
    %v1698 = vunpack.c.h.b16 %v1415
    %v1699 = vunpack.c.l.b16 %v1416
    %v1700 = vunpack.c.h.b16 %v1416
    %v1701 = vunpack.c.l.b16 %v1417
    %v1702 = vunpack.c.h.b16 %v1417
    %v1703 = vunpack.c.l.b16 %v1418
    %v1704 = vunpack.c.h.b16 %v1418
    %v1705 = vunpack.c.l.b16 %v1419
    %v1706 = vunpack.c.h.b16 %v1419
    %v1707 = vunpack.c.l.b16 %v1420
    %v1708 = vunpack.c.h.b16 %v1420
    %v1709 = vunpack.c.l.b16 %v1421
    %v1710 = vunpack.c.h.b16 %v1421
    %v1711 = vunpack.c.l.b16 %v1422
    %v1712 = vunpack.c.h.b16 %v1422
    %v1713 = vunpack.c.l.b16 %v1423
    %v1714 = vunpack.c.h.b16 %v1423
    %v1715 = vunpack.c.l.b16 %v1424
    %v1716 = vunpack.c.h.b16 %v1424
    %v1717 = vunpack.c.l.b16 %v1425
    %v1718 = vunpack.c.h.b16 %v1425
    %v1719 = vunpack.c.l.b16 %v1426
    %v1720 = vunpack.c.h.b16 %v1426
    %v1721 = vunpack.c.l.b16 %v1427
    %v1722 = vunpack.c.h.b16 %v1427
    %v1723 = vunpack.c.l.b16 %v1428
    %v1724 = vunpack.c.h.b16 %v1428
    %v1725 = vunpack.c.l.b16 %v1429
    %v1726 = vunpack.c.h.b16 %v1429
    %v1727 = vunpack.c.l.b16 %v1430
    %v1728 = vunpack.c.h.b16 %v1430
    %v1729 = vunpack.c.l.b16 %v1431
    %v1730 = vunpack.c.h.b16 %v1431
    %v1731 = vunpack.c.l.b16 %v1432
    %v1732 = vunpack.c.h.b16 %v1432
    %v1733 = vunpack.c.l.b16 %v1433
    %v1734 = vunpack.c.h.b16 %v1433
    %v1735 = vunpack.c.l.b16 %v1434
    %v1736 = vunpack.c.h.b16 %v1434
    %v1737 = vunpack.c.l.b16 %v1435
    %v1738 = vunpack.c.h.b16 %v1435
    %v1739 = vunpack.c.l.b16 %v1436
    %v1740 = vunpack.c.h.b16 %v1436
    %v1741 = vunpack.c.l.b16 %v1437
    %v1742 = vunpack.c.h.b16 %v1437
    %v1743 = vunpack.c.l.b16 %v1438
    %v1744 = vunpack.c.h.b16 %v1438
    %v1745 = vunpack.c.l.b16 %v1439
    %v1746 = vunpack.c.h.b16 %v1439
    %v1747 = vunpack.c.l.b16 %v1440
    %v1748 = vunpack.c.h.b16 %v1440
    %v1749 = vunpack.c.l.b16 %v1441
    %v1750 = vunpack.c.h.b16 %v1441
    %v1751 = vunpack.c.l.b16 %v1442
    %v1752 = vunpack.c.h.b16 %v1442
    %v1753 = vunpack.c.l.b16 %v1443
    %v1754 = vunpack.c.h.b16 %v1443
    %v1755 = vunpack.c.l.b16 %v1444
    %v1756 = vunpack.c.h.b16 %v1444
    %v1757 = vunpack.c.l.b16 %v1445
    %v1758 = vunpack.c.h.b16 %v1445
    %v1759 = vunpack.c.l.b16 %v1446
    %v1760 = vunpack.c.h.b16 %v1446
    %v1761 = vunpack.c.l.b16 %v1447
    %v1762 = vunpack.c.h.b16 %v1447
    %v1763 = vunpack.c.l.b16 %v1448
    %v1764 = vunpack.c.h.b16 %v1448
    %v1765 = vunpack.c.l.b16 %v1449
    %v1766 = vunpack.c.h.b16 %v1449
    %v1767 = vunpack.c.l.b16 %v1450
    %v1768 = vunpack.c.h.b16 %v1450
    %v1769 = vunpack.c.l.b16 %v1451
    %v1770 = vunpack.c.h.b16 %v1451
    %v1771 = vunpack.c.l.b16 %v1452
    %v1772 = vunpack.c.h.b16 %v1452
    %v1773 = vunpack.c.l.b16 %v1453
    %v1774 = vunpack.c.h.b16 %v1453
    %v1775 = vunpack.c.l.b16 %v1454
    %v1776 = vunpack.c.h.b16 %v1454
    %v1777 = vunpack.c.l.b16 %v1455
    %v1778 = vunpack.c.h.b16 %v1455
    %v1779 = vunpack.c.l.b16 %v1456
    %v1780 = vunpack.c.h.b16 %v1456
    %v1781 = vunpack.c.l.b16 %v1457
    %v1782 = vunpack.c.h.b16 %v1457
    %v1783 = vunpack.c.l.b16 %v1458
    %v1784 = vunpack.c.h.b16 %v1458
    %v1785 = vunpack.c.l.b16 %v1459
    %v1786 = vunpack.c.h.b16 %v1459
    %v1787 = vunpack.c.l.b16 %v1460
    %v1788 = vunpack.c.h.b16 %v1460
    %v1789 = vunpack.c.l.b16 %v1461
    %v1790 = vunpack.c.h.b16 %v1461
    %v1791 = vunpack.c.l.b16 %v1462
    %v1792 = vunpack.c.h.b16 %v1462
    %v1793 = vunpack.c.l.b16 %v1463
    %v1794 = vunpack.c.h.b16 %v1463
    %v1795 = vunpack.c.l.b16 %v1464
    %v1796 = vunpack.c.h.b16 %v1464
    %v1797 = vunpack.c.l.b16 %v1465
    %v1798 = vunpack.c.h.b16 %v1465
    %v1799 = vunpack.c.l.b16 %v1466
    %v1800 = vunpack.c.h.b16 %v1466
    %v1801 = vunpack.c.l.b16 %v1467
    %v1802 = vunpack.c.h.b16 %v1467
    %v1803 = vunpack.c.l.b16 %v1468
    %v1804 = vunpack.c.h.b16 %v1468
    %v1805 = vunpack.c.l.b16 %v1469
    %v1806 = vunpack.c.h.b16 %v1469
    %v1807 = vunpack.c.l.b16 %v1470
    %v1808 = vunpack.c.h.b16 %v1470
    %v1809 = vunpack.c.l.b16 %v1471
    %v1810 = vunpack.c.h.b16 %v1471
    %v1811 = vunpack.c.l.b16 %v1472
    %v1812 = vunpack.c.h.b16 %v1472
    %v1813 = vunpack.c.l.b16 %v1473
    %v1814 = vunpack.c.h.b16 %v1473
    %v1815 = vunpack.c.l.b16 %v1474
    %v1816 = vunpack.c.h.b16 %v1474
    %v1817 = vunpack.c.l.b16 %v1475
    %v1818 = vunpack.c.h.b16 %v1475
    %v1819 = vunpack.c.l.b16 %v1476
    %v1820 = vunpack.c.h.b16 %v1476
    %v1821 = vunpack.c.l.b16 %v1477
    %v1822 = vunpack.c.h.b16 %v1477
    %v1823 = vunpack.c.l.b16 %v1478
    %v1824 = vunpack.c.h.b16 %v1478
    %v1825 = vunpack.c.l.b16 %v1479
    %v1826 = vunpack.c.h.b16 %v1479
    %v1827 = vunpack.c.l.b16 %v1480
    %v1828 = vunpack.c.h.b16 %v1480
    %v1829 = vunpack.c.l.b16 %v1481
    %v1830 = vunpack.c.h.b16 %v1481
    %v1831 = vunpack.c.l.b16 %v1482
    %v1832 = vunpack.c.h.b16 %v1482
    %v1833 = vunpack.c.l.b16 %v1483
    %v1834 = vunpack.c.h.b16 %v1483
    %v1835 = vunpack.c.l.b16 %v1484
    %v1836 = vunpack.c.h.b16 %v1484
    %v1837 = vunpack.c.l.b16 %v1485
    %v1838 = vunpack.c.h.b16 %v1485
    %v1839 = vunpack.c.l.b16 %v1486
    %v1840 = vunpack.c.h.b16 %v1486
    %v1841 = vunpack.c.l.b16 %v1487
    %v1842 = vunpack.c.h.b16 %v1487
    %v1843 = vunpack.c.l.b16 %v1488
    %v1844 = vunpack.c.h.b16 %v1488
    %v1845 = vunpack.c.l.b16 %v1489
    %v1846 = vunpack.c.h.b16 %v1489
    %v1847 = vunpack.c.l.b16 %v1490
    %v1848 = vunpack.c.h.b16 %v1490
    %v1849 = vunpack.c.l.b16 %v1491
    %v1850 = vunpack.c.h.b16 %v1491
    %v1851 = vunpack.c.l.b16 %v1492
    %v1852 = vunpack.c.h.b16 %v1492
    %v1853 = vunpack.c.l.b16 %v1493
    %v1854 = vunpack.c.h.b16 %v1493
    %v1855 = vunpack.c.l.b16 %v1494
    %v1856 = vunpack.c.h.b16 %v1494
    %v1857 = vunpack.c.l.b16 %v1495
    %v1858 = vunpack.c.h.b16 %v1495
    %v1859 = vunpack.c.l.b16 %v1496
    %v1860 = vunpack.c.h.b16 %v1496
    %v1861 = vunpack.c.l.b16 %v1497
    %v1862 = vunpack.c.h.b16 %v1497
    %v1863 = vunpack.c.l.b16 %v1498
    %v1864 = vunpack.c.h.b16 %v1498
    %v1865 = vunpack.c.l.b16 %v1499
    %v1866 = vunpack.c.h.b16 %v1499
    %v1867 = vunpack.c.l.b16 %v1500
    %v1868 = vunpack.c.h.b16 %v1500
    %v1869 = vunpack.c.l.b16 %v1501
    %v1870 = vunpack.c.h.b16 %v1501
    %v1871 = vunpack.c.l.b16 %v1502
    %v1872 = vunpack.c.h.b16 %v1502
    %v1873 = vunpack.c.l.b16 %v1503
    %v1874 = vunpack.c.h.b16 %v1503
    %v1875 = vunpack.c.l.b16 %v1504
    %v1876 = vunpack.c.h.b16 %v1504
    %v1877 = vunpack.c.l.b16 %v1505
    %v1878 = vunpack.c.h.b16 %v1505
    %v1879 = vunpack.c.l.b16 %v1506
    %v1880 = vunpack.c.h.b16 %v1506
    %v1881 = vunpack.c.l.b16 %v1507
    %v1882 = vunpack.c.h.b16 %v1507
    %v1883 = vunpack.c.l.b16 %v1508
    %v1884 = vunpack.c.h.b16 %v1508
    %v1885 = vunpack.c.l.b16 %v1509
    %v1886 = vunpack.c.h.b16 %v1509
    %v1887 = vunpack.c.l.b16 %v1510
    %v1888 = vunpack.c.h.b16 %v1510
    %v1889 = vunpack.c.l.b16 %v1511
    %v1890 = vunpack.c.h.b16 %v1511
    %v1891 = vunpack.c.l.b16 %v1512
    %v1892 = vunpack.c.h.b16 %v1512
    %v1893 = vunpack.c.l.b16 %v1513
    %v1894 = vunpack.c.h.b16 %v1513
    %v1895 = vunpack.c.l.b16 %v1514
    %v1896 = vunpack.c.h.b16 %v1514
    %v1897 = vunpack.c.l.b16 %v1515
    %v1898 = vunpack.c.h.b16 %v1515
    %v1899 = vunpack.c.l.b16 %v1516
    %v1900 = vunpack.c.h.b16 %v1516
    %v1901 = vunpack.c.l.b16 %v1517
    %v1902 = vunpack.c.h.b16 %v1517
    %v1903 = vunpack.c.l.b16 %v1518
    %v1904 = vunpack.c.h.b16 %v1518
    %v1905 = vunpack.c.l.b16 %v1519
    %v1906 = vunpack.c.h.b16 %v1519
    %v1907 = vunpack.c.l.b16 %v1520
    %v1908 = vunpack.c.h.b16 %v1520
    %v1909 = vunpack.c.l.b16 %v1521
    %v1910 = vunpack.c.h.b16 %v1521
    %v1911 = vunpack.c.l.b16 %v1522
    %v1912 = vunpack.c.h.b16 %v1522
    %v1913 = vunpack.c.l.b16 %v1523
    %v1914 = vunpack.c.h.b16 %v1523
    %v1915 = vunpack.c.l.b16 %v1524
    %v1916 = vunpack.c.h.b16 %v1524
    %v1917 = vunpack.c.l.b16 %v1525
    %v1918 = vunpack.c.h.b16 %v1525
    %v1919 = vunpack.c.l.b16 %v1526
    %v1920 = vunpack.c.h.b16 %v1526
    %v1921 = vpack.c.b16 %v1669, %v1665
    %v1922 = vpack.c.b16 %v1670, %v1666
    %v1923 = vpack.c.b16 %v1671, %v1667
    %v1924 = vpack.c.b16 %v1672, %v1668
    %v1925 = vpack.c.b16 %v1677, %v1673
    %v1926 = vpack.c.b16 %v1678, %v1674
    %v1927 = vpack.c.b16 %v1679, %v1675
    %v1928 = vpack.c.b16 %v1680, %v1676
    %v1929 = vpack.c.b16 %v1685, %v1681
    %v1930 = vpack.c.b16 %v1686, %v1682
    %v1931 = vpack.c.b16 %v1687, %v1683
    %v1932 = vpack.c.b16 %v1688, %v1684
    %v1933 = vpack.c.b16 %v1693, %v1689
    %v1934 = vpack.c.b16 %v1694, %v1690
    %v1935 = vpack.c.b16 %v1695, %v1691
    %v1936 = vpack.c.b16 %v1696, %v1692
    %v1937 = vpack.c.b16 %v1701, %v1697
    %v1938 = vpack.c.b16 %v1702, %v1698
    %v1939 = vpack.c.b16 %v1703, %v1699
    %v1940 = vpack.c.b16 %v1704, %v1700
    %v1941 = vpack.c.b16 %v1709, %v1705
    %v1942 = vpack.c.b16 %v1710, %v1706
    %v1943 = vpack.c.b16 %v1711, %v1707
    %v1944 = vpack.c.b16 %v1712, %v1708
    %v1945 = vpack.c.b16 %v1717, %v1713
    %v1946 = vpack.c.b16 %v1718, %v1714
    %v1947 = vpack.c.b16 %v1719, %v1715
    %v1948 = vpack.c.b16 %v1720, %v1716
    %v1949 = vpack.c.b16 %v1725, %v1721
    %v1950 = vpack.c.b16 %v1726, %v1722
    %v1951 = vpack.c.b16 %v1727, %v1723
    %v1952 = vpack.c.b16 %v1728, %v1724
    %v1953 = vpack.c.b16 %v1733, %v1729
    %v1954 = vpack.c.b16 %v1734, %v1730
    %v1955 = vpack.c.b16 %v1735, %v1731
    %v1956 = vpack.c.b16 %v1736, %v1732
    %v1957 = vpack.c.b16 %v1741, %v1737
    %v1958 = vpack.c.b16 %v1742, %v1738
    %v1959 = vpack.c.b16 %v1743, %v1739
    %v1960 = vpack.c.b16 %v1744, %v1740
    %v1961 = vpack.c.b16 %v1749, %v1745
    %v1962 = vpack.c.b16 %v1750, %v1746
    %v1963 = vpack.c.b16 %v1751, %v1747
    %v1964 = vpack.c.b16 %v1752, %v1748
    %v1965 = vpack.c.b16 %v1757, %v1753
    %v1966 = vpack.c.b16 %v1758, %v1754
    %v1967 = vpack.c.b16 %v1759, %v1755
    %v1968 = vpack.c.b16 %v1760, %v1756
    %v1969 = vpack.c.b16 %v1765, %v1761
    %v1970 = vpack.c.b16 %v1766, %v1762
    %v1971 = vpack.c.b16 %v1767, %v1763
    %v1972 = vpack.c.b16 %v1768, %v1764
    %v1973 = vpack.c.b16 %v1773, %v1769
    %v1974 = vpack.c.b16 %v1774, %v1770
    %v1975 = vpack.c.b16 %v1775, %v1771
    %v1976 = vpack.c.b16 %v1776, %v1772
    %v1977 = vpack.c.b16 %v1781, %v1777
    %v1978 = vpack.c.b16 %v1782, %v1778
    %v1979 = vpack.c.b16 %v1783, %v1779
    %v1980 = vpack.c.b16 %v1784, %v1780
    %v1981 = vpack.c.b16 %v1789, %v1785
    %v1982 = vpack.c.b16 %v1790, %v1786
    %v1983 = vpack.c.b16 %v1791, %v1787
    %v1984 = vpack.c.b16 %v1792, %v1788
    %v1985 = vpack.c.b16 %v1797, %v1793
    %v1986 = vpack.c.b16 %v1798, %v1794
    %v1987 = vpack.c.b16 %v1799, %v1795
    %v1988 = vpack.c.b16 %v1800, %v1796
    %v1989 = vpack.c.b16 %v1805, %v1801
    %v1990 = vpack.c.b16 %v1806, %v1802
    %v1991 = vpack.c.b16 %v1807, %v1803
    %v1992 = vpack.c.b16 %v1808, %v1804
    %v1993 = vpack.c.b16 %v1813, %v1809
    %v1994 = vpack.c.b16 %v1814, %v1810
    %v1995 = vpack.c.b16 %v1815, %v1811
    %v1996 = vpack.c.b16 %v1816, %v1812
    %v1997 = vpack.c.b16 %v1821, %v1817
    %v1998 = vpack.c.b16 %v1822, %v1818
    %v1999 = vpack.c.b16 %v1823, %v1819
    %v2000 = vpack.c.b16 %v1824, %v1820
    %v2001 = vpack.c.b16 %v1829, %v1825
    %v2002 = vpack.c.b16 %v1830, %v1826
    %v2003 = vpack.c.b16 %v1831, %v1827
    %v2004 = vpack.c.b16 %v1832, %v1828
    %v2005 = vpack.c.b16 %v1837, %v1833
    %v2006 = vpack.c.b16 %v1838, %v1834
    %v2007 = vpack.c.b16 %v1839, %v1835
    %v2008 = vpack.c.b16 %v1840, %v1836
    %v2009 = vpack.c.b16 %v1845, %v1841
    %v2010 = vpack.c.b16 %v1846, %v1842
    %v2011 = vpack.c.b16 %v1847, %v1843
    %v2012 = vpack.c.b16 %v1848, %v1844
    %v2013 = vpack.c.b16 %v1853, %v1849
    %v2014 = vpack.c.b16 %v1854, %v1850
    %v2015 = vpack.c.b16 %v1855, %v1851
    %v2016 = vpack.c.b16 %v1856, %v1852
    %v2017 = vpack.c.b16 %v1861, %v1857
    %v2018 = vpack.c.b16 %v1862, %v1858
    %v2019 = vpack.c.b16 %v1863, %v1859
    %v2020 = vpack.c.b16 %v1864, %v1860
    %v2021 = vpack.c.b16 %v1869, %v1865
    %v2022 = vpack.c.b16 %v1870, %v1866
    %v2023 = vpack.c.b16 %v1871, %v1867
    %v2024 = vpack.c.b16 %v1872, %v1868
    %v2025 = vpack.c.b16 %v1877, %v1873
    %v2026 = vpack.c.b16 %v1878, %v1874
    %v2027 = vpack.c.b16 %v1879, %v1875
    %v2028 = vpack.c.b16 %v1880, %v1876
    %v2029 = vpack.c.b16 %v1885, %v1881
    %v2030 = vpack.c.b16 %v1886, %v1882
    %v2031 = vpack.c.b16 %v1887, %v1883
    %v2032 = vpack.c.b16 %v1888, %v1884
    %v2033 = vpack.c.b16 %v1893, %v1889
    %v2034 = vpack.c.b16 %v1894, %v1890
    %v2035 = vpack.c.b16 %v1895, %v1891
    %v2036 = vpack.c.b16 %v1896, %v1892
    %v2037 = vpack.c.b16 %v1901, %v1897
    %v2038 = vpack.c.b16 %v1902, %v1898
    %v2039 = vpack.c.b16 %v1903, %v1899
    %v2040 = vpack.c.b16 %v1904, %v1900
    %v2041 = vpack.c.b16 %v1909, %v1905
    %v2042 = vpack.c.b16 %v1910, %v1906
    %v2043 = vpack.c.b16 %v1911, %v1907
    %v2044 = vpack.c.b16 %v1912, %v1908
    %v2045 = vpack.c.b16 %v1917, %v1913
    %v2046 = vpack.c.b16 %v1918, %v1914
    %v2047 = vpack.c.b16 %v1919, %v1915
    %v2048 = vpack.c.b16 %v1920, %v1916
    %2177 = vmatpush.bf16.msra.mxu0 %v1949
    %2178 = vmatpush.bf16.msra.mxu0 %v1945
    %2179 = vmatpush.bf16.msra.mxu0 %v1941
    %2180 = vmatpush.bf16.msra.mxu0 %v1937
    %2181 = vmatpush.bf16.msra.mxu0 %v1933
    %2182 = vmatpush.bf16.msra.mxu0 %v1929
    %2183 = vmatpush.bf16.msra.mxu0 %v1925
    %2184 = vmatpush.bf16.msra.mxu0 %v1921
    %2185 = vmatmul.bf16.gmra.mxu0 %v1387
    %v2186 = vpop.f32.mrf.mxu0
    %v2187 = vadd.f32 %v1529, %v2186
    %v2188 = vpop.f32.mrf.mxu0
    %v2189 = vadd.f32 %v1529, %v2188
    %2190 = vmatmul.bf16.gmra.mxu0 %v1391
    %v2191 = vpop.f32.mrf.mxu0
    %v2192 = vadd.f32 %v1529, %v2191
    %v2193 = vpop.f32.mrf.mxu0
    %v2194 = vadd.f32 %v1529, %v2193
    %2195 = vmatmul.bf16.gmra.mxu0 %v1395
    %v2196 = vpop.f32.mrf.mxu0
    %v2197 = vadd.f32 %v1529, %v2196
    %v2198 = vpop.f32.mrf.mxu0
    %v2199 = vadd.f32 %v1529, %v2198
    %2200 = vdwg.mxu0
    %2201 = vmatpush.bf16.msra.mxu0 %v1981
    %2202 = vmatpush.bf16.msra.mxu0 %v1977
    %2203 = vmatpush.bf16.msra.mxu0 %v1973
    %2204 = vmatpush.bf16.msra.mxu0 %v1969
    %2205 = vmatpush.bf16.msra.mxu0 %v1965
    %2206 = vmatpush.bf16.msra.mxu0 %v1961
    %2207 = vmatpush.bf16.msra.mxu0 %v1957
    %2208 = vmatpush.bf16.msra.mxu0 %v1953
    %2209 = vmatmul.bf16.gmra.mxu0 %v1388
    %v2210 = vpop.f32.mrf.mxu0
    %v2211 = vadd.f32 %v2187, %v2210
    %v2212 = vpop.f32.mrf.mxu0
    %v2213 = vadd.f32 %v2189, %v2212
    %2214 = vmatmul.bf16.gmra.mxu0 %v1392
    %v2215 = vpop.f32.mrf.mxu0
    %v2216 = vadd.f32 %v2192, %v2215
    %v2217 = vpop.f32.mrf.mxu0
    %v2218 = vadd.f32 %v2194, %v2217
    %2219 = vmatmul.bf16.gmra.mxu0 %v1396
    %v2220 = vpop.f32.mrf.mxu0
    %v2221 = vadd.f32 %v2197, %v2220
    %v2222 = vpop.f32.mrf.mxu0
    %v2223 = vadd.f32 %v2199, %v2222
    %2224 = vdwg.mxu0
    %2225 = vmatpush.bf16.msra.mxu0 %v2013
    %2226 = vmatpush.bf16.msra.mxu0 %v2009
    %2227 = vmatpush.bf16.msra.mxu0 %v2005
    %2228 = vmatpush.bf16.msra.mxu0 %v2001
    %2229 = vmatpush.bf16.msra.mxu0 %v1997
    %2230 = vmatpush.bf16.msra.mxu0 %v1993
    %2231 = vmatpush.bf16.msra.mxu0 %v1989
    %2232 = vmatpush.bf16.msra.mxu0 %v1985
    %2233 = vmatmul.bf16.gmra.mxu0 %v1389
    %v2234 = vpop.f32.mrf.mxu0
    %v2235 = vadd.f32 %v2211, %v2234
    %v2236 = vpop.f32.mrf.mxu0
    %v2237 = vadd.f32 %v2213, %v2236
    %2238 = vmatmul.bf16.gmra.mxu0 %v1393
    %v2239 = vpop.f32.mrf.mxu0
    %v2240 = vadd.f32 %v2216, %v2239
    %v2241 = vpop.f32.mrf.mxu0
    %v2242 = vadd.f32 %v2218, %v2241
    %2243 = vmatmul.bf16.gmra.mxu0 %v1397
    %v2244 = vpop.f32.mrf.mxu0
    %v2245 = vadd.f32 %v2221, %v2244
    %v2246 = vpop.f32.mrf.mxu0
    %v2247 = vadd.f32 %v2223, %v2246
    %2248 = vdwg.mxu0
    %2249 = vmatpush.bf16.msra.mxu0 %v2045
    %2250 = vmatpush.bf16.msra.mxu0 %v2041
    %2251 = vmatpush.bf16.msra.mxu0 %v2037
    %2252 = vmatpush.bf16.msra.mxu0 %v2033
    %2253 = vmatpush.bf16.msra.mxu0 %v2029
    %2254 = vmatpush.bf16.msra.mxu0 %v2025
    %2255 = vmatpush.bf16.msra.mxu0 %v2021
    %2256 = vmatpush.bf16.msra.mxu0 %v2017
    %2257 = vmatmul.bf16.gmra.mxu0 %v1390
    %v2258 = vpop.f32.mrf.mxu0
    %v2259 = vadd.f32 %v2235, %v2258
    %v2260 = vpop.f32.mrf.mxu0
    %v2261 = vadd.f32 %v2237, %v2260
    %2262 = vmatmul.bf16.gmra.mxu0 %v1394
    %v2263 = vpop.f32.mrf.mxu0
    %v2264 = vadd.f32 %v2240, %v2263
    %v2265 = vpop.f32.mrf.mxu0
    %v2266 = vadd.f32 %v2242, %v2265
    %2267 = vmatmul.bf16.gmra.mxu0 %v1398
    %v2268 = vpop.f32.mrf.mxu0
    %v2269 = vadd.f32 %v2245, %v2268
    %v2270 = vpop.f32.mrf.mxu0
    %v2271 = vadd.f32 %v2247, %v2270
    %2272 = vdwg.mxu0
    %2273 = vmatpush.bf16.msra.mxu0 %v1950
    %2274 = vmatpush.bf16.msra.mxu0 %v1946
    %2275 = vmatpush.bf16.msra.mxu0 %v1942
    %2276 = vmatpush.bf16.msra.mxu0 %v1938
    %2277 = vmatpush.bf16.msra.mxu0 %v1934
    %2278 = vmatpush.bf16.msra.mxu0 %v1930
    %2279 = vmatpush.bf16.msra.mxu0 %v1926
    %2280 = vmatpush.bf16.msra.mxu0 %v1922
    %2281 = vmatmul.bf16.gmra.mxu0 %v1387
    %v2282 = vpop.f32.mrf.mxu0
    %v2283 = vadd.f32 %v1530, %v2282
    %v2284 = vpop.f32.mrf.mxu0
    %v2285 = vadd.f32 %v1530, %v2284
    %2286 = vmatmul.bf16.gmra.mxu0 %v1391
    %v2287 = vpop.f32.mrf.mxu0
    %v2288 = vadd.f32 %v1530, %v2287
    %v2289 = vpop.f32.mrf.mxu0
    %v2290 = vadd.f32 %v1530, %v2289
    %2291 = vmatmul.bf16.gmra.mxu0 %v1395
    %v2292 = vpop.f32.mrf.mxu0
    %v2293 = vadd.f32 %v1530, %v2292
    %v2294 = vpop.f32.mrf.mxu0
    %v2295 = vadd.f32 %v1530, %v2294
    %2296 = vdwg.mxu0
    %2297 = vmatpush.bf16.msra.mxu0 %v1982
    %2298 = vmatpush.bf16.msra.mxu0 %v1978
    %2299 = vmatpush.bf16.msra.mxu0 %v1974
    %2300 = vmatpush.bf16.msra.mxu0 %v1970
    %2301 = vmatpush.bf16.msra.mxu0 %v1966
    %2302 = vmatpush.bf16.msra.mxu0 %v1962
    %2303 = vmatpush.bf16.msra.mxu0 %v1958
    %2304 = vmatpush.bf16.msra.mxu0 %v1954
    %2305 = vmatmul.bf16.gmra.mxu0 %v1388
    %v2306 = vpop.f32.mrf.mxu0
    %v2307 = vadd.f32 %v2283, %v2306
    %v2308 = vpop.f32.mrf.mxu0
    %v2309 = vadd.f32 %v2285, %v2308
    %2310 = vmatmul.bf16.gmra.mxu0 %v1392
    %v2311 = vpop.f32.mrf.mxu0
    %v2312 = vadd.f32 %v2288, %v2311
    %v2313 = vpop.f32.mrf.mxu0
    %v2314 = vadd.f32 %v2290, %v2313
    %2315 = vmatmul.bf16.gmra.mxu0 %v1396
    %v2316 = vpop.f32.mrf.mxu0
    %v2317 = vadd.f32 %v2293, %v2316
    %v2318 = vpop.f32.mrf.mxu0
    %v2319 = vadd.f32 %v2295, %v2318
    %2320 = vdwg.mxu0
    %2321 = vmatpush.bf16.msra.mxu0 %v2014
    %2322 = vmatpush.bf16.msra.mxu0 %v2010
    %2323 = vmatpush.bf16.msra.mxu0 %v2006
    %2324 = vmatpush.bf16.msra.mxu0 %v2002
    %2325 = vmatpush.bf16.msra.mxu0 %v1998
    %2326 = vmatpush.bf16.msra.mxu0 %v1994
    %2327 = vmatpush.bf16.msra.mxu0 %v1990
    %2328 = vmatpush.bf16.msra.mxu0 %v1986
    %2329 = vmatmul.bf16.gmra.mxu0 %v1389
    %v2330 = vpop.f32.mrf.mxu0
    %v2331 = vadd.f32 %v2307, %v2330
    %v2332 = vpop.f32.mrf.mxu0
    %v2333 = vadd.f32 %v2309, %v2332
    %2334 = vmatmul.bf16.gmra.mxu0 %v1393
    %v2335 = vpop.f32.mrf.mxu0
    %v2336 = vadd.f32 %v2312, %v2335
    %v2337 = vpop.f32.mrf.mxu0
    %v2338 = vadd.f32 %v2314, %v2337
    %2339 = vmatmul.bf16.gmra.mxu0 %v1397
    %v2340 = vpop.f32.mrf.mxu0
    %v2341 = vadd.f32 %v2317, %v2340
    %v2342 = vpop.f32.mrf.mxu0
    %v2343 = vadd.f32 %v2319, %v2342
    %2344 = vdwg.mxu0
    %2345 = vmatpush.bf16.msra.mxu0 %v2046
    %2346 = vmatpush.bf16.msra.mxu0 %v2042
    %2347 = vmatpush.bf16.msra.mxu0 %v2038
    %2348 = vmatpush.bf16.msra.mxu0 %v2034
    %2349 = vmatpush.bf16.msra.mxu0 %v2030
    %2350 = vmatpush.bf16.msra.mxu0 %v2026
    %2351 = vmatpush.bf16.msra.mxu0 %v2022
    %2352 = vmatpush.bf16.msra.mxu0 %v2018
    %2353 = vmatmul.bf16.gmra.mxu0 %v1390
    %v2354 = vpop.f32.mrf.mxu0
    %v2355 = vadd.f32 %v2331, %v2354
    %v2356 = vpop.f32.mrf.mxu0
    %v2357 = vadd.f32 %v2333, %v2356
    %2358 = vmatmul.bf16.gmra.mxu0 %v1394
    %v2359 = vpop.f32.mrf.mxu0
    %v2360 = vadd.f32 %v2336, %v2359
    %v2361 = vpop.f32.mrf.mxu0
    %v2362 = vadd.f32 %v2338, %v2361
    %2363 = vmatmul.bf16.gmra.mxu0 %v1398
    %v2364 = vpop.f32.mrf.mxu0
    %v2365 = vadd.f32 %v2341, %v2364
    %v2366 = vpop.f32.mrf.mxu0
    %v2367 = vadd.f32 %v2343, %v2366
    %2368 = vdwg.mxu0
    %2369 = vmatpush.bf16.msra.mxu0 %v1951
    %2370 = vmatpush.bf16.msra.mxu0 %v1947
    %2371 = vmatpush.bf16.msra.mxu0 %v1943
    %2372 = vmatpush.bf16.msra.mxu0 %v1939
    %2373 = vmatpush.bf16.msra.mxu0 %v1935
    %2374 = vmatpush.bf16.msra.mxu0 %v1931
    %2375 = vmatpush.bf16.msra.mxu0 %v1927
    %2376 = vmatpush.bf16.msra.mxu0 %v1923
    %2377 = vmatmul.bf16.gmra.mxu0 %v1387
    %v2378 = vpop.f32.mrf.mxu0
    %v2379 = vadd.f32 %v1531, %v2378
    %v2380 = vpop.f32.mrf.mxu0
    %v2381 = vadd.f32 %v1531, %v2380
    %2382 = vmatmul.bf16.gmra.mxu0 %v1391
    %v2383 = vpop.f32.mrf.mxu0
    %v2384 = vadd.f32 %v1531, %v2383
    %v2385 = vpop.f32.mrf.mxu0
    %v2386 = vadd.f32 %v1531, %v2385
    %2387 = vmatmul.bf16.gmra.mxu0 %v1395
    %v2388 = vpop.f32.mrf.mxu0
    %v2389 = vadd.f32 %v1531, %v2388
    %v2390 = vpop.f32.mrf.mxu0
    %v2391 = vadd.f32 %v1531, %v2390
    %2392 = vdwg.mxu0
    %2393 = vmatpush.bf16.msra.mxu0 %v1983
    %2394 = vmatpush.bf16.msra.mxu0 %v1979
    %2395 = vmatpush.bf16.msra.mxu0 %v1975
    %2396 = vmatpush.bf16.msra.mxu0 %v1971
    %2397 = vmatpush.bf16.msra.mxu0 %v1967
    %2398 = vmatpush.bf16.msra.mxu0 %v1963
    %2399 = vmatpush.bf16.msra.mxu0 %v1959
    %2400 = vmatpush.bf16.msra.mxu0 %v1955
    %2401 = vmatmul.bf16.gmra.mxu0 %v1388
    %v2402 = vpop.f32.mrf.mxu0
    %v2403 = vadd.f32 %v2379, %v2402
    %v2404 = vpop.f32.mrf.mxu0
    %v2405 = vadd.f32 %v2381, %v2404
    %2406 = vmatmul.bf16.gmra.mxu0 %v1392
    %v2407 = vpop.f32.mrf.mxu0
    %v2408 = vadd.f32 %v2384, %v2407
    %v2409 = vpop.f32.mrf.mxu0
    %v2410 = vadd.f32 %v2386, %v2409
    %2411 = vmatmul.bf16.gmra.mxu0 %v1396
    %v2412 = vpop.f32.mrf.mxu0
    %v2413 = vadd.f32 %v2389, %v2412
    %v2414 = vpop.f32.mrf.mxu0
    %v2415 = vadd.f32 %v2391, %v2414
    %2416 = vdwg.mxu0
    %2417 = vmatpush.bf16.msra.mxu0 %v2015
    %2418 = vmatpush.bf16.msra.mxu0 %v2011
    %2419 = vmatpush.bf16.msra.mxu0 %v2007
    %2420 = vmatpush.bf16.msra.mxu0 %v2003
    %2421 = vmatpush.bf16.msra.mxu0 %v1999
    %2422 = vmatpush.bf16.msra.mxu0 %v1995
    %2423 = vmatpush.bf16.msra.mxu0 %v1991
    %2424 = vmatpush.bf16.msra.mxu0 %v1987
    %2425 = vmatmul.bf16.gmra.mxu0 %v1389
    %v2426 = vpop.f32.mrf.mxu0
    %v2427 = vadd.f32 %v2403, %v2426
    %v2428 = vpop.f32.mrf.mxu0
    %v2429 = vadd.f32 %v2405, %v2428
    %2430 = vmatmul.bf16.gmra.mxu0 %v1393
    %v2431 = vpop.f32.mrf.mxu0
    %v2432 = vadd.f32 %v2408, %v2431
    %v2433 = vpop.f32.mrf.mxu0
    %v2434 = vadd.f32 %v2410, %v2433
    %2435 = vmatmul.bf16.gmra.mxu0 %v1397
    %v2436 = vpop.f32.mrf.mxu0
    %v2437 = vadd.f32 %v2413, %v2436
    %v2438 = vpop.f32.mrf.mxu0
    %v2439 = vadd.f32 %v2415, %v2438
    %2440 = vdwg.mxu0
    %2441 = vmatpush.bf16.msra.mxu0 %v2047
    %2442 = vmatpush.bf16.msra.mxu0 %v2043
    %2443 = vmatpush.bf16.msra.mxu0 %v2039
    %2444 = vmatpush.bf16.msra.mxu0 %v2035
    %2445 = vmatpush.bf16.msra.mxu0 %v2031
    %2446 = vmatpush.bf16.msra.mxu0 %v2027
    %2447 = vmatpush.bf16.msra.mxu0 %v2023
    %2448 = vmatpush.bf16.msra.mxu0 %v2019
    %2449 = vmatmul.bf16.gmra.mxu0 %v1390
    %v2450 = vpop.f32.mrf.mxu0
    %v2451 = vadd.f32 %v2427, %v2450
    %v2452 = vpop.f32.mrf.mxu0
    %v2453 = vadd.f32 %v2429, %v2452
    %2454 = vmatmul.bf16.gmra.mxu0 %v1394
    %v2455 = vpop.f32.mrf.mxu0
    %v2456 = vadd.f32 %v2432, %v2455
    %v2457 = vpop.f32.mrf.mxu0
    %v2458 = vadd.f32 %v2434, %v2457
    %2459 = vmatmul.bf16.gmra.mxu0 %v1398
    %v2460 = vpop.f32.mrf.mxu0
    %v2461 = vadd.f32 %v2437, %v2460
    %v2462 = vpop.f32.mrf.mxu0
    %v2463 = vadd.f32 %v2439, %v2462
    %2464 = vdwg.mxu0
    %2465 = vmatpush.bf16.msra.mxu0 %v1952
    %2466 = vmatpush.bf16.msra.mxu0 %v1948
    %2467 = vmatpush.bf16.msra.mxu0 %v1944
    %2468 = vmatpush.bf16.msra.mxu0 %v1940
    %2469 = vmatpush.bf16.msra.mxu0 %v1936
    %2470 = vmatpush.bf16.msra.mxu0 %v1932
    %2471 = vmatpush.bf16.msra.mxu0 %v1928
    %2472 = vmatpush.bf16.msra.mxu0 %v1924
    %2473 = vmatmul.bf16.gmra.mxu0 %v1387
    %v2474 = vpop.f32.mrf.mxu0
    %v2475 = vadd.f32 %v1532, %v2474
    %v2476 = vpop.f32.mrf.mxu0
    %v2477 = vadd.f32 %v1532, %v2476
    %2478 = vmatmul.bf16.gmra.mxu0 %v1391
    %v2479 = vpop.f32.mrf.mxu0
    %v2480 = vadd.f32 %v1532, %v2479
    %v2481 = vpop.f32.mrf.mxu0
    %v2482 = vadd.f32 %v1532, %v2481
    %2483 = vmatmul.bf16.gmra.mxu0 %v1395
    %v2484 = vpop.f32.mrf.mxu0
    %v2485 = vadd.f32 %v1532, %v2484
    %v2486 = vpop.f32.mrf.mxu0
    %v2487 = vadd.f32 %v1532, %v2486
    %2488 = vdwg.mxu0
    %2489 = vmatpush.bf16.msra.mxu0 %v1984
    %2490 = vmatpush.bf16.msra.mxu0 %v1980
    %2491 = vmatpush.bf16.msra.mxu0 %v1976
    %2492 = vmatpush.bf16.msra.mxu0 %v1972
    %2493 = vmatpush.bf16.msra.mxu0 %v1968
    %2494 = vmatpush.bf16.msra.mxu0 %v1964
    %2495 = vmatpush.bf16.msra.mxu0 %v1960
    %2496 = vmatpush.bf16.msra.mxu0 %v1956
    %2497 = vmatmul.bf16.gmra.mxu0 %v1388
    %v2498 = vpop.f32.mrf.mxu0
    %v2499 = vadd.f32 %v2475, %v2498
    %v2500 = vpop.f32.mrf.mxu0
    %v2501 = vadd.f32 %v2477, %v2500
    %2502 = vmatmul.bf16.gmra.mxu0 %v1392
    %v2503 = vpop.f32.mrf.mxu0
    %v2504 = vadd.f32 %v2480, %v2503
    %v2505 = vpop.f32.mrf.mxu0
    %v2506 = vadd.f32 %v2482, %v2505
    %2507 = vmatmul.bf16.gmra.mxu0 %v1396
    %v2508 = vpop.f32.mrf.mxu0
    %v2509 = vadd.f32 %v2485, %v2508
    %v2510 = vpop.f32.mrf.mxu0
    %v2511 = vadd.f32 %v2487, %v2510
    %2512 = vdwg.mxu0
    %2513 = vmatpush.bf16.msra.mxu0 %v2016
    %2514 = vmatpush.bf16.msra.mxu0 %v2012
    %2515 = vmatpush.bf16.msra.mxu0 %v2008
    %2516 = vmatpush.bf16.msra.mxu0 %v2004
    %2517 = vmatpush.bf16.msra.mxu0 %v2000
    %2518 = vmatpush.bf16.msra.mxu0 %v1996
    %2519 = vmatpush.bf16.msra.mxu0 %v1992
    %2520 = vmatpush.bf16.msra.mxu0 %v1988
    %2521 = vmatmul.bf16.gmra.mxu0 %v1389
    %v2522 = vpop.f32.mrf.mxu0
    %v2523 = vadd.f32 %v2499, %v2522
    %v2524 = vpop.f32.mrf.mxu0
    %v2525 = vadd.f32 %v2501, %v2524
    %2526 = vmatmul.bf16.gmra.mxu0 %v1393
    %v2527 = vpop.f32.mrf.mxu0
    %v2528 = vadd.f32 %v2504, %v2527
    %v2529 = vpop.f32.mrf.mxu0
    %v2530 = vadd.f32 %v2506, %v2529
    %2531 = vmatmul.bf16.gmra.mxu0 %v1397
    %v2532 = vpop.f32.mrf.mxu0
    %v2533 = vadd.f32 %v2509, %v2532
    %v2534 = vpop.f32.mrf.mxu0
    %v2535 = vadd.f32 %v2511, %v2534
    %2536 = vdwg.mxu0
    %2537 = vmatpush.bf16.msra.mxu0 %v2048
    %2538 = vmatpush.bf16.msra.mxu0 %v2044
    %2539 = vmatpush.bf16.msra.mxu0 %v2040
    %2540 = vmatpush.bf16.msra.mxu0 %v2036
    %2541 = vmatpush.bf16.msra.mxu0 %v2032
    %2542 = vmatpush.bf16.msra.mxu0 %v2028
    %2543 = vmatpush.bf16.msra.mxu0 %v2024
    %2544 = vmatpush.bf16.msra.mxu0 %v2020
    %2545 = vmatmul.bf16.gmra.mxu0 %v1390
    %v2546 = vpop.f32.mrf.mxu0
    %v2547 = vadd.f32 %v2523, %v2546
    %v2548 = vpop.f32.mrf.mxu0
    %v2549 = vadd.f32 %v2525, %v2548
    %2550 = vmatmul.bf16.gmra.mxu0 %v1394
    %v2551 = vpop.f32.mrf.mxu0
    %v2552 = vadd.f32 %v2528, %v2551
    %v2553 = vpop.f32.mrf.mxu0
    %v2554 = vadd.f32 %v2530, %v2553
    %2555 = vmatmul.bf16.gmra.mxu0 %v1398
    %v2556 = vpop.f32.mrf.mxu0
    %v2557 = vadd.f32 %v2533, %v2556
    %v2558 = vpop.f32.mrf.mxu0
    %v2559 = vadd.f32 %v2535, %v2558
    %2560 = vdwg.mxu0
    %vm2561 = vcmp.gt.f32.partialorder %v2259, 0.0
    %vm2562 = vcmp.gt.f32.partialorder %v2355, 0.0
    %vm2563 = vcmp.gt.f32.partialorder %v2451, 0.0
    %vm2564 = vcmp.gt.f32.partialorder %v2547, 0.0
    %vm2565 = vcmp.gt.f32.partialorder %v2261, 0.0
    %vm2566 = vcmp.gt.f32.partialorder %v2357, 0.0
    %vm2567 = vcmp.gt.f32.partialorder %v2453, 0.0
    %vm2568 = vcmp.gt.f32.partialorder %v2549, 0.0
    %vm2569 = vcmp.gt.f32.partialorder %v2264, 0.0
    %vm2570 = vcmp.gt.f32.partialorder %v2360, 0.0
    %vm2571 = vcmp.gt.f32.partialorder %v2456, 0.0
    %vm2572 = vcmp.gt.f32.partialorder %v2552, 0.0
    %vm2573 = vcmp.gt.f32.partialorder %v2266, 0.0
    %vm2574 = vcmp.gt.f32.partialorder %v2362, 0.0
    %vm2575 = vcmp.gt.f32.partialorder %v2458, 0.0
    %vm2576 = vcmp.gt.f32.partialorder %v2554, 0.0
    %vm2577 = vcmp.gt.f32.partialorder %v2269, 0.0
    %vm2578 = vcmp.gt.f32.partialorder %v2365, 0.0
    %vm2579 = vcmp.gt.f32.partialorder %v2461, 0.0
    %vm2580 = vcmp.gt.f32.partialorder %v2557, 0.0
    %vm2581 = vcmp.gt.f32.partialorder %v2271, 0.0
    %vm2582 = vcmp.gt.f32.partialorder %v2367, 0.0
    %vm2583 = vcmp.gt.f32.partialorder %v2463, 0.0
    %vm2584 = vcmp.gt.f32.partialorder %v2559, 0.0
    %v2585 = vmul.f32 %v2259, 0.2
    %v2586 = vmul.f32 %v2355, 0.2
    %v2587 = vmul.f32 %v2451, 0.2
    %v2588 = vmul.f32 %v2547, 0.2
    %v2589 = vmul.f32 %v2261, 0.2
    %v2590 = vmul.f32 %v2357, 0.2
    %v2591 = vmul.f32 %v2453, 0.2
    %v2592 = vmul.f32 %v2549, 0.2
    %v2593 = vmul.f32 %v2264, 0.2
    %v2594 = vmul.f32 %v2360, 0.2
    %v2595 = vmul.f32 %v2456, 0.2
    %v2596 = vmul.f32 %v2552, 0.2
    %v2597 = vmul.f32 %v2266, 0.2
    %v2598 = vmul.f32 %v2362, 0.2
    %v2599 = vmul.f32 %v2458, 0.2
    %v2600 = vmul.f32 %v2554, 0.2
    %v2601 = vmul.f32 %v2269, 0.2
    %v2602 = vmul.f32 %v2365, 0.2
    %v2603 = vmul.f32 %v2461, 0.2
    %v2604 = vmul.f32 %v2557, 0.2
    %v2605 = vmul.f32 %v2271, 0.2
    %v2606 = vmul.f32 %v2367, 0.2
    %v2607 = vmul.f32 %v2463, 0.2
    %v2608 = vmul.f32 %v2559, 0.2
    %v2609 = vsel %vm2561, %v2259, %v2585
    %v2610 = vsel %vm2562, %v2355, %v2586
    %v2611 = vsel %vm2563, %v2451, %v2587
    %v2612 = vsel %vm2564, %v2547, %v2588
    %v2613 = vsel %vm2565, %v2261, %v2589
    %v2614 = vsel %vm2566, %v2357, %v2590
    %v2615 = vsel %vm2567, %v2453, %v2591
    %v2616 = vsel %vm2568, %v2549, %v2592
    %v2617 = vsel %vm2569, %v2264, %v2593
    %v2618 = vsel %vm2570, %v2360, %v2594
    %v2619 = vsel %vm2571, %v2456, %v2595
    %v2620 = vsel %vm2572, %v2552, %v2596
    %v2621 = vsel %vm2573, %v2266, %v2597
    %v2622 = vsel %vm2574, %v2362, %v2598
    %v2623 = vsel %vm2575, %v2458, %v2599
    %v2624 = vsel %vm2576, %v2554, %v2600
    %v2625 = vsel %vm2577, %v2269, %v2601
    %v2626 = vsel %vm2578, %v2365, %v2602
    %v2627 = vsel %vm2579, %v2461, %v2603
    %v2628 = vsel %vm2580, %v2557, %v2604
    %v2629 = vsel %vm2581, %v2271, %v2605
    %v2630 = vsel %vm2582, %v2367, %v2606
    %v2631 = vsel %vm2583, %v2463, %v2607
    %v2632 = vsel %vm2584, %v2559, %v2608
    %v2633 = vpack.c.bf16 %v2613, %v2609
    %v2634 = vpack.c.bf16 %v2614, %v2610
    %v2635 = vpack.c.bf16 %v2615, %v2611
    %v2636 = vpack.c.bf16 %v2616, %v2612
    %v2637 = vpack.c.bf16 %v2621, %v2617
    %v2638 = vpack.c.bf16 %v2622, %v2618
    %v2639 = vpack.c.bf16 %v2623, %v2619
    %v2640 = vpack.c.bf16 %v2624, %v2620
    %v2641 = vpack.c.bf16 %v2629, %v2625
    %v2642 = vpack.c.bf16 %v2630, %v2626
    %v2643 = vpack.c.bf16 %v2631, %v2627
    %v2644 = vpack.c.bf16 %v2632, %v2628
    %v2645 = vld [vmem:[#allocation11] sm:$0xff]
    %v2646 = vld [vmem:[#allocation11 + $0x8] sm:$0xff]
    %v2647 = vld [vmem:[#allocation11 + $0x10] sm:$0xff]
    %v2648 = vld [vmem:[#allocation11 + $0x18] sm:$0xff]
    %v2649 = vld [vmem:[#allocation11 + $0x20] sm:$0xff]
    %v2650 = vld [vmem:[#allocation11 + $0x28] sm:$0xff]
    %v2651 = vld [vmem:[#allocation11 + $0x30] sm:$0xff]
    %v2652 = vld [vmem:[#allocation11 + $0x38] sm:$0xff]
    %v2653 = vld [vmem:[#allocation11 + $0x40] sm:$0xff]
    %v2654 = vld [vmem:[#allocation11 + $0x48] sm:$0xff]
    %v2655 = vld [vmem:[#allocation11 + $0x50] sm:$0xff]
    %v2656 = vld [vmem:[#allocation11 + $0x58] sm:$0xff]
    %v2657 = vld [vmem:[#allocation11 + $0x60] sm:$0xff]
    %v2658 = vld [vmem:[#allocation11 + $0x68] sm:$0xff]
    %v2659 = vld [vmem:[#allocation11 + $0x70] sm:$0xff]
    %v2660 = vld [vmem:[#allocation11 + $0x78] sm:$0xff]
    %v2661 = vld [vmem:[#allocation11 + $0x80] sm:$0xff]
    %v2662 = vld [vmem:[#allocation11 + $0x88] sm:$0xff]
    %v2663 = vld [vmem:[#allocation11 + $0x90] sm:$0xff]
    %v2664 = vld [vmem:[#allocation11 + $0x98] sm:$0xff]
    %v2665 = vld [vmem:[#allocation11 + $0xa0] sm:$0xff]
    %v2666 = vld [vmem:[#allocation11 + $0xa8] sm:$0xff]
    %v2667 = vld [vmem:[#allocation11 + $0xb0] sm:$0xff]
    %v2668 = vld [vmem:[#allocation11 + $0xb8] sm:$0xff]
    %v2669 = vld [vmem:[#allocation11 + $0xc0] sm:$0xff]
    %v2670 = vld [vmem:[#allocation11 + $0xc8] sm:$0xff]
    %v2671 = vld [vmem:[#allocation11 + $0xd0] sm:$0xff]
    %v2672 = vld [vmem:[#allocation11 + $0xd8] sm:$0xff]
    %v2673 = vld [vmem:[#allocation11 + $0xe0] sm:$0xff]
    %v2674 = vld [vmem:[#allocation11 + $0xe8] sm:$0xff]
    %v2675 = vld [vmem:[#allocation11 + $0xf0] sm:$0xff]
    %v2676 = vld [vmem:[#allocation11 + $0xf8] sm:$0xff]
    %v2677 = vld [vmem:[#allocation11 + $0x100] sm:$0xff]
    %v2678 = vld [vmem:[#allocation11 + $0x108] sm:$0xff]
    %v2679 = vld [vmem:[#allocation11 + $0x110] sm:$0xff]
    %v2680 = vld [vmem:[#allocation11 + $0x118] sm:$0xff]
    %v2681 = vld [vmem:[#allocation11 + $0x120] sm:$0xff]
    %v2682 = vld [vmem:[#allocation11 + $0x128] sm:$0xff]
    %v2683 = vld [vmem:[#allocation11 + $0x130] sm:$0xff]
    %v2684 = vld [vmem:[#allocation11 + $0x138] sm:$0xff]
    %v2685 = vld [vmem:[#allocation11 + $0x140] sm:$0xff]
    %v2686 = vld [vmem:[#allocation11 + $0x148] sm:$0xff]
    %v2687 = vld [vmem:[#allocation11 + $0x150] sm:$0xff]
    %v2688 = vld [vmem:[#allocation11 + $0x158] sm:$0xff]
    %v2689 = vld [vmem:[#allocation11 + $0x160] sm:$0xff]
    %v2690 = vld [vmem:[#allocation11 + $0x168] sm:$0xff]
    %v2691 = vld [vmem:[#allocation11 + $0x170] sm:$0xff]
    %v2692 = vld [vmem:[#allocation11 + $0x178] sm:$0xff]
    %v2693 = vld [vmem:[#allocation11 + $0x180] sm:$0xff]
    %v2694 = vld [vmem:[#allocation11 + $0x188] sm:$0xff]
    %v2695 = vld [vmem:[#allocation11 + $0x190] sm:$0xff]
    %v2696 = vld [vmem:[#allocation11 + $0x198] sm:$0xff]
    %v2697 = vld [vmem:[#allocation11 + $0x1a0] sm:$0xff]
    %v2698 = vld [vmem:[#allocation11 + $0x1a8] sm:$0xff]
    %v2699 = vld [vmem:[#allocation11 + $0x1b0] sm:$0xff]
    %v2700 = vld [vmem:[#allocation11 + $0x1b8] sm:$0xff]
    %v2701 = vld [vmem:[#allocation11 + $0x1c0] sm:$0xff]
    %v2702 = vld [vmem:[#allocation11 + $0x1c8] sm:$0xff]
    %v2703 = vld [vmem:[#allocation11 + $0x1d0] sm:$0xff]
    %v2704 = vld [vmem:[#allocation11 + $0x1d8] sm:$0xff]
    %v2705 = vld [vmem:[#allocation11 + $0x1e0] sm:$0xff]
    %v2706 = vld [vmem:[#allocation11 + $0x1e8] sm:$0xff]
    %v2707 = vld [vmem:[#allocation11 + $0x1f0] sm:$0xff]
    %v2708 = vld [vmem:[#allocation11 + $0x1f8] sm:$0xff]
    %v2709 = vld [vmem:[#allocation11 + $0x200] sm:$0xff]
    %v2710 = vld [vmem:[#allocation11 + $0x208] sm:$0xff]
    %v2711 = vld [vmem:[#allocation11 + $0x210] sm:$0xff]
    %v2712 = vld [vmem:[#allocation11 + $0x218] sm:$0xff]
    %v2713 = vld [vmem:[#allocation11 + $0x220] sm:$0xff]
    %v2714 = vld [vmem:[#allocation11 + $0x228] sm:$0xff]
    %v2715 = vld [vmem:[#allocation11 + $0x230] sm:$0xff]
    %v2716 = vld [vmem:[#allocation11 + $0x238] sm:$0xff]
    %v2717 = vld [vmem:[#allocation11 + $0x240] sm:$0xff]
    %v2718 = vld [vmem:[#allocation11 + $0x248] sm:$0xff]
    %v2719 = vld [vmem:[#allocation11 + $0x250] sm:$0xff]
    %v2720 = vld [vmem:[#allocation11 + $0x258] sm:$0xff]
    %v2721 = vld [vmem:[#allocation11 + $0x260] sm:$0xff]
    %v2722 = vld [vmem:[#allocation11 + $0x268] sm:$0xff]
    %v2723 = vld [vmem:[#allocation11 + $0x270] sm:$0xff]
    %v2724 = vld [vmem:[#allocation11 + $0x278] sm:$0xff]
    %v2725 = vld [vmem:[#allocation11 + $0x280] sm:$0xff]
    %v2726 = vld [vmem:[#allocation11 + $0x288] sm:$0xff]
    %v2727 = vld [vmem:[#allocation11 + $0x290] sm:$0xff]
    %v2728 = vld [vmem:[#allocation11 + $0x298] sm:$0xff]
    %v2729 = vld [vmem:[#allocation11 + $0x2a0] sm:$0xff]
    %v2730 = vld [vmem:[#allocation11 + $0x2a8] sm:$0xff]
    %v2731 = vld [vmem:[#allocation11 + $0x2b0] sm:$0xff]
    %v2732 = vld [vmem:[#allocation11 + $0x2b8] sm:$0xff]
    %v2733 = vld [vmem:[#allocation11 + $0x2c0] sm:$0xff]
    %v2734 = vld [vmem:[#allocation11 + $0x2c8] sm:$0xff]
    %v2735 = vld [vmem:[#allocation11 + $0x2d0] sm:$0xff]
    %v2736 = vld [vmem:[#allocation11 + $0x2d8] sm:$0xff]
    %v2737 = vld [vmem:[#allocation11 + $0x2e0] sm:$0xff]
    %v2738 = vld [vmem:[#allocation11 + $0x2e8] sm:$0xff]
    %v2739 = vld [vmem:[#allocation11 + $0x2f0] sm:$0xff]
    %v2740 = vld [vmem:[#allocation11 + $0x2f8] sm:$0xff]
    %v2741 = vld [vmem:[#allocation11 + $0x300] sm:$0xff]
    %v2742 = vld [vmem:[#allocation11 + $0x308] sm:$0xff]
    %v2743 = vld [vmem:[#allocation11 + $0x310] sm:$0xff]
    %v2744 = vld [vmem:[#allocation11 + $0x318] sm:$0xff]
    %v2745 = vld [vmem:[#allocation11 + $0x320] sm:$0xff]
    %v2746 = vld [vmem:[#allocation11 + $0x328] sm:$0xff]
    %v2747 = vld [vmem:[#allocation11 + $0x330] sm:$0xff]
    %v2748 = vld [vmem:[#allocation11 + $0x338] sm:$0xff]
    %v2749 = vld [vmem:[#allocation11 + $0x340] sm:$0xff]
    %v2750 = vld [vmem:[#allocation11 + $0x348] sm:$0xff]
    %v2751 = vld [vmem:[#allocation11 + $0x350] sm:$0xff]
    %v2752 = vld [vmem:[#allocation11 + $0x358] sm:$0xff]
    %v2753 = vld [vmem:[#allocation11 + $0x360] sm:$0xff]
    %v2754 = vld [vmem:[#allocation11 + $0x368] sm:$0xff]
    %v2755 = vld [vmem:[#allocation11 + $0x370] sm:$0xff]
    %v2756 = vld [vmem:[#allocation11 + $0x378] sm:$0xff]
    %v2757 = vld [vmem:[#allocation11 + $0x380] sm:$0xff]
    %v2758 = vld [vmem:[#allocation11 + $0x388] sm:$0xff]
    %v2759 = vld [vmem:[#allocation11 + $0x390] sm:$0xff]
    %v2760 = vld [vmem:[#allocation11 + $0x398] sm:$0xff]
    %v2761 = vld [vmem:[#allocation11 + $0x3a0] sm:$0xff]
    %v2762 = vld [vmem:[#allocation11 + $0x3a8] sm:$0xff]
    %v2763 = vld [vmem:[#allocation11 + $0x3b0] sm:$0xff]
    %v2764 = vld [vmem:[#allocation11 + $0x3b8] sm:$0xff]
    %v2765 = vld [vmem:[#allocation11 + $0x3c0] sm:$0xff]
    %v2766 = vld [vmem:[#allocation11 + $0x3c8] sm:$0xff]
    %v2767 = vld [vmem:[#allocation11 + $0x3d0] sm:$0xff]
    %v2768 = vld [vmem:[#allocation11 + $0x3d8] sm:$0xff]
    %v2769 = vld [vmem:[#allocation11 + $0x3e0] sm:$0xff]
    %v2770 = vld [vmem:[#allocation11 + $0x3e8] sm:$0xff]
    %v2771 = vld [vmem:[#allocation11 + $0x3f0] sm:$0xff]
    %v2772 = vld [vmem:[#allocation11 + $0x3f8] sm:$0xff]
    %v2773 = vld [vmem:[%s6] sm:$0xf]
    %v2775 = vperm.slane %v2773, 0
    %v2776 = vperm.slane %v2773, 1
    %v2777 = vperm.slane %v2773, 2
    %v2778 = vperm.slane %v2773, 3
    %v2911 = vunpack.c.l.b16 %v2645
    %v2912 = vunpack.c.h.b16 %v2645
    %v2913 = vunpack.c.l.b16 %v2646
    %v2914 = vunpack.c.h.b16 %v2646
    %v2915 = vunpack.c.l.b16 %v2647
    %v2916 = vunpack.c.h.b16 %v2647
    %v2917 = vunpack.c.l.b16 %v2648
    %v2918 = vunpack.c.h.b16 %v2648
    %v2919 = vunpack.c.l.b16 %v2649
    %v2920 = vunpack.c.h.b16 %v2649
    %v2921 = vunpack.c.l.b16 %v2650
    %v2922 = vunpack.c.h.b16 %v2650
    %v2923 = vunpack.c.l.b16 %v2651
    %v2924 = vunpack.c.h.b16 %v2651
    %v2925 = vunpack.c.l.b16 %v2652
    %v2926 = vunpack.c.h.b16 %v2652
    %v2927 = vunpack.c.l.b16 %v2653
    %v2928 = vunpack.c.h.b16 %v2653
    %v2929 = vunpack.c.l.b16 %v2654
    %v2930 = vunpack.c.h.b16 %v2654
    %v2931 = vunpack.c.l.b16 %v2655
    %v2932 = vunpack.c.h.b16 %v2655
    %v2933 = vunpack.c.l.b16 %v2656
    %v2934 = vunpack.c.h.b16 %v2656
    %v2935 = vunpack.c.l.b16 %v2657
    %v2936 = vunpack.c.h.b16 %v2657
    %v2937 = vunpack.c.l.b16 %v2658
    %v2938 = vunpack.c.h.b16 %v2658
    %v2939 = vunpack.c.l.b16 %v2659
    %v2940 = vunpack.c.h.b16 %v2659
    %v2941 = vunpack.c.l.b16 %v2660
    %v2942 = vunpack.c.h.b16 %v2660
    %v2943 = vunpack.c.l.b16 %v2661
    %v2944 = vunpack.c.h.b16 %v2661
    %v2945 = vunpack.c.l.b16 %v2662
    %v2946 = vunpack.c.h.b16 %v2662
    %v2947 = vunpack.c.l.b16 %v2663
    %v2948 = vunpack.c.h.b16 %v2663
    %v2949 = vunpack.c.l.b16 %v2664
    %v2950 = vunpack.c.h.b16 %v2664
    %v2951 = vunpack.c.l.b16 %v2665
    %v2952 = vunpack.c.h.b16 %v2665
    %v2953 = vunpack.c.l.b16 %v2666
    %v2954 = vunpack.c.h.b16 %v2666
    %v2955 = vunpack.c.l.b16 %v2667
    %v2956 = vunpack.c.h.b16 %v2667
    %v2957 = vunpack.c.l.b16 %v2668
    %v2958 = vunpack.c.h.b16 %v2668
    %v2959 = vunpack.c.l.b16 %v2669
    %v2960 = vunpack.c.h.b16 %v2669
    %v2961 = vunpack.c.l.b16 %v2670
    %v2962 = vunpack.c.h.b16 %v2670
    %v2963 = vunpack.c.l.b16 %v2671
    %v2964 = vunpack.c.h.b16 %v2671
    %v2965 = vunpack.c.l.b16 %v2672
    %v2966 = vunpack.c.h.b16 %v2672
    %v2967 = vunpack.c.l.b16 %v2673
    %v2968 = vunpack.c.h.b16 %v2673
    %v2969 = vunpack.c.l.b16 %v2674
    %v2970 = vunpack.c.h.b16 %v2674
    %v2971 = vunpack.c.l.b16 %v2675
    %v2972 = vunpack.c.h.b16 %v2675
    %v2973 = vunpack.c.l.b16 %v2676
    %v2974 = vunpack.c.h.b16 %v2676
    %v2975 = vunpack.c.l.b16 %v2677
    %v2976 = vunpack.c.h.b16 %v2677
    %v2977 = vunpack.c.l.b16 %v2678
    %v2978 = vunpack.c.h.b16 %v2678
    %v2979 = vunpack.c.l.b16 %v2679
    %v2980 = vunpack.c.h.b16 %v2679
    %v2981 = vunpack.c.l.b16 %v2680
    %v2982 = vunpack.c.h.b16 %v2680
    %v2983 = vunpack.c.l.b16 %v2681
    %v2984 = vunpack.c.h.b16 %v2681
    %v2985 = vunpack.c.l.b16 %v2682
    %v2986 = vunpack.c.h.b16 %v2682
    %v2987 = vunpack.c.l.b16 %v2683
    %v2988 = vunpack.c.h.b16 %v2683
    %v2989 = vunpack.c.l.b16 %v2684
    %v2990 = vunpack.c.h.b16 %v2684
    %v2991 = vunpack.c.l.b16 %v2685
    %v2992 = vunpack.c.h.b16 %v2685
    %v2993 = vunpack.c.l.b16 %v2686
    %v2994 = vunpack.c.h.b16 %v2686
    %v2995 = vunpack.c.l.b16 %v2687
    %v2996 = vunpack.c.h.b16 %v2687
    %v2997 = vunpack.c.l.b16 %v2688
    %v2998 = vunpack.c.h.b16 %v2688
    %v2999 = vunpack.c.l.b16 %v2689
    %v3000 = vunpack.c.h.b16 %v2689
    %v3001 = vunpack.c.l.b16 %v2690
    %v3002 = vunpack.c.h.b16 %v2690
    %v3003 = vunpack.c.l.b16 %v2691
    %v3004 = vunpack.c.h.b16 %v2691
    %v3005 = vunpack.c.l.b16 %v2692
    %v3006 = vunpack.c.h.b16 %v2692
    %v3007 = vunpack.c.l.b16 %v2693
    %v3008 = vunpack.c.h.b16 %v2693
    %v3009 = vunpack.c.l.b16 %v2694
    %v3010 = vunpack.c.h.b16 %v2694
    %v3011 = vunpack.c.l.b16 %v2695
    %v3012 = vunpack.c.h.b16 %v2695
    %v3013 = vunpack.c.l.b16 %v2696
    %v3014 = vunpack.c.h.b16 %v2696
    %v3015 = vunpack.c.l.b16 %v2697
    %v3016 = vunpack.c.h.b16 %v2697
    %v3017 = vunpack.c.l.b16 %v2698
    %v3018 = vunpack.c.h.b16 %v2698
    %v3019 = vunpack.c.l.b16 %v2699
    %v3020 = vunpack.c.h.b16 %v2699
    %v3021 = vunpack.c.l.b16 %v2700
    %v3022 = vunpack.c.h.b16 %v2700
    %v3023 = vunpack.c.l.b16 %v2701
    %v3024 = vunpack.c.h.b16 %v2701
    %v3025 = vunpack.c.l.b16 %v2702
    %v3026 = vunpack.c.h.b16 %v2702
    %v3027 = vunpack.c.l.b16 %v2703
    %v3028 = vunpack.c.h.b16 %v2703
    %v3029 = vunpack.c.l.b16 %v2704
    %v3030 = vunpack.c.h.b16 %v2704
    %v3031 = vunpack.c.l.b16 %v2705
    %v3032 = vunpack.c.h.b16 %v2705
    %v3033 = vunpack.c.l.b16 %v2706
    %v3034 = vunpack.c.h.b16 %v2706
    %v3035 = vunpack.c.l.b16 %v2707
    %v3036 = vunpack.c.h.b16 %v2707
    %v3037 = vunpack.c.l.b16 %v2708
    %v3038 = vunpack.c.h.b16 %v2708
    %v3039 = vunpack.c.l.b16 %v2709
    %v3040 = vunpack.c.h.b16 %v2709
    %v3041 = vunpack.c.l.b16 %v2710
    %v3042 = vunpack.c.h.b16 %v2710
    %v3043 = vunpack.c.l.b16 %v2711
    %v3044 = vunpack.c.h.b16 %v2711
    %v3045 = vunpack.c.l.b16 %v2712
    %v3046 = vunpack.c.h.b16 %v2712
    %v3047 = vunpack.c.l.b16 %v2713
    %v3048 = vunpack.c.h.b16 %v2713
    %v3049 = vunpack.c.l.b16 %v2714
    %v3050 = vunpack.c.h.b16 %v2714
    %v3051 = vunpack.c.l.b16 %v2715
    %v3052 = vunpack.c.h.b16 %v2715
    %v3053 = vunpack.c.l.b16 %v2716
    %v3054 = vunpack.c.h.b16 %v2716
    %v3055 = vunpack.c.l.b16 %v2717
    %v3056 = vunpack.c.h.b16 %v2717
    %v3057 = vunpack.c.l.b16 %v2718
    %v3058 = vunpack.c.h.b16 %v2718
    %v3059 = vunpack.c.l.b16 %v2719
    %v3060 = vunpack.c.h.b16 %v2719
    %v3061 = vunpack.c.l.b16 %v2720
    %v3062 = vunpack.c.h.b16 %v2720
    %v3063 = vunpack.c.l.b16 %v2721
    %v3064 = vunpack.c.h.b16 %v2721
    %v3065 = vunpack.c.l.b16 %v2722
    %v3066 = vunpack.c.h.b16 %v2722
    %v3067 = vunpack.c.l.b16 %v2723
    %v3068 = vunpack.c.h.b16 %v2723
    %v3069 = vunpack.c.l.b16 %v2724
    %v3070 = vunpack.c.h.b16 %v2724
    %v3071 = vunpack.c.l.b16 %v2725
    %v3072 = vunpack.c.h.b16 %v2725
    %v3073 = vunpack.c.l.b16 %v2726
    %v3074 = vunpack.c.h.b16 %v2726
    %v3075 = vunpack.c.l.b16 %v2727
    %v3076 = vunpack.c.h.b16 %v2727
    %v3077 = vunpack.c.l.b16 %v2728
    %v3078 = vunpack.c.h.b16 %v2728
    %v3079 = vunpack.c.l.b16 %v2729
    %v3080 = vunpack.c.h.b16 %v2729
    %v3081 = vunpack.c.l.b16 %v2730
    %v3082 = vunpack.c.h.b16 %v2730
    %v3083 = vunpack.c.l.b16 %v2731
    %v3084 = vunpack.c.h.b16 %v2731
    %v3085 = vunpack.c.l.b16 %v2732
    %v3086 = vunpack.c.h.b16 %v2732
    %v3087 = vunpack.c.l.b16 %v2733
    %v3088 = vunpack.c.h.b16 %v2733
    %v3089 = vunpack.c.l.b16 %v2734
    %v3090 = vunpack.c.h.b16 %v2734
    %v3091 = vunpack.c.l.b16 %v2735
    %v3092 = vunpack.c.h.b16 %v2735
    %v3093 = vunpack.c.l.b16 %v2736
    %v3094 = vunpack.c.h.b16 %v2736
    %v3095 = vunpack.c.l.b16 %v2737
    %v3096 = vunpack.c.h.b16 %v2737
    %v3097 = vunpack.c.l.b16 %v2738
    %v3098 = vunpack.c.h.b16 %v2738
    %v3099 = vunpack.c.l.b16 %v2739
    %v3100 = vunpack.c.h.b16 %v2739
    %v3101 = vunpack.c.l.b16 %v2740
    %v3102 = vunpack.c.h.b16 %v2740
    %v3103 = vunpack.c.l.b16 %v2741
    %v3104 = vunpack.c.h.b16 %v2741
    %v3105 = vunpack.c.l.b16 %v2742
    %v3106 = vunpack.c.h.b16 %v2742
    %v3107 = vunpack.c.l.b16 %v2743
    %v3108 = vunpack.c.h.b16 %v2743
    %v3109 = vunpack.c.l.b16 %v2744
    %v3110 = vunpack.c.h.b16 %v2744
    %v3111 = vunpack.c.l.b16 %v2745
    %v3112 = vunpack.c.h.b16 %v2745
    %v3113 = vunpack.c.l.b16 %v2746
    %v3114 = vunpack.c.h.b16 %v2746
    %v3115 = vunpack.c.l.b16 %v2747
    %v3116 = vunpack.c.h.b16 %v2747
    %v3117 = vunpack.c.l.b16 %v2748
    %v3118 = vunpack.c.h.b16 %v2748
    %v3119 = vunpack.c.l.b16 %v2749
    %v3120 = vunpack.c.h.b16 %v2749
    %v3121 = vunpack.c.l.b16 %v2750
    %v3122 = vunpack.c.h.b16 %v2750
    %v3123 = vunpack.c.l.b16 %v2751
    %v3124 = vunpack.c.h.b16 %v2751
    %v3125 = vunpack.c.l.b16 %v2752
    %v3126 = vunpack.c.h.b16 %v2752
    %v3127 = vunpack.c.l.b16 %v2753
    %v3128 = vunpack.c.h.b16 %v2753
    %v3129 = vunpack.c.l.b16 %v2754
    %v3130 = vunpack.c.h.b16 %v2754
    %v3131 = vunpack.c.l.b16 %v2755
    %v3132 = vunpack.c.h.b16 %v2755
    %v3133 = vunpack.c.l.b16 %v2756
    %v3134 = vunpack.c.h.b16 %v2756
    %v3135 = vunpack.c.l.b16 %v2757
    %v3136 = vunpack.c.h.b16 %v2757
    %v3137 = vunpack.c.l.b16 %v2758
    %v3138 = vunpack.c.h.b16 %v2758
    %v3139 = vunpack.c.l.b16 %v2759
    %v3140 = vunpack.c.h.b16 %v2759
    %v3141 = vunpack.c.l.b16 %v2760
    %v3142 = vunpack.c.h.b16 %v2760
    %v3143 = vunpack.c.l.b16 %v2761
    %v3144 = vunpack.c.h.b16 %v2761
    %v3145 = vunpack.c.l.b16 %v2762
    %v3146 = vunpack.c.h.b16 %v2762
    %v3147 = vunpack.c.l.b16 %v2763
    %v3148 = vunpack.c.h.b16 %v2763
    %v3149 = vunpack.c.l.b16 %v2764
    %v3150 = vunpack.c.h.b16 %v2764
    %v3151 = vunpack.c.l.b16 %v2765
    %v3152 = vunpack.c.h.b16 %v2765
    %v3153 = vunpack.c.l.b16 %v2766
    %v3154 = vunpack.c.h.b16 %v2766
    %v3155 = vunpack.c.l.b16 %v2767
    %v3156 = vunpack.c.h.b16 %v2767
    %v3157 = vunpack.c.l.b16 %v2768
    %v3158 = vunpack.c.h.b16 %v2768
    %v3159 = vunpack.c.l.b16 %v2769
    %v3160 = vunpack.c.h.b16 %v2769
    %v3161 = vunpack.c.l.b16 %v2770
    %v3162 = vunpack.c.h.b16 %v2770
    %v3163 = vunpack.c.l.b16 %v2771
    %v3164 = vunpack.c.h.b16 %v2771
    %v3165 = vunpack.c.l.b16 %v2772
    %v3166 = vunpack.c.h.b16 %v2772
    %v3167 = vpack.c.b16 %v2915, %v2911
    %v3168 = vpack.c.b16 %v2916, %v2912
    %v3169 = vpack.c.b16 %v2917, %v2913
    %v3170 = vpack.c.b16 %v2918, %v2914
    %v3171 = vpack.c.b16 %v2923, %v2919
    %v3172 = vpack.c.b16 %v2924, %v2920
    %v3173 = vpack.c.b16 %v2925, %v2921
    %v3174 = vpack.c.b16 %v2926, %v2922
    %v3175 = vpack.c.b16 %v2931, %v2927
    %v3176 = vpack.c.b16 %v2932, %v2928
    %v3177 = vpack.c.b16 %v2933, %v2929
    %v3178 = vpack.c.b16 %v2934, %v2930
    %v3179 = vpack.c.b16 %v2939, %v2935
    %v3180 = vpack.c.b16 %v2940, %v2936
    %v3181 = vpack.c.b16 %v2941, %v2937
    %v3182 = vpack.c.b16 %v2942, %v2938
    %v3183 = vpack.c.b16 %v2947, %v2943
    %v3184 = vpack.c.b16 %v2948, %v2944
    %v3185 = vpack.c.b16 %v2949, %v2945
    %v3186 = vpack.c.b16 %v2950, %v2946
    %v3187 = vpack.c.b16 %v2955, %v2951
    %v3188 = vpack.c.b16 %v2956, %v2952
    %v3189 = vpack.c.b16 %v2957, %v2953
    %v3190 = vpack.c.b16 %v2958, %v2954
    %v3191 = vpack.c.b16 %v2963, %v2959
    %v3192 = vpack.c.b16 %v2964, %v2960
    %v3193 = vpack.c.b16 %v2965, %v2961
    %v3194 = vpack.c.b16 %v2966, %v2962
    %v3195 = vpack.c.b16 %v2971, %v2967
    %v3196 = vpack.c.b16 %v2972, %v2968
    %v3197 = vpack.c.b16 %v2973, %v2969
    %v3198 = vpack.c.b16 %v2974, %v2970
    %v3199 = vpack.c.b16 %v2979, %v2975
    %v3200 = vpack.c.b16 %v2980, %v2976
    %v3201 = vpack.c.b16 %v2981, %v2977
    %v3202 = vpack.c.b16 %v2982, %v2978
    %v3203 = vpack.c.b16 %v2987, %v2983
    %v3204 = vpack.c.b16 %v2988, %v2984
    %v3205 = vpack.c.b16 %v2989, %v2985
    %v3206 = vpack.c.b16 %v2990, %v2986
    %v3207 = vpack.c.b16 %v2995, %v2991
    %v3208 = vpack.c.b16 %v2996, %v2992
    %v3209 = vpack.c.b16 %v2997, %v2993
    %v3210 = vpack.c.b16 %v2998, %v2994
    %v3211 = vpack.c.b16 %v3003, %v2999
    %v3212 = vpack.c.b16 %v3004, %v3000
    %v3213 = vpack.c.b16 %v3005, %v3001
    %v3214 = vpack.c.b16 %v3006, %v3002
    %v3215 = vpack.c.b16 %v3011, %v3007
    %v3216 = vpack.c.b16 %v3012, %v3008
    %v3217 = vpack.c.b16 %v3013, %v3009
    %v3218 = vpack.c.b16 %v3014, %v3010
    %v3219 = vpack.c.b16 %v3019, %v3015
    %v3220 = vpack.c.b16 %v3020, %v3016
    %v3221 = vpack.c.b16 %v3021, %v3017
    %v3222 = vpack.c.b16 %v3022, %v3018
    %v3223 = vpack.c.b16 %v3027, %v3023
    %v3224 = vpack.c.b16 %v3028, %v3024
    %v3225 = vpack.c.b16 %v3029, %v3025
    %v3226 = vpack.c.b16 %v3030, %v3026
    %v3227 = vpack.c.b16 %v3035, %v3031
    %v3228 = vpack.c.b16 %v3036, %v3032
    %v3229 = vpack.c.b16 %v3037, %v3033
    %v3230 = vpack.c.b16 %v3038, %v3034
    %v3231 = vpack.c.b16 %v3043, %v3039
    %v3232 = vpack.c.b16 %v3044, %v3040
    %v3233 = vpack.c.b16 %v3045, %v3041
    %v3234 = vpack.c.b16 %v3046, %v3042
    %v3235 = vpack.c.b16 %v3051, %v3047
    %v3236 = vpack.c.b16 %v3052, %v3048
    %v3237 = vpack.c.b16 %v3053, %v3049
    %v3238 = vpack.c.b16 %v3054, %v3050
    %v3239 = vpack.c.b16 %v3059, %v3055
    %v3240 = vpack.c.b16 %v3060, %v3056
    %v3241 = vpack.c.b16 %v3061, %v3057
    %v3242 = vpack.c.b16 %v3062, %v3058
    %v3243 = vpack.c.b16 %v3067, %v3063
    %v3244 = vpack.c.b16 %v3068, %v3064
    %v3245 = vpack.c.b16 %v3069, %v3065
    %v3246 = vpack.c.b16 %v3070, %v3066
    %v3247 = vpack.c.b16 %v3075, %v3071
    %v3248 = vpack.c.b16 %v3076, %v3072
    %v3249 = vpack.c.b16 %v3077, %v3073
    %v3250 = vpack.c.b16 %v3078, %v3074
    %v3251 = vpack.c.b16 %v3083, %v3079
    %v3252 = vpack.c.b16 %v3084, %v3080
    %v3253 = vpack.c.b16 %v3085, %v3081
    %v3254 = vpack.c.b16 %v3086, %v3082
    %v3255 = vpack.c.b16 %v3091, %v3087
    %v3256 = vpack.c.b16 %v3092, %v3088
    %v3257 = vpack.c.b16 %v3093, %v3089
    %v3258 = vpack.c.b16 %v3094, %v3090
    %v3259 = vpack.c.b16 %v3099, %v3095
    %v3260 = vpack.c.b16 %v3100, %v3096
    %v3261 = vpack.c.b16 %v3101, %v3097
    %v3262 = vpack.c.b16 %v3102, %v3098
    %v3263 = vpack.c.b16 %v3107, %v3103
    %v3264 = vpack.c.b16 %v3108, %v3104
    %v3265 = vpack.c.b16 %v3109, %v3105
    %v3266 = vpack.c.b16 %v3110, %v3106
    %v3267 = vpack.c.b16 %v3115, %v3111
    %v3268 = vpack.c.b16 %v3116, %v3112
    %v3269 = vpack.c.b16 %v3117, %v3113
    %v3270 = vpack.c.b16 %v3118, %v3114
    %v3271 = vpack.c.b16 %v3123, %v3119
    %v3272 = vpack.c.b16 %v3124, %v3120
    %v3273 = vpack.c.b16 %v3125, %v3121
    %v3274 = vpack.c.b16 %v3126, %v3122
    %v3275 = vpack.c.b16 %v3131, %v3127
    %v3276 = vpack.c.b16 %v3132, %v3128
    %v3277 = vpack.c.b16 %v3133, %v3129
    %v3278 = vpack.c.b16 %v3134, %v3130
    %v3279 = vpack.c.b16 %v3139, %v3135
    %v3280 = vpack.c.b16 %v3140, %v3136
    %v3281 = vpack.c.b16 %v3141, %v3137
    %v3282 = vpack.c.b16 %v3142, %v3138
    %v3283 = vpack.c.b16 %v3147, %v3143
    %v3284 = vpack.c.b16 %v3148, %v3144
    %v3285 = vpack.c.b16 %v3149, %v3145
    %v3286 = vpack.c.b16 %v3150, %v3146
    %v3287 = vpack.c.b16 %v3155, %v3151
    %v3288 = vpack.c.b16 %v3156, %v3152
    %v3289 = vpack.c.b16 %v3157, %v3153
    %v3290 = vpack.c.b16 %v3158, %v3154
    %v3291 = vpack.c.b16 %v3163, %v3159
    %v3292 = vpack.c.b16 %v3164, %v3160
    %v3293 = vpack.c.b16 %v3165, %v3161
    %v3294 = vpack.c.b16 %v3166, %v3162
    %3423 = vmatpush.bf16.msra.mxu0 %v3195
    %3424 = vmatpush.bf16.msra.mxu0 %v3191
    %3425 = vmatpush.bf16.msra.mxu0 %v3187
    %3426 = vmatpush.bf16.msra.mxu0 %v3183
    %3427 = vmatpush.bf16.msra.mxu0 %v3179
    %3428 = vmatpush.bf16.msra.mxu0 %v3175
    %3429 = vmatpush.bf16.msra.mxu0 %v3171
    %3430 = vmatpush.bf16.msra.mxu0 %v3167
    %3431 = vmatmul.bf16.gmra.mxu0 %v2633
    %v3432 = vpop.f32.mrf.mxu0
    %v3433 = vadd.f32 %v2775, %v3432
    %v3434 = vpop.f32.mrf.mxu0
    %v3435 = vadd.f32 %v2775, %v3434
    %3436 = vmatmul.bf16.gmra.mxu0 %v2637
    %v3437 = vpop.f32.mrf.mxu0
    %v3438 = vadd.f32 %v2775, %v3437
    %v3439 = vpop.f32.mrf.mxu0
    %v3440 = vadd.f32 %v2775, %v3439
    %3441 = vmatmul.bf16.gmra.mxu0 %v2641
    %v3442 = vpop.f32.mrf.mxu0
    %v3443 = vadd.f32 %v2775, %v3442
    %v3444 = vpop.f32.mrf.mxu0
    %v3445 = vadd.f32 %v2775, %v3444
    %3446 = vdwg.mxu0
    %3447 = vmatpush.bf16.msra.mxu0 %v3227
    %3448 = vmatpush.bf16.msra.mxu0 %v3223
    %3449 = vmatpush.bf16.msra.mxu0 %v3219
    %3450 = vmatpush.bf16.msra.mxu0 %v3215
    %3451 = vmatpush.bf16.msra.mxu0 %v3211
    %3452 = vmatpush.bf16.msra.mxu0 %v3207
    %3453 = vmatpush.bf16.msra.mxu0 %v3203
    %3454 = vmatpush.bf16.msra.mxu0 %v3199
    %3455 = vmatmul.bf16.gmra.mxu0 %v2634
    %v3456 = vpop.f32.mrf.mxu0
    %v3457 = vadd.f32 %v3433, %v3456
    %v3458 = vpop.f32.mrf.mxu0
    %v3459 = vadd.f32 %v3435, %v3458
    %3460 = vmatmul.bf16.gmra.mxu0 %v2638
    %v3461 = vpop.f32.mrf.mxu0
    %v3462 = vadd.f32 %v3438, %v3461
    %v3463 = vpop.f32.mrf.mxu0
    %v3464 = vadd.f32 %v3440, %v3463
    %3465 = vmatmul.bf16.gmra.mxu0 %v2642
    %v3466 = vpop.f32.mrf.mxu0
    %v3467 = vadd.f32 %v3443, %v3466
    %v3468 = vpop.f32.mrf.mxu0
    %v3469 = vadd.f32 %v3445, %v3468
    %3470 = vdwg.mxu0
    %3471 = vmatpush.bf16.msra.mxu0 %v3259
    %3472 = vmatpush.bf16.msra.mxu0 %v3255
    %3473 = vmatpush.bf16.msra.mxu0 %v3251
    %3474 = vmatpush.bf16.msra.mxu0 %v3247
    %3475 = vmatpush.bf16.msra.mxu0 %v3243
    %3476 = vmatpush.bf16.msra.mxu0 %v3239
    %3477 = vmatpush.bf16.msra.mxu0 %v3235
    %3478 = vmatpush.bf16.msra.mxu0 %v3231
    %3479 = vmatmul.bf16.gmra.mxu0 %v2635
    %v3480 = vpop.f32.mrf.mxu0
    %v3481 = vadd.f32 %v3457, %v3480
    %v3482 = vpop.f32.mrf.mxu0
    %v3483 = vadd.f32 %v3459, %v3482
    %3484 = vmatmul.bf16.gmra.mxu0 %v2639
    %v3485 = vpop.f32.mrf.mxu0
    %v3486 = vadd.f32 %v3462, %v3485
    %v3487 = vpop.f32.mrf.mxu0
    %v3488 = vadd.f32 %v3464, %v3487
    %3489 = vmatmul.bf16.gmra.mxu0 %v2643
    %v3490 = vpop.f32.mrf.mxu0
    %v3491 = vadd.f32 %v3467, %v3490
    %v3492 = vpop.f32.mrf.mxu0
    %v3493 = vadd.f32 %v3469, %v3492
    %3494 = vdwg.mxu0
    %3495 = vmatpush.bf16.msra.mxu0 %v3291
    %3496 = vmatpush.bf16.msra.mxu0 %v3287
    %3497 = vmatpush.bf16.msra.mxu0 %v3283
    %3498 = vmatpush.bf16.msra.mxu0 %v3279
    %3499 = vmatpush.bf16.msra.mxu0 %v3275
    %3500 = vmatpush.bf16.msra.mxu0 %v3271
    %3501 = vmatpush.bf16.msra.mxu0 %v3267
    %3502 = vmatpush.bf16.msra.mxu0 %v3263
    %3503 = vmatmul.bf16.gmra.mxu0 %v2636
    %v3504 = vpop.f32.mrf.mxu0
    %v3505 = vadd.f32 %v3481, %v3504
    %v3506 = vpop.f32.mrf.mxu0
    %v3507 = vadd.f32 %v3483, %v3506
    %3508 = vmatmul.bf16.gmra.mxu0 %v2640
    %v3509 = vpop.f32.mrf.mxu0
    %v3510 = vadd.f32 %v3486, %v3509
    %v3511 = vpop.f32.mrf.mxu0
    %v3512 = vadd.f32 %v3488, %v3511
    %3513 = vmatmul.bf16.gmra.mxu0 %v2644
    %v3514 = vpop.f32.mrf.mxu0
    %v3515 = vadd.f32 %v3491, %v3514
    %v3516 = vpop.f32.mrf.mxu0
    %v3517 = vadd.f32 %v3493, %v3516
    %3518 = vdwg.mxu0
    %3519 = vmatpush.bf16.msra.mxu0 %v3196
    %3520 = vmatpush.bf16.msra.mxu0 %v3192
    %3521 = vmatpush.bf16.msra.mxu0 %v3188
    %3522 = vmatpush.bf16.msra.mxu0 %v3184
    %3523 = vmatpush.bf16.msra.mxu0 %v3180
    %3524 = vmatpush.bf16.msra.mxu0 %v3176
    %3525 = vmatpush.bf16.msra.mxu0 %v3172
    %3526 = vmatpush.bf16.msra.mxu0 %v3168
    %3527 = vmatmul.bf16.gmra.mxu0 %v2633
    %v3528 = vpop.f32.mrf.mxu0
    %v3529 = vadd.f32 %v2776, %v3528
    %v3530 = vpop.f32.mrf.mxu0
    %v3531 = vadd.f32 %v2776, %v3530
    %3532 = vmatmul.bf16.gmra.mxu0 %v2637
    %v3533 = vpop.f32.mrf.mxu0
    %v3534 = vadd.f32 %v2776, %v3533
    %v3535 = vpop.f32.mrf.mxu0
    %v3536 = vadd.f32 %v2776, %v3535
    %3537 = vmatmul.bf16.gmra.mxu0 %v2641
    %v3538 = vpop.f32.mrf.mxu0
    %v3539 = vadd.f32 %v2776, %v3538
    %v3540 = vpop.f32.mrf.mxu0
    %v3541 = vadd.f32 %v2776, %v3540
    %3542 = vdwg.mxu0
    %3543 = vmatpush.bf16.msra.mxu0 %v3228
    %3544 = vmatpush.bf16.msra.mxu0 %v3224
    %3545 = vmatpush.bf16.msra.mxu0 %v3220
    %3546 = vmatpush.bf16.msra.mxu0 %v3216
    %3547 = vmatpush.bf16.msra.mxu0 %v3212
    %3548 = vmatpush.bf16.msra.mxu0 %v3208
    %3549 = vmatpush.bf16.msra.mxu0 %v3204
    %3550 = vmatpush.bf16.msra.mxu0 %v3200
    %3551 = vmatmul.bf16.gmra.mxu0 %v2634
    %v3552 = vpop.f32.mrf.mxu0
    %v3553 = vadd.f32 %v3529, %v3552
    %v3554 = vpop.f32.mrf.mxu0
    %v3555 = vadd.f32 %v3531, %v3554
    %3556 = vmatmul.bf16.gmra.mxu0 %v2638
    %v3557 = vpop.f32.mrf.mxu0
    %v3558 = vadd.f32 %v3534, %v3557
    %v3559 = vpop.f32.mrf.mxu0
    %v3560 = vadd.f32 %v3536, %v3559
    %3561 = vmatmul.bf16.gmra.mxu0 %v2642
    %v3562 = vpop.f32.mrf.mxu0
    %v3563 = vadd.f32 %v3539, %v3562
    %v3564 = vpop.f32.mrf.mxu0
    %v3565 = vadd.f32 %v3541, %v3564
    %3566 = vdwg.mxu0
    %3567 = vmatpush.bf16.msra.mxu0 %v3260
    %3568 = vmatpush.bf16.msra.mxu0 %v3256
    %3569 = vmatpush.bf16.msra.mxu0 %v3252
    %3570 = vmatpush.bf16.msra.mxu0 %v3248
    %3571 = vmatpush.bf16.msra.mxu0 %v3244
    %3572 = vmatpush.bf16.msra.mxu0 %v3240
    %3573 = vmatpush.bf16.msra.mxu0 %v3236
    %3574 = vmatpush.bf16.msra.mxu0 %v3232
    %3575 = vmatmul.bf16.gmra.mxu0 %v2635
    %v3576 = vpop.f32.mrf.mxu0
    %v3577 = vadd.f32 %v3553, %v3576
    %v3578 = vpop.f32.mrf.mxu0
    %v3579 = vadd.f32 %v3555, %v3578
    %3580 = vmatmul.bf16.gmra.mxu0 %v2639
    %v3581 = vpop.f32.mrf.mxu0
    %v3582 = vadd.f32 %v3558, %v3581
    %v3583 = vpop.f32.mrf.mxu0
    %v3584 = vadd.f32 %v3560, %v3583
    %3585 = vmatmul.bf16.gmra.mxu0 %v2643
    %v3586 = vpop.f32.mrf.mxu0
    %v3587 = vadd.f32 %v3563, %v3586
    %v3588 = vpop.f32.mrf.mxu0
    %v3589 = vadd.f32 %v3565, %v3588
    %3590 = vdwg.mxu0
    %3591 = vmatpush.bf16.msra.mxu0 %v3292
    %3592 = vmatpush.bf16.msra.mxu0 %v3288
    %3593 = vmatpush.bf16.msra.mxu0 %v3284
    %3594 = vmatpush.bf16.msra.mxu0 %v3280
    %3595 = vmatpush.bf16.msra.mxu0 %v3276
    %3596 = vmatpush.bf16.msra.mxu0 %v3272
    %3597 = vmatpush.bf16.msra.mxu0 %v3268
    %3598 = vmatpush.bf16.msra.mxu0 %v3264
    %3599 = vmatmul.bf16.gmra.mxu0 %v2636
    %v3600 = vpop.f32.mrf.mxu0
    %v3601 = vadd.f32 %v3577, %v3600
    %v3602 = vpop.f32.mrf.mxu0
    %v3603 = vadd.f32 %v3579, %v3602
    %3604 = vmatmul.bf16.gmra.mxu0 %v2640
    %v3605 = vpop.f32.mrf.mxu0
    %v3606 = vadd.f32 %v3582, %v3605
    %v3607 = vpop.f32.mrf.mxu0
    %v3608 = vadd.f32 %v3584, %v3607
    %3609 = vmatmul.bf16.gmra.mxu0 %v2644
    %v3610 = vpop.f32.mrf.mxu0
    %v3611 = vadd.f32 %v3587, %v3610
    %v3612 = vpop.f32.mrf.mxu0
    %v3613 = vadd.f32 %v3589, %v3612
    %3614 = vdwg.mxu0
    %3615 = vmatpush.bf16.msra.mxu0 %v3197
    %3616 = vmatpush.bf16.msra.mxu0 %v3193
    %3617 = vmatpush.bf16.msra.mxu0 %v3189
    %3618 = vmatpush.bf16.msra.mxu0 %v3185
    %3619 = vmatpush.bf16.msra.mxu0 %v3181
    %3620 = vmatpush.bf16.msra.mxu0 %v3177
    %3621 = vmatpush.bf16.msra.mxu0 %v3173
    %3622 = vmatpush.bf16.msra.mxu0 %v3169
    %3623 = vmatmul.bf16.gmra.mxu0 %v2633
    %v3624 = vpop.f32.mrf.mxu0
    %v3625 = vadd.f32 %v2777, %v3624
    %v3626 = vpop.f32.mrf.mxu0
    %v3627 = vadd.f32 %v2777, %v3626
    %3628 = vmatmul.bf16.gmra.mxu0 %v2637
    %v3629 = vpop.f32.mrf.mxu0
    %v3630 = vadd.f32 %v2777, %v3629
    %v3631 = vpop.f32.mrf.mxu0
    %v3632 = vadd.f32 %v2777, %v3631
    %3633 = vmatmul.bf16.gmra.mxu0 %v2641
    %v3634 = vpop.f32.mrf.mxu0
    %v3635 = vadd.f32 %v2777, %v3634
    %v3636 = vpop.f32.mrf.mxu0
    %v3637 = vadd.f32 %v2777, %v3636
    %3638 = vdwg.mxu0
    %3639 = vmatpush.bf16.msra.mxu0 %v3229
    %3640 = vmatpush.bf16.msra.mxu0 %v3225
    %3641 = vmatpush.bf16.msra.mxu0 %v3221
    %3642 = vmatpush.bf16.msra.mxu0 %v3217
    %3643 = vmatpush.bf16.msra.mxu0 %v3213
    %3644 = vmatpush.bf16.msra.mxu0 %v3209
    %3645 = vmatpush.bf16.msra.mxu0 %v3205
    %3646 = vmatpush.bf16.msra.mxu0 %v3201
    %3647 = vmatmul.bf16.gmra.mxu0 %v2634
    %v3648 = vpop.f32.mrf.mxu0
    %v3649 = vadd.f32 %v3625, %v3648
    %v3650 = vpop.f32.mrf.mxu0
    %v3651 = vadd.f32 %v3627, %v3650
    %3652 = vmatmul.bf16.gmra.mxu0 %v2638
    %v3653 = vpop.f32.mrf.mxu0
    %v3654 = vadd.f32 %v3630, %v3653
    %v3655 = vpop.f32.mrf.mxu0
    %v3656 = vadd.f32 %v3632, %v3655
    %3657 = vmatmul.bf16.gmra.mxu0 %v2642
    %v3658 = vpop.f32.mrf.mxu0
    %v3659 = vadd.f32 %v3635, %v3658
    %v3660 = vpop.f32.mrf.mxu0
    %v3661 = vadd.f32 %v3637, %v3660
    %3662 = vdwg.mxu0
    %3663 = vmatpush.bf16.msra.mxu0 %v3261
    %3664 = vmatpush.bf16.msra.mxu0 %v3257
    %3665 = vmatpush.bf16.msra.mxu0 %v3253
    %3666 = vmatpush.bf16.msra.mxu0 %v3249
    %3667 = vmatpush.bf16.msra.mxu0 %v3245
    %3668 = vmatpush.bf16.msra.mxu0 %v3241
    %3669 = vmatpush.bf16.msra.mxu0 %v3237
    %3670 = vmatpush.bf16.msra.mxu0 %v3233
    %3671 = vmatmul.bf16.gmra.mxu0 %v2635
    %v3672 = vpop.f32.mrf.mxu0
    %v3673 = vadd.f32 %v3649, %v3672
    %v3674 = vpop.f32.mrf.mxu0
    %v3675 = vadd.f32 %v3651, %v3674
    %3676 = vmatmul.bf16.gmra.mxu0 %v2639
    %v3677 = vpop.f32.mrf.mxu0
    %v3678 = vadd.f32 %v3654, %v3677
    %v3679 = vpop.f32.mrf.mxu0
    %v3680 = vadd.f32 %v3656, %v3679
    %3681 = vmatmul.bf16.gmra.mxu0 %v2643
    %v3682 = vpop.f32.mrf.mxu0
    %v3683 = vadd.f32 %v3659, %v3682
    %v3684 = vpop.f32.mrf.mxu0
    %v3685 = vadd.f32 %v3661, %v3684
    %3686 = vdwg.mxu0
    %3687 = vmatpush.bf16.msra.mxu0 %v3293
    %3688 = vmatpush.bf16.msra.mxu0 %v3289
    %3689 = vmatpush.bf16.msra.mxu0 %v3285
    %3690 = vmatpush.bf16.msra.mxu0 %v3281
    %3691 = vmatpush.bf16.msra.mxu0 %v3277
    %3692 = vmatpush.bf16.msra.mxu0 %v3273
    %3693 = vmatpush.bf16.msra.mxu0 %v3269
    %3694 = vmatpush.bf16.msra.mxu0 %v3265
    %3695 = vmatmul.bf16.gmra.mxu0 %v2636
    %v3696 = vpop.f32.mrf.mxu0
    %v3697 = vadd.f32 %v3673, %v3696
    %v3698 = vpop.f32.mrf.mxu0
    %v3699 = vadd.f32 %v3675, %v3698
    %3700 = vmatmul.bf16.gmra.mxu0 %v2640
    %v3701 = vpop.f32.mrf.mxu0
    %v3702 = vadd.f32 %v3678, %v3701
    %v3703 = vpop.f32.mrf.mxu0
    %v3704 = vadd.f32 %v3680, %v3703
    %3705 = vmatmul.bf16.gmra.mxu0 %v2644
    %v3706 = vpop.f32.mrf.mxu0
    %v3707 = vadd.f32 %v3683, %v3706
    %v3708 = vpop.f32.mrf.mxu0
    %v3709 = vadd.f32 %v3685, %v3708
    %3710 = vdwg.mxu0
    %3711 = vmatpush.bf16.msra.mxu0 %v3198
    %3712 = vmatpush.bf16.msra.mxu0 %v3194
    %3713 = vmatpush.bf16.msra.mxu0 %v3190
    %3714 = vmatpush.bf16.msra.mxu0 %v3186
    %3715 = vmatpush.bf16.msra.mxu0 %v3182
    %3716 = vmatpush.bf16.msra.mxu0 %v3178
    %3717 = vmatpush.bf16.msra.mxu0 %v3174
    %3718 = vmatpush.bf16.msra.mxu0 %v3170
    %3719 = vmatmul.bf16.gmra.mxu0 %v2633
    %v3720 = vpop.f32.mrf.mxu0
    %v3721 = vadd.f32 %v2778, %v3720
    %v3722 = vpop.f32.mrf.mxu0
    %v3723 = vadd.f32 %v2778, %v3722
    %3724 = vmatmul.bf16.gmra.mxu0 %v2637
    %v3725 = vpop.f32.mrf.mxu0
    %v3726 = vadd.f32 %v2778, %v3725
    %v3727 = vpop.f32.mrf.mxu0
    %v3728 = vadd.f32 %v2778, %v3727
    %3729 = vmatmul.bf16.gmra.mxu0 %v2641
    %v3730 = vpop.f32.mrf.mxu0
    %v3731 = vadd.f32 %v2778, %v3730
    %v3732 = vpop.f32.mrf.mxu0
    %v3733 = vadd.f32 %v2778, %v3732
    %3734 = vdwg.mxu0
    %3735 = vmatpush.bf16.msra.mxu0 %v3230
    %3736 = vmatpush.bf16.msra.mxu0 %v3226
    %3737 = vmatpush.bf16.msra.mxu0 %v3222
    %3738 = vmatpush.bf16.msra.mxu0 %v3218
    %3739 = vmatpush.bf16.msra.mxu0 %v3214
    %3740 = vmatpush.bf16.msra.mxu0 %v3210
    %3741 = vmatpush.bf16.msra.mxu0 %v3206
    %3742 = vmatpush.bf16.msra.mxu0 %v3202
    %3743 = vmatmul.bf16.gmra.mxu0 %v2634
    %v3744 = vpop.f32.mrf.mxu0
    %v3745 = vadd.f32 %v3721, %v3744
    %v3746 = vpop.f32.mrf.mxu0
    %v3747 = vadd.f32 %v3723, %v3746
    %3748 = vmatmul.bf16.gmra.mxu0 %v2638
    %v3749 = vpop.f32.mrf.mxu0
    %v3750 = vadd.f32 %v3726, %v3749
    %v3751 = vpop.f32.mrf.mxu0
    %v3752 = vadd.f32 %v3728, %v3751
    %3753 = vmatmul.bf16.gmra.mxu0 %v2642
    %v3754 = vpop.f32.mrf.mxu0
    %v3755 = vadd.f32 %v3731, %v3754
    %v3756 = vpop.f32.mrf.mxu0
    %v3757 = vadd.f32 %v3733, %v3756
    %3758 = vdwg.mxu0
    %3759 = vmatpush.bf16.msra.mxu0 %v3262
    %3760 = vmatpush.bf16.msra.mxu0 %v3258
    %3761 = vmatpush.bf16.msra.mxu0 %v3254
    %3762 = vmatpush.bf16.msra.mxu0 %v3250
    %3763 = vmatpush.bf16.msra.mxu0 %v3246
    %3764 = vmatpush.bf16.msra.mxu0 %v3242
    %3765 = vmatpush.bf16.msra.mxu0 %v3238
    %3766 = vmatpush.bf16.msra.mxu0 %v3234
    %3767 = vmatmul.bf16.gmra.mxu0 %v2635
    %v3768 = vpop.f32.mrf.mxu0
    %v3769 = vadd.f32 %v3745, %v3768
    %v3770 = vpop.f32.mrf.mxu0
    %v3771 = vadd.f32 %v3747, %v3770
    %3772 = vmatmul.bf16.gmra.mxu0 %v2639
    %v3773 = vpop.f32.mrf.mxu0
    %v3774 = vadd.f32 %v3750, %v3773
    %v3775 = vpop.f32.mrf.mxu0
    %v3776 = vadd.f32 %v3752, %v3775
    %3777 = vmatmul.bf16.gmra.mxu0 %v2643
    %v3778 = vpop.f32.mrf.mxu0
    %v3779 = vadd.f32 %v3755, %v3778
    %v3780 = vpop.f32.mrf.mxu0
    %v3781 = vadd.f32 %v3757, %v3780
    %3782 = vdwg.mxu0
    %3783 = vmatpush.bf16.msra.mxu0 %v3294
    %3784 = vmatpush.bf16.msra.mxu0 %v3290
    %3785 = vmatpush.bf16.msra.mxu0 %v3286
    %3786 = vmatpush.bf16.msra.mxu0 %v3282
    %3787 = vmatpush.bf16.msra.mxu0 %v3278
    %3788 = vmatpush.bf16.msra.mxu0 %v3274
    %3789 = vmatpush.bf16.msra.mxu0 %v3270
    %3790 = vmatpush.bf16.msra.mxu0 %v3266
    %3791 = vmatmul.bf16.gmra.mxu0 %v2636
    %v3792 = vpop.f32.mrf.mxu0
    %v3793 = vadd.f32 %v3769, %v3792
    %v3794 = vpop.f32.mrf.mxu0
    %v3795 = vadd.f32 %v3771, %v3794
    %3796 = vmatmul.bf16.gmra.mxu0 %v2640
    %v3797 = vpop.f32.mrf.mxu0
    %v3798 = vadd.f32 %v3774, %v3797
    %v3799 = vpop.f32.mrf.mxu0
    %v3800 = vadd.f32 %v3776, %v3799
    %3801 = vmatmul.bf16.gmra.mxu0 %v2644
    %v3802 = vpop.f32.mrf.mxu0
    %v3803 = vadd.f32 %v3779, %v3802
    %v3804 = vpop.f32.mrf.mxu0
    %v3805 = vadd.f32 %v3781, %v3804
    %3806 = vdwg.mxu0
    %3807 = vst [vmem:[#allocation13] sm:$0xff] %v3505
    %3808 = vst [vmem:[#allocation13 + $0x8] sm:$0xff] %v3601
    %3809 = vst [vmem:[#allocation13 + $0x10] sm:$0xff] %v3697
    %3810 = vst [vmem:[#allocation13 + $0x18] sm:$0xff] %v3793
    %3811 = vst [vmem:[#allocation13 + $0x20] sm:$0xff] %v3507
    %3812 = vst [vmem:[#allocation13 + $0x28] sm:$0xff] %v3603
    %3813 = vst [vmem:[#allocation13 + $0x30] sm:$0xff] %v3699
    %3814 = vst [vmem:[#allocation13 + $0x38] sm:$0xff] %v3795
    %3815 = vst [vmem:[#allocation13 + $0x40] sm:$0xff] %v3510
    %3816 = vst [vmem:[#allocation13 + $0x48] sm:$0xff] %v3606
    %3817 = vst [vmem:[#allocation13 + $0x50] sm:$0xff] %v3702
    %3818 = vst [vmem:[#allocation13 + $0x58] sm:$0xff] %v3798
    %3819 = vst [vmem:[#allocation13 + $0x60] sm:$0xff] %v3512
    %3820 = vst [vmem:[#allocation13 + $0x68] sm:$0xff] %v3608
    %3821 = vst [vmem:[#allocation13 + $0x70] sm:$0xff] %v3704
    %3822 = vst [vmem:[#allocation13 + $0x78] sm:$0xff] %v3800
    %3823 = vst [vmem:[#allocation13 + $0x80] sm:$0xff] %v3515
    %3824 = vst [vmem:[#allocation13 + $0x88] sm:$0xff] %v3611
    %3825 = vst [vmem:[#allocation13 + $0x90] sm:$0xff] %v3707
    %3826 = vst [vmem:[#allocation13 + $0x98] sm:$0xff] %v3803
    %3827 = vst [vmem:[#allocation13 + $0xa0] sm:$0xff] %v3517
    %3828 = vst [vmem:[#allocation13 + $0xa8] sm:$0xff] %v3613
    %3829 = vst [vmem:[#allocation13 + $0xb0] sm:$0xff] %v3709
    %3830 = vst [vmem:[#allocation13 + $0xb8] sm:$0xff] %v3805
    // Predicated region
    $region54: #{tpu_custom_call.1} parent=1 // pred_check
      _
    $region55: #{tpu_custom_call.1} parent=1 // pred_check_branch
      %3832 = sbr.rel (0) target = $region57
    $region56: #{tpu_custom_call.1} parent=1 // pred_region
      %3834 = vsyncadd [#allocation4], 0
      %s3835 = sshll.u32 [#allocation13], 4
      %s3836 = int_to_ptr.vmem [resolvable:$true] %s3835
      %s3837 = sshll.u32 %s7, 4
      %s3838 = int_to_ptr.hbm [resolvable:$true] %s3837
      %3843 = dma.vmem_to_hbm [thread:$0]  %s3836, 3072, %s3838, [#allocation4], 512, 512, 32
    $region57: #{tpu_custom_call.1} parent=1 // pred_fallthru
      _
    // Predicated region
    $region58: #{tpu_custom_call.1} parent=1 // pred_check
      _
    $region59: #{tpu_custom_call.1} parent=1 // pred_check_branch
      %3845 = sbr.rel (0) target = $region61
    $region60: #{tpu_custom_call.1} parent=1 // pred_region
      %3847 = dma.done [#allocation4], 3072
    $region61: #{tpu_custom_call.1} parent=1 // pred_fallthru
      _
    %3848 = vsyncpa [#allocation3], 1
    %3849 = vsyncpa [#allocation6], 1
    %3850 = vsyncpa [#allocation9], 1
    %3851 = vsyncpa [#allocation12], 1
    %3852 = vsyncpa [#allocation4], 1

</llo_original>
